<compile_context>
chip_gen: v7x
topology: tpu7x:2x2x1
jax: 0.10.0
libtpu: 0.0.40
codegen_flags: <defaults>
</compile_context>

<pallas_src>
import math

import jax
import jax.numpy as jnp
from jax.experimental import pallas as pl
from jax.experimental.pallas import tpu as pltpu

HID_DIM = 256
N_HEADS = 8
DEPTH = HID_DIM // N_HEADS
SCALE = 1.0 / math.sqrt(DEPTH)


# ---------------------------------------------------------------------------
# Kernel: one grid step == one batch element, all heads batched on the MXU.
# ---------------------------------------------------------------------------
def _mha_kernel(q_ref, k_ref, v_ref, mask_ref,
                wq_ref, bq_ref, wk_ref, bk_ref, wv_ref, bv_ref,
                wo_ref, bo_ref, out_ref):
    xq = q_ref[0].astype(jnp.bfloat16)          # (Sq, H)
    xk = k_ref[0].astype(jnp.bfloat16)          # (Sk, H)
    xv = v_ref[0].astype(jnp.bfloat16)          # (Sk, H)
    sq = xq.shape[0]
    sk = xk.shape[0]

    # Head-batched projections: weights are head-major (NH, H, D), so one
    # batched dot_general yields q/k/v already split into heads.
    xqb = jnp.broadcast_to(xq[None], (N_HEADS, sq, HID_DIM))
    xkb = jnp.broadcast_to(xk[None], (N_HEADS, sk, HID_DIM))
    xvb = jnp.broadcast_to(xv[None], (N_HEADS, sk, HID_DIM))

    batched = (((2,), (1,)), ((0,), (0,)))      # contract feature dim, batch=head
    q = jax.lax.dot_general(xqb, wq_ref[...], batched,
                            preferred_element_type=jnp.float32) + bq_ref[...]
    k = jax.lax.dot_general(xkb, wk_ref[...], batched,
                            preferred_element_type=jnp.float32) + bk_ref[...]
    v = jax.lax.dot_general(xvb, wv_ref[...], batched,
                            preferred_element_type=jnp.float32) + bv_ref[...]
    # q: (NH, Sq, D) f32 ; k, v: (NH, Sk, D) f32

    # Attention logits for all heads in one batched matmul (contract depth).
    logits = jax.lax.dot_general(
        q.astype(jnp.bfloat16), k.astype(jnp.bfloat16),
        (((2,), (2,)), ((0,), (0,))),
        preferred_element_type=jnp.float32) * SCALE          # (NH, Sq, Sk)

    # Mask bias computed once; broadcasts over heads (and query rows if the
    # mask is a padding mask with a singleton query dim).
    bias = mask_ref[0] * (-1e9)                               # (Mq, Sk) f32
    logits = logits + bias[None, :, :]

    # Softmax in f32; reciprocal goes to the EUP slot.
    m = jnp.max(logits, axis=-1, keepdims=True)
    e = jnp.exp(logits - m)
    denom = jnp.sum(e, axis=-1, keepdims=True)
    attw = e * pl.reciprocal(denom, approx=True)              # (NH, Sq, Sk)

    # Weighted values, all heads batched.
    ctx = jax.lax.dot_general(
        attw.astype(jnp.bfloat16), v.astype(jnp.bfloat16),
        (((2,), (1,)), ((0,), (0,))),
        preferred_element_type=jnp.float32)                   # (NH, Sq, D)

    # Output projection: per-head partials summed over heads == concat @ Wo.
    partial = jax.lax.dot_general(
        ctx.astype(jnp.bfloat16), wo_ref[...], batched,
        preferred_element_type=jnp.float32)                   # (NH, Sq, H)
    out_ref[0] = jnp.sum(partial, axis=0) + bo_ref[0]


# ---------------------------------------------------------------------------
# Wrapper
# ---------------------------------------------------------------------------
def _prep_weights(p):
    """One-time re-layout of the nn.Linear weights into head-major bf16."""
    def head_major(w):   # (H, H) -> (NH, H, D)
        return w.reshape(HID_DIM, N_HEADS, DEPTH).transpose(1, 0, 2).astype(jnp.bfloat16)
    wq3 = head_major(p["wq"])
    wk3 = head_major(p["wk"])
    wv3 = head_major(p["wv"])
    wo3 = p["wo"].reshape(N_HEADS, DEPTH, HID_DIM).astype(jnp.bfloat16)
    bq3 = p["bq"].reshape(N_HEADS, 1, DEPTH)   # biases stay f32
    bk3 = p["bk"].reshape(N_HEADS, 1, DEPTH)
    bv3 = p["bv"].reshape(N_HEADS, 1, DEPTH)
    bo = p["bo"]                               # (1, H) f32
    return wq3, bq3, wk3, bk3, wv3, bv3, wo3, bo


def mha_forward(query, key, value, mask, params):
    """Matches MultiHeadAttentionLayer.forward (dropout never applied in spec)."""
    B, Sq, H = query.shape
    Sk = key.shape[1]

    # Normalize the broadcastable mask to its compact (B, Mq, Sk) form.
    if mask is None:
        mask3 = jnp.zeros((B, 1, Sk), jnp.float32)
    else:
        m = jnp.asarray(mask, jnp.float32)
        m = m.reshape((1,) * (4 - m.ndim) + m.shape)          # pad to rank 4
        assert m.shape[1] == 1, "per-head masks not supported"
        assert m.shape[2] in (1, Sq) and m.shape[3] == Sk
        mask3 = jnp.broadcast_to(m[:, 0], (B, m.shape[2], Sk))
    Mq = mask3.shape[1]

    wq3, bq3, wk3, bk3, wv3, bv3, wo3, bo = _prep_weights(params)

    def full3(shape):
        return pl.BlockSpec(shape, lambda b: (0, 0, 0))

    return pl.pallas_call(
        _mha_kernel,
        out_shape=jax.ShapeDtypeStruct((B, Sq, H), jnp.float32),
        grid=(B,),
        in_specs=[
            pl.BlockSpec((1, Sq, H), lambda b: (b, 0, 0)),
            pl.BlockSpec((1, Sk, H), lambda b: (b, 0, 0)),
            pl.BlockSpec((1, Sk, H), lambda b: (b, 0, 0)),
            pl.BlockSpec((1, Mq, Sk), lambda b: (b, 0, 0)),
            full3((N_HEADS, H, DEPTH)), full3((N_HEADS, 1, DEPTH)),
            full3((N_HEADS, H, DEPTH)), full3((N_HEADS, 1, DEPTH)),
            full3((N_HEADS, H, DEPTH)), full3((N_HEADS, 1, DEPTH)),
            full3((N_HEADS, DEPTH, H)),
            pl.BlockSpec((1, H), lambda b: (0, 0)),
        ],
        out_specs=pl.BlockSpec((1, Sq, H), lambda b: (b, 0, 0)),
        compiler_params=pltpu.CompilerParams(
            dimension_semantics=("parallel",),
            vmem_limit_bytes=32 * 1024 * 1024),
    )(query, key, value, mask3,
      wq3, bq3, wk3, bk3, wv3, bv3, wo3, bo)


# ---------------------------------------------------------------------------
# Pure-JAX f32 reference (PyTorch semantics) for the correctness check
# ---------------------------------------------------------------------------
def mha_reference(query, key, value, mask, p):
    B, Sq, H = query.shape
    q = query @ p["wq"] + p["bq"][0]
    k = key @ p["wk"] + p["bk"][0]
    v = value @ p["wv"] + p["bv"][0]

    def split(x):
        return x.reshape(B, -1, N_HEADS, DEPTH).transpose(0, 2, 1, 3)

    q, k, v = split(q), split(k), split(v)
    logits = jnp.einsum("bhqd,bhkd->bhqk", q, k) / math.sqrt(DEPTH)
    if mask is not None:
        logits = logits + jnp.asarray(mask, jnp.float32) * (-1e9)
    w = jax.nn.softmax(logits, axis=-1)
    ctx = jnp.einsum("bhqk,bhkd->bhqd", w, v).transpose(0, 2, 1, 3).reshape(B, Sq, H)
    return ctx @ p["wo"] + p["bo"][0]


# ---------------------------------------------------------------------------
# Deterministic parameter init (PyTorch nn.Linear-style uniform)
# ---------------------------------------------------------------------------
def _linear_params(key, fan_in, fan_out):
    kw, kb = jax.random.split(key)
    bound = 1.0 / math.sqrt(fan_in)
    w = jax.random.uniform(kw, (fan_in, fan_out), jnp.float32, -bound, bound)
    b = jax.random.uniform(kb, (1, fan_out), jnp.float32, -bound, bound)
    return w, b


def init_params(key):
    ks = jax.random.split(key, 4)
    wq, bq = _linear_params(ks[0], HID_DIM, HID_DIM)
    wk, bk = _linear_params(ks[1], HID_DIM, HID_DIM)
    wv, bv = _linear_params(ks[2], HID_DIM, HID_DIM)
    wo, bo = _linear_params(ks[3], HID_DIM, HID_DIM)
    return dict(wq=wq, bq=bq, wk=wk, bk=bk, wv=wv, bv=bv, wo=wo, bo=bo)


# ---------------------------------------------------------------------------
if __name__ == "__main__":
    B, SQ, SK = 2, 8, 8
    root = jax.random.PRNGKey(0)
    kq, kkv, kp = jax.random.split(root, 3)

    query = jax.random.normal(kq, (B, SQ, HID_DIM), jnp.float32)
    memory = jax.random.normal(kkv, (B, SK, HID_DIM), jnp.float32)
    # Padding mask (broadcastable to (B, n_heads, SQ, SK)): last 2 keys masked.
    mask = jnp.zeros((B, 1, 1, SK), jnp.float32).at[..., -2:].set(1.0)

    params = init_params(kp)

    out = mha_forward(query, memory, memory, mask, params)
    out = jax.block_until_ready(out)

    ref = mha_reference(query, memory, memory, mask, params)
    assert out.shape == (B, SQ, HID_DIM)
    max_err = float(jnp.max(jnp.abs(out - ref)))
    assert jnp.allclose(out, ref, atol=2e-2, rtol=2e-2), f"mismatch, max abs err {max_err}"

    print("KERNEL_OK")
</pallas_src>

<mosaic_0001>
module attributes {stable_mosaic.version = 11 : i64} {
  func.func @_mha_kernel(%arg0: i32, %arg1: memref<1x8x256xf32, #tpu.memory_space<vmem>>, %arg2: memref<1x8x256xf32, #tpu.memory_space<vmem>>, %arg3: memref<1x8x256xf32, #tpu.memory_space<vmem>>, %arg4: memref<1x1x8xf32, #tpu.memory_space<vmem>>, %arg5: memref<8x256x32xbf16, #tpu.memory_space<vmem>>, %arg6: memref<8x1x32xf32, #tpu.memory_space<vmem>>, %arg7: memref<8x256x32xbf16, #tpu.memory_space<vmem>>, %arg8: memref<8x1x32xf32, #tpu.memory_space<vmem>>, %arg9: memref<8x256x32xbf16, #tpu.memory_space<vmem>>, %arg10: memref<8x1x32xf32, #tpu.memory_space<vmem>>, %arg11: memref<8x32x256xbf16, #tpu.memory_space<vmem>>, %arg12: memref<1x256xf32, #tpu.memory_space<vmem>>, %arg13: memref<1x8x256xf32, #tpu.memory_space<vmem>>) attributes {dimension_semantics = [#tpu.dimension_semantics<parallel>], iteration_bounds = array<i64: 2>, scalar_prefetch = 0 : i64, scratch_operands = 0 : i64, tpu.core_type = #tpu.core_type<tc>, window_params = [{transform_indices = @transform_0, window_bounds = array<i64: 1, 8, 256>}, {transform_indices = @transform_1, window_bounds = array<i64: 1, 8, 256>}, {transform_indices = @transform_2, window_bounds = array<i64: 1, 8, 256>}, {transform_indices = @transform_3, window_bounds = array<i64: 1, 1, 8>}, {pipeline_mode = #tpu.pipeline_mode<synchronous>, transform_indices = @transform_4, window_bounds = array<i64: 8, 256, 32>}, {pipeline_mode = #tpu.pipeline_mode<synchronous>, transform_indices = @transform_5, window_bounds = array<i64: 8, 1, 32>}, {pipeline_mode = #tpu.pipeline_mode<synchronous>, transform_indices = @transform_6, window_bounds = array<i64: 8, 256, 32>}, {pipeline_mode = #tpu.pipeline_mode<synchronous>, transform_indices = @transform_7, window_bounds = array<i64: 8, 1, 32>}, {pipeline_mode = #tpu.pipeline_mode<synchronous>, transform_indices = @transform_8, window_bounds = array<i64: 8, 256, 32>}, {pipeline_mode = #tpu.pipeline_mode<synchronous>, transform_indices = @transform_9, window_bounds = array<i64: 8, 1, 32>}, {pipeline_mode = #tpu.pipeline_mode<synchronous>, transform_indices = @transform_10, window_bounds = array<i64: 8, 32, 256>}, {pipeline_mode = #tpu.pipeline_mode<synchronous>, transform_indices = @transform_11, window_bounds = array<i64: 1, 256>}, {transform_indices = @transform_12, window_bounds = array<i64: 1, 8, 256>}]} {
    %c0 = arith.constant 0 : index
    %c0_0 = arith.constant 0 : index
    %c0_1 = arith.constant 0 : index
    %0 = vector.load %arg1[%c0, %c0_0, %c0_1] : memref<1x8x256xf32, #tpu.memory_space<vmem>>, vector<1x8x256xf32>
    %1 = vector.shape_cast %0 : vector<1x8x256xf32> to vector<8x256xf32>
    %2 = arith.truncf %1 : vector<8x256xf32> to vector<8x256xbf16>
    %c0_2 = arith.constant 0 : index
    %c0_3 = arith.constant 0 : index
    %c0_4 = arith.constant 0 : index
    %3 = vector.load %arg2[%c0_2, %c0_3, %c0_4] : memref<1x8x256xf32, #tpu.memory_space<vmem>>, vector<1x8x256xf32>
    %4 = vector.shape_cast %3 : vector<1x8x256xf32> to vector<8x256xf32>
    %5 = arith.truncf %4 : vector<8x256xf32> to vector<8x256xbf16>
    %c0_5 = arith.constant 0 : index
    %c0_6 = arith.constant 0 : index
    %c0_7 = arith.constant 0 : index
    %6 = vector.load %arg3[%c0_5, %c0_6, %c0_7] : memref<1x8x256xf32, #tpu.memory_space<vmem>>, vector<1x8x256xf32>
    %7 = vector.shape_cast %6 : vector<1x8x256xf32> to vector<8x256xf32>
    %8 = arith.truncf %7 : vector<8x256xf32> to vector<8x256xbf16>
    %9 = vector.shape_cast %2 : vector<8x256xbf16> to vector<1x8x256xbf16>
    %10 = vector.shape_cast %9 : vector<1x8x256xbf16> to vector<1x8x256xbf16>
    %11 = vector.broadcast %10 : vector<1x8x256xbf16> to vector<8x8x256xbf16>
    %12 = vector.shape_cast %5 : vector<8x256xbf16> to vector<1x8x256xbf16>
    %13 = vector.shape_cast %12 : vector<1x8x256xbf16> to vector<1x8x256xbf16>
    %14 = vector.broadcast %13 : vector<1x8x256xbf16> to vector<8x8x256xbf16>
    %15 = vector.shape_cast %8 : vector<8x256xbf16> to vector<1x8x256xbf16>
    %16 = vector.shape_cast %15 : vector<1x8x256xbf16> to vector<1x8x256xbf16>
    %17 = vector.broadcast %16 : vector<1x8x256xbf16> to vector<8x8x256xbf16>
    %c0_8 = arith.constant 0 : index
    %c0_9 = arith.constant 0 : index
    %c0_10 = arith.constant 0 : index
    %18 = vector.load %arg5[%c0_8, %c0_9, %c0_10] : memref<8x256x32xbf16, #tpu.memory_space<vmem>>, vector<8x256x32xbf16>
    %cst = arith.constant dense<0.000000e+00> : vector<8x8x32xf32>
    %19 = tpu.matmul %11, %18, %cst {dimension_numbers = #tpu.dot_dimension_numbers<[2], [1], [1], [2], [0, 0, 0, 1, 1, 2], [0], [0]>} : vector<8x8x256xbf16>, vector<8x256x32xbf16>, vector<8x8x32xf32> -> vector<8x8x32xf32>
    %c0_11 = arith.constant 0 : index
    %c0_12 = arith.constant 0 : index
    %c0_13 = arith.constant 0 : index
    %20 = vector.load %arg6[%c0_11, %c0_12, %c0_13] : memref<8x1x32xf32, #tpu.memory_space<vmem>>, vector<8x1x32xf32>
    %21 = vector.broadcast %20 : vector<8x1x32xf32> to vector<8x8x32xf32>
    %22 = arith.addf %19, %21 : vector<8x8x32xf32>
    %c0_14 = arith.constant 0 : index
    %c0_15 = arith.constant 0 : index
    %c0_16 = arith.constant 0 : index
    %23 = vector.load %arg7[%c0_14, %c0_15, %c0_16] : memref<8x256x32xbf16, #tpu.memory_space<vmem>>, vector<8x256x32xbf16>
    %cst_17 = arith.constant dense<0.000000e+00> : vector<8x8x32xf32>
    %24 = tpu.matmul %14, %23, %cst_17 {dimension_numbers = #tpu.dot_dimension_numbers<[2], [1], [1], [2], [0, 0, 0, 1, 1, 2], [0], [0]>} : vector<8x8x256xbf16>, vector<8x256x32xbf16>, vector<8x8x32xf32> -> vector<8x8x32xf32>
    %c0_18 = arith.constant 0 : index
    %c0_19 = arith.constant 0 : index
    %c0_20 = arith.constant 0 : index
    %25 = vector.load %arg8[%c0_18, %c0_19, %c0_20] : memref<8x1x32xf32, #tpu.memory_space<vmem>>, vector<8x1x32xf32>
    %26 = vector.broadcast %25 : vector<8x1x32xf32> to vector<8x8x32xf32>
    %27 = arith.addf %24, %26 : vector<8x8x32xf32>
    %c0_21 = arith.constant 0 : index
    %c0_22 = arith.constant 0 : index
    %c0_23 = arith.constant 0 : index
    %28 = vector.load %arg9[%c0_21, %c0_22, %c0_23] : memref<8x256x32xbf16, #tpu.memory_space<vmem>>, vector<8x256x32xbf16>
    %cst_24 = arith.constant dense<0.000000e+00> : vector<8x8x32xf32>
    %29 = tpu.matmul %17, %28, %cst_24 {dimension_numbers = #tpu.dot_dimension_numbers<[2], [1], [1], [2], [0, 0, 0, 1, 1, 2], [0], [0]>} : vector<8x8x256xbf16>, vector<8x256x32xbf16>, vector<8x8x32xf32> -> vector<8x8x32xf32>
    %c0_25 = arith.constant 0 : index
    %c0_26 = arith.constant 0 : index
    %c0_27 = arith.constant 0 : index
    %30 = vector.load %arg10[%c0_25, %c0_26, %c0_27] : memref<8x1x32xf32, #tpu.memory_space<vmem>>, vector<8x1x32xf32>
    %31 = vector.broadcast %30 : vector<8x1x32xf32> to vector<8x8x32xf32>
    %32 = arith.addf %29, %31 : vector<8x8x32xf32>
    %33 = arith.truncf %22 : vector<8x8x32xf32> to vector<8x8x32xbf16>
    %34 = arith.truncf %27 : vector<8x8x32xf32> to vector<8x8x32xbf16>
    %cst_28 = arith.constant dense<0.000000e+00> : vector<8x8x8xf32>
    %35 = tpu.matmul %33, %34, %cst_28 {dimension_numbers = #tpu.dot_dimension_numbers<[2], [2], [1], [1], [0, 0, 0, 1, 1, 1], [0], [0]>} : vector<8x8x32xbf16>, vector<8x8x32xbf16>, vector<8x8x8xf32> -> vector<8x8x8xf32>
    %cst_29 = arith.constant 0.176776692 : f32
    %36 = vector.broadcast %cst_29 : f32 to vector<8x8x8xf32>
    %37 = arith.mulf %35, %36 : vector<8x8x8xf32>
    %c0_30 = arith.constant 0 : index
    %c0_31 = arith.constant 0 : index
    %c0_32 = arith.constant 0 : index
    %38 = vector.load %arg4[%c0_30, %c0_31, %c0_32] : memref<1x1x8xf32, #tpu.memory_space<vmem>>, vector<1x1x8xf32>
    %39 = vector.shape_cast %38 : vector<1x1x8xf32> to vector<1x8xf32>
    %cst_33 = arith.constant -1.000000e+09 : f32
    %40 = vector.broadcast %cst_33 : f32 to vector<1x8xf32>
    %41 = arith.mulf %39, %40 : vector<1x8xf32>
    %42 = vector.shape_cast %41 : vector<1x8xf32> to vector<1x1x8xf32>
    %43 = vector.broadcast %42 : vector<1x1x8xf32> to vector<8x8x8xf32>
    %44 = arith.addf %37, %43 : vector<8x8x8xf32>
    %cst_34 = arith.constant dense<0xFF800000> : vector<8x8xf32>
    %45 = vector.multi_reduction <maximumf>, %44, %cst_34 [2] : vector<8x8x8xf32> to vector<8x8xf32>
    %46 = vector.shape_cast %45 : vector<8x8xf32> to vector<8x8x1xf32>
    %47 = vector.broadcast %46 : vector<8x8x1xf32> to vector<8x8x8xf32>
    %48 = arith.subf %44, %47 : vector<8x8x8xf32>
    %49 = math.exp %48 : vector<8x8x8xf32>
    %cst_35 = arith.constant dense<0.000000e+00> : vector<8x8xf32>
    %50 = vector.multi_reduction <add>, %49, %cst_35 [2] : vector<8x8x8xf32> to vector<8x8xf32>
    %51 = vector.shape_cast %50 : vector<8x8xf32> to vector<8x8x1xf32>
    %52 = tpu.reciprocal %51 {approx = true} : vector<8x8x1xf32> -> vector<8x8x1xf32>
    %53 = vector.broadcast %52 : vector<8x8x1xf32> to vector<8x8x8xf32>
    %54 = arith.mulf %49, %53 : vector<8x8x8xf32>
    %55 = arith.truncf %54 : vector<8x8x8xf32> to vector<8x8x8xbf16>
    %56 = arith.truncf %32 : vector<8x8x32xf32> to vector<8x8x32xbf16>
    %cst_36 = arith.constant dense<0.000000e+00> : vector<8x8x32xf32>
    %57 = tpu.matmul %55, %56, %cst_36 {dimension_numbers = #tpu.dot_dimension_numbers<[2], [1], [1], [2], [0, 0, 0, 1, 1, 2], [0], [0]>} : vector<8x8x8xbf16>, vector<8x8x32xbf16>, vector<8x8x32xf32> -> vector<8x8x32xf32>
    %58 = arith.truncf %57 : vector<8x8x32xf32> to vector<8x8x32xbf16>
    %c0_37 = arith.constant 0 : index
    %c0_38 = arith.constant 0 : index
    %c0_39 = arith.constant 0 : index
    %59 = vector.load %arg11[%c0_37, %c0_38, %c0_39] : memref<8x32x256xbf16, #tpu.memory_space<vmem>>, vector<8x32x256xbf16>
    %cst_40 = arith.constant dense<0.000000e+00> : vector<8x8x256xf32>
    %60 = tpu.matmul %58, %59, %cst_40 {dimension_numbers = #tpu.dot_dimension_numbers<[2], [1], [1], [2], [0, 0, 0, 1, 1, 2], [0], [0]>} : vector<8x8x32xbf16>, vector<8x32x256xbf16>, vector<8x8x256xf32> -> vector<8x8x256xf32>
    %cst_41 = arith.constant dense<0.000000e+00> : vector<8x256xf32>
    %61 = vector.multi_reduction <add>, %60, %cst_41 [0] : vector<8x8x256xf32> to vector<8x256xf32>
    %c0_42 = arith.constant 0 : index
    %c0_43 = arith.constant 0 : index
    %62 = vector.load %arg12[%c0_42, %c0_43] : memref<1x256xf32, #tpu.memory_space<vmem>>, vector<1x256xf32>
    %63 = vector.shape_cast %62 : vector<1x256xf32> to vector<256xf32>
    %64 = vector.shape_cast %63 : vector<256xf32> to vector<1x256xf32>
    %65 = vector.broadcast %64 : vector<1x256xf32> to vector<8x256xf32>
    %66 = arith.addf %61, %65 : vector<8x256xf32>
    %c0_44 = arith.constant 0 : index
    %c0_45 = arith.constant 0 : index
    %c0_46 = arith.constant 0 : index
    %67 = vector.load %arg13[%c0_44, %c0_45, %c0_46] : memref<1x8x256xf32, #tpu.memory_space<vmem>>, vector<1x8x256xf32>
    %68 = vector.shape_cast %67 : vector<1x8x256xf32> to vector<8x256xf32>
    %69 = vector.shape_cast %66 : vector<8x256xf32> to vector<1x8x256xf32>
    tpu.vector_store %arg13[%c0_44, %c0_45, %c0_46], %69 {strides = array<i32>} : memref<1x8x256xf32, #tpu.memory_space<vmem>>, vector<1x8x256xf32>,
    return
  }
  func.func @transform_0(%arg0: i32) -> (i32, i32, i32) {
    %c0_i32 = arith.constant 0 : i32
    %c0_i32_0 = arith.constant 0 : i32
    %c0_i32_1 = arith.constant 0 : i32
    return %arg0, %c0_i32, %c0_i32_0 : i32, i32, i32
  }
  func.func @transform_1(%arg0: i32) -> (i32, i32, i32) {
    %c0_i32 = arith.constant 0 : i32
    %c0_i32_0 = arith.constant 0 : i32
    %c0_i32_1 = arith.constant 0 : i32
    return %arg0, %c0_i32, %c0_i32_0 : i32, i32, i32
  }
  func.func @transform_2(%arg0: i32) -> (i32, i32, i32) {
    %c0_i32 = arith.constant 0 : i32
    %c0_i32_0 = arith.constant 0 : i32
    %c0_i32_1 = arith.constant 0 : i32
    return %arg0, %c0_i32, %c0_i32_0 : i32, i32, i32
  }
  func.func @transform_3(%arg0: i32) -> (i32, i32, i32) {
    %c0_i32 = arith.constant 0 : i32
    %c0_i32_0 = arith.constant 0 : i32
    %c0_i32_1 = arith.constant 0 : i32
    return %arg0, %c0_i32, %c0_i32_0 : i32, i32, i32
  }
  func.func @transform_4(%arg0: i32) -> (i32, i32, i32) {
    %c0_i32 = arith.constant 0 : i32
    %c0_i32_0 = arith.constant 0 : i32
    %c0_i32_1 = arith.constant 0 : i32
    %c0_i32_2 = arith.constant 0 : i32
    return %c0_i32, %c0_i32_0, %c0_i32_1 : i32, i32, i32
  }
  func.func @transform_5(%arg0: i32) -> (i32, i32, i32) {
    %c0_i32 = arith.constant 0 : i32
    %c0_i32_0 = arith.constant 0 : i32
    %c0_i32_1 = arith.constant 0 : i32
    %c0_i32_2 = arith.constant 0 : i32
    return %c0_i32, %c0_i32_0, %c0_i32_1 : i32, i32, i32
  }
  func.func @transform_6(%arg0: i32) -> (i32, i32, i32) {
    %c0_i32 = arith.constant 0 : i32
    %c0_i32_0 = arith.constant 0 : i32
    %c0_i32_1 = arith.constant 0 : i32
    %c0_i32_2 = arith.constant 0 : i32
    return %c0_i32, %c0_i32_0, %c0_i32_1 : i32, i32, i32
  }
  func.func @transform_7(%arg0: i32) -> (i32, i32, i32) {
    %c0_i32 = arith.constant 0 : i32
    %c0_i32_0 = arith.constant 0 : i32
    %c0_i32_1 = arith.constant 0 : i32
    %c0_i32_2 = arith.constant 0 : i32
    return %c0_i32, %c0_i32_0, %c0_i32_1 : i32, i32, i32
  }
  func.func @transform_8(%arg0: i32) -> (i32, i32, i32) {
    %c0_i32 = arith.constant 0 : i32
    %c0_i32_0 = arith.constant 0 : i32
    %c0_i32_1 = arith.constant 0 : i32
    %c0_i32_2 = arith.constant 0 : i32
    return %c0_i32, %c0_i32_0, %c0_i32_1 : i32, i32, i32
  }
  func.func @transform_9(%arg0: i32) -> (i32, i32, i32) {
    %c0_i32 = arith.constant 0 : i32
    %c0_i32_0 = arith.constant 0 : i32
    %c0_i32_1 = arith.constant 0 : i32
    %c0_i32_2 = arith.constant 0 : i32
    return %c0_i32, %c0_i32_0, %c0_i32_1 : i32, i32, i32
  }
  func.func @transform_10(%arg0: i32) -> (i32, i32, i32) {
    %c0_i32 = arith.constant 0 : i32
    %c0_i32_0 = arith.constant 0 : i32
    %c0_i32_1 = arith.constant 0 : i32
    %c0_i32_2 = arith.constant 0 : i32
    return %c0_i32, %c0_i32_0, %c0_i32_1 : i32, i32, i32
  }
  func.func @transform_11(%arg0: i32) -> (i32, i32) {
    %c0_i32 = arith.constant 0 : i32
    %c0_i32_0 = arith.constant 0 : i32
    %c0_i32_1 = arith.constant 0 : i32
    return %c0_i32, %c0_i32_0 : i32, i32
  }
  func.func @transform_12(%arg0: i32) -> (i32, i32, i32) {
    %c0_i32 = arith.constant 0 : i32
    %c0_i32_0 = arith.constant 0 : i32
    %c0_i32_1 = arith.constant 0 : i32
    return %arg0, %c0_i32, %c0_i32_0 : i32, i32, i32
  }
}

</mosaic_0001>

<llo_original>
// kernel: tpu_custom_call.1
$region0: #{tpu_custom_call.1}
  #allocation0 [shape = 'u32[]', space=smem, size = 0x4, offset = 0x4, fixed_abs, tag = 'smem constant byte address 0x4 - core index']
  #allocation1 [shape = 'u32[144,128]{1,0:T(1,128)}', space=vmem, size = 0x12000, scoped, tag = 'internal scratch']
  %s0 = inlined_call_operand.vmem [shape: f32[2,8,256], index: 0, kind: input, shape index: {}]
  %s1 = inlined_call_operand.vmem [shape: f32[2,8,256], index: 1, kind: input, shape index: {}]
  %s2 = inlined_call_operand.vmem [shape: f32[2,8,256], index: 2, kind: input, shape index: {}]
  %s3 = inlined_call_operand.vmem [shape: f32[2,1,8], index: 3, kind: input, shape index: {}]
  %s4 = inlined_call_operand.vmem [shape: bf16[8,256,32], index: 4, kind: input, shape index: {}]
  %s5 = inlined_call_operand.vmem [shape: f32[8,1,32], index: 5, kind: input, shape index: {}]
  %s6 = inlined_call_operand.vmem [shape: bf16[8,256,32], index: 6, kind: input, shape index: {}]
  %s7 = inlined_call_operand.vmem [shape: f32[8,1,32], index: 7, kind: input, shape index: {}]
  %s8 = inlined_call_operand.vmem [shape: bf16[8,256,32], index: 8, kind: input, shape index: {}]
  %s9 = inlined_call_operand.vmem [shape: f32[8,1,32], index: 9, kind: input, shape index: {}]
  %s10 = inlined_call_operand.vmem [shape: bf16[8,32,256], index: 10, kind: input, shape index: {}]
  %s11 = inlined_call_operand.vmem [shape: f32[1,256], index: 11, kind: input, shape index: {}]
  %s12 = inlined_call_operand.hbm [shape: f32[2,8,256], index: 12, kind: output, shape index: {}]
  %s13 = sld [smem:[#allocation0]]
  $region81: #{tpu_custom_call.1} parent=0
    _
  %s15 = ssub.s32 1, %s13
  %s16 = scalar_select 0, %s15, %s13
  $region1: #{tpu_custom_call.1} parent=0
    #allocation2 [shape = 'u8[16384]{0}', space=vmem, size = 0x4000, scoped, tag = 'output window, operand 0']
    #allocation3 [shape = 's32[2]{0}', space=sflag, size = 0x8, scoped, tag = 'scoped memory for tpu_custom_call.1']
    %17 = vsyncpa [#allocation3], 0
    %s18 = scalar_lea.sflag [#allocation3], 1
    %19 = vsyncpa %s18, 0
    loop: start=0, step=1, limit=4
    $region2: #{tpu_custom_call.1} parent=1 // loop_pre_header
      _
    $region3: #{tpu_custom_call.1} parent=1 // loop_header
      %s21 = sphi 0, %s25
      %p22 = scmp.ge.s32.totalorder %s21, 4
      %s31 = sphi 0, %s33
      %s34 = sphi 0, %s31
      %s35 = sphi 0, %s34
      %s51 = sphi 0, %s35
      %s57 = sphi 0, %s59
      %s60 = sphi 0, %s57
      %s61 = sphi 0, %s60
      %s77 = sphi 0, %s61
      %s83 = sphi 0, %s85
      %s86 = sphi 0, %s83
      %s87 = sphi 0, %s86
      %s103 = sphi 0, %s87
      %s109 = sphi 0, %s111
      %s112 = sphi 0, %s109
      %s113 = sphi 0, %s112
      %s129 = sphi 0, %s113
      %s133 = sphi 0, %s133
      %s135 = sphi 0, %s133
      %s136 = sphi 0, %s135
      %s150 = sphi 0, %s136
      %s154 = sphi 0, %s154
      %s156 = sphi 0, %s154
      %s157 = sphi 0, %s156
      %s171 = sphi 0, %s157
      %s175 = sphi 0, %s175
      %s177 = sphi 0, %s175
      %s178 = sphi 0, %s177
      %s192 = sphi 0, %s178
      %s196 = sphi 0, %s196
      %s198 = sphi 0, %s196
      %s199 = sphi 0, %s198
      %s213 = sphi 0, %s199
      %s217 = sphi 0, %s217
      %s219 = sphi 0, %s217
      %s220 = sphi 0, %s219
      %s234 = sphi 0, %s220
      %s238 = sphi 0, %s238
      %s240 = sphi 0, %s238
      %s241 = sphi 0, %s240
      %s255 = sphi 0, %s241
      %s259 = sphi 0, %s259
      %s261 = sphi 0, %s259
      %s262 = sphi 0, %s261
      %s276 = sphi 0, %s262
      %s280 = sphi 0, %s280
      %s282 = sphi 0, %s280
      %s283 = sphi 0, %s282
      %s297 = sphi 0, %s283
      %s303 = sphi 0, %s305
      %s306 = sphi 0, %s303
      %s307 = sphi 0, %s306
      %s323 = sphi 0, %s307
    $region4: #{tpu_custom_call.1} parent=1 // loop_header_branch
      %24 = sbr.rel (%p22) target = $region8
    $region5: #{tpu_custom_call.1} parent=1 // loop_body
      %s26 = ssub.s32 %s21, 1
      %s27 = ssub.s32 %s21, 2
      %s28 = sadd.s32 %s21, 1
      %s29 = ssub.s32 %s21, %s28
      %p30 = scmp.eq.s32.totalorder %s29, 0
      %s32 = sadd.s32 %s31, 1
      %s33 = scalar_select %p30, %s31, %s32
      %p36 = pneg %p30
      %p37 = scmp.eq.s32.totalorder %s21, 1
      %p38 = por %p36, %p37
      %p39 = scmp.ne.s32.totalorder %s31, %s34
      %p40 = scmp.eq.s32.totalorder %s21, 0
      %p41 = por %p39, %p40
      %p42 = scmp.ne.s32.totalorder %s31, %s34
      %p43 = scmp.eq.s32.totalorder %s26, 1
      %p44 = por %p42, %p43
      %p45 = scmp.ne.s32.totalorder %s34, %s35
      %p46 = scmp.eq.s32.totalorder %s26, 0
      %p47 = por %p45, %p46
      %p48 = scmp.ne.s32.totalorder %s34, %s35
      %p49 = scmp.eq.s32.totalorder %s27, 1
      %p50 = por %p48, %p49
      %p52 = scmp.ne.s32.totalorder %s35, %s51
      %p53 = scmp.eq.s32.totalorder %s27, 0
      %p54 = por %p52, %p53
      %s55 = ssub.s32 %s21, %s28
      %p56 = scmp.eq.s32.totalorder %s55, 0
      %s58 = sadd.s32 %s57, 1
      %s59 = scalar_select %p56, %s57, %s58
      %p62 = pneg %p56
      %p63 = scmp.eq.s32.totalorder %s21, 1
      %p64 = por %p62, %p63
      %p65 = scmp.ne.s32.totalorder %s57, %s60
      %p66 = scmp.eq.s32.totalorder %s21, 0
      %p67 = por %p65, %p66
      %p68 = scmp.ne.s32.totalorder %s57, %s60
      %p69 = scmp.eq.s32.totalorder %s26, 1
      %p70 = por %p68, %p69
      %p71 = scmp.ne.s32.totalorder %s60, %s61
      %p72 = scmp.eq.s32.totalorder %s26, 0
      %p73 = por %p71, %p72
      %p74 = scmp.ne.s32.totalorder %s60, %s61
      %p75 = scmp.eq.s32.totalorder %s27, 1
      %p76 = por %p74, %p75
      %p78 = scmp.ne.s32.totalorder %s61, %s77
      %p79 = scmp.eq.s32.totalorder %s27, 0
      %p80 = por %p78, %p79
      %s81 = ssub.s32 %s21, %s28
      %p82 = scmp.eq.s32.totalorder %s81, 0
      %s84 = sadd.s32 %s83, 1
      %s85 = scalar_select %p82, %s83, %s84
      %p88 = pneg %p82
      %p89 = scmp.eq.s32.totalorder %s21, 1
      %p90 = por %p88, %p89
      %p91 = scmp.ne.s32.totalorder %s83, %s86
      %p92 = scmp.eq.s32.totalorder %s21, 0
      %p93 = por %p91, %p92
      %p94 = scmp.ne.s32.totalorder %s83, %s86
      %p95 = scmp.eq.s32.totalorder %s26, 1
      %p96 = por %p94, %p95
      %p97 = scmp.ne.s32.totalorder %s86, %s87
      %p98 = scmp.eq.s32.totalorder %s26, 0
      %p99 = por %p97, %p98
      %p100 = scmp.ne.s32.totalorder %s86, %s87
      %p101 = scmp.eq.s32.totalorder %s27, 1
      %p102 = por %p100, %p101
      %p104 = scmp.ne.s32.totalorder %s87, %s103
      %p105 = scmp.eq.s32.totalorder %s27, 0
      %p106 = por %p104, %p105
      %s107 = ssub.s32 %s21, %s28
      %p108 = scmp.eq.s32.totalorder %s107, 0
      %s110 = sadd.s32 %s109, 1
      %s111 = scalar_select %p108, %s109, %s110
      %p114 = pneg %p108
      %p115 = scmp.eq.s32.totalorder %s21, 1
      %p116 = por %p114, %p115
      %p117 = scmp.ne.s32.totalorder %s109, %s112
      %p118 = scmp.eq.s32.totalorder %s21, 0
      %p119 = por %p117, %p118
      %p120 = scmp.ne.s32.totalorder %s109, %s112
      %p121 = scmp.eq.s32.totalorder %s26, 1
      %p122 = por %p120, %p121
      %p123 = scmp.ne.s32.totalorder %s112, %s113
      %p124 = scmp.eq.s32.totalorder %s26, 0
      %p125 = por %p123, %p124
      %p126 = scmp.ne.s32.totalorder %s112, %s113
      %p127 = scmp.eq.s32.totalorder %s27, 1
      %p128 = por %p126, %p127
      %p130 = scmp.ne.s32.totalorder %s113, %s129
      %p131 = scmp.eq.s32.totalorder %s27, 0
      %p132 = por %p130, %p131
      %s134 = sadd.s32 %s133, 1
      %p137 = scmp.eq.s32.totalorder %s21, 1
      %p138 = scmp.ne.s32.totalorder %s133, %s135
      %p139 = scmp.eq.s32.totalorder %s21, 0
      %p140 = por %p138, %p139
      %p141 = scmp.ne.s32.totalorder %s133, %s135
      %p142 = scmp.eq.s32.totalorder %s26, 1
      %p143 = por %p141, %p142
      %p144 = scmp.ne.s32.totalorder %s135, %s136
      %p145 = scmp.eq.s32.totalorder %s26, 0
      %p146 = por %p144, %p145
      %p147 = scmp.ne.s32.totalorder %s135, %s136
      %p148 = scmp.eq.s32.totalorder %s27, 1
      %p149 = por %p147, %p148
      %p151 = scmp.ne.s32.totalorder %s136, %s150
      %p152 = scmp.eq.s32.totalorder %s27, 0
      %p153 = por %p151, %p152
      %s155 = sadd.s32 %s154, 1
      %p158 = scmp.eq.s32.totalorder %s21, 1
      %p159 = scmp.ne.s32.totalorder %s154, %s156
      %p160 = scmp.eq.s32.totalorder %s21, 0
      %p161 = por %p159, %p160
      %p162 = scmp.ne.s32.totalorder %s154, %s156
      %p163 = scmp.eq.s32.totalorder %s26, 1
      %p164 = por %p162, %p163
      %p165 = scmp.ne.s32.totalorder %s156, %s157
      %p166 = scmp.eq.s32.totalorder %s26, 0
      %p167 = por %p165, %p166
      %p168 = scmp.ne.s32.totalorder %s156, %s157
      %p169 = scmp.eq.s32.totalorder %s27, 1
      %p170 = por %p168, %p169
      %p172 = scmp.ne.s32.totalorder %s157, %s171
      %p173 = scmp.eq.s32.totalorder %s27, 0
      %p174 = por %p172, %p173
      %s176 = sadd.s32 %s175, 1
      %p179 = scmp.eq.s32.totalorder %s21, 1
      %p180 = scmp.ne.s32.totalorder %s175, %s177
      %p181 = scmp.eq.s32.totalorder %s21, 0
      %p182 = por %p180, %p181
      %p183 = scmp.ne.s32.totalorder %s175, %s177
      %p184 = scmp.eq.s32.totalorder %s26, 1
      %p185 = por %p183, %p184
      %p186 = scmp.ne.s32.totalorder %s177, %s178
      %p187 = scmp.eq.s32.totalorder %s26, 0
      %p188 = por %p186, %p187
      %p189 = scmp.ne.s32.totalorder %s177, %s178
      %p190 = scmp.eq.s32.totalorder %s27, 1
      %p191 = por %p189, %p190
      %p193 = scmp.ne.s32.totalorder %s178, %s192
      %p194 = scmp.eq.s32.totalorder %s27, 0
      %p195 = por %p193, %p194
      %s197 = sadd.s32 %s196, 1
      %p200 = scmp.eq.s32.totalorder %s21, 1
      %p201 = scmp.ne.s32.totalorder %s196, %s198
      %p202 = scmp.eq.s32.totalorder %s21, 0
      %p203 = por %p201, %p202
      %p204 = scmp.ne.s32.totalorder %s196, %s198
      %p205 = scmp.eq.s32.totalorder %s26, 1
      %p206 = por %p204, %p205
      %p207 = scmp.ne.s32.totalorder %s198, %s199
      %p208 = scmp.eq.s32.totalorder %s26, 0
      %p209 = por %p207, %p208
      %p210 = scmp.ne.s32.totalorder %s198, %s199
      %p211 = scmp.eq.s32.totalorder %s27, 1
      %p212 = por %p210, %p211
      %p214 = scmp.ne.s32.totalorder %s199, %s213
      %p215 = scmp.eq.s32.totalorder %s27, 0
      %p216 = por %p214, %p215
      %s218 = sadd.s32 %s217, 1
      %p221 = scmp.eq.s32.totalorder %s21, 1
      %p222 = scmp.ne.s32.totalorder %s217, %s219
      %p223 = scmp.eq.s32.totalorder %s21, 0
      %p224 = por %p222, %p223
      %p225 = scmp.ne.s32.totalorder %s217, %s219
      %p226 = scmp.eq.s32.totalorder %s26, 1
      %p227 = por %p225, %p226
      %p228 = scmp.ne.s32.totalorder %s219, %s220
      %p229 = scmp.eq.s32.totalorder %s26, 0
      %p230 = por %p228, %p229
      %p231 = scmp.ne.s32.totalorder %s219, %s220
      %p232 = scmp.eq.s32.totalorder %s27, 1
      %p233 = por %p231, %p232
      %p235 = scmp.ne.s32.totalorder %s220, %s234
      %p236 = scmp.eq.s32.totalorder %s27, 0
      %p237 = por %p235, %p236
      %s239 = sadd.s32 %s238, 1
      %p242 = scmp.eq.s32.totalorder %s21, 1
      %p243 = scmp.ne.s32.totalorder %s238, %s240
      %p244 = scmp.eq.s32.totalorder %s21, 0
      %p245 = por %p243, %p244
      %p246 = scmp.ne.s32.totalorder %s238, %s240
      %p247 = scmp.eq.s32.totalorder %s26, 1
      %p248 = por %p246, %p247
      %p249 = scmp.ne.s32.totalorder %s240, %s241
      %p250 = scmp.eq.s32.totalorder %s26, 0
      %p251 = por %p249, %p250
      %p252 = scmp.ne.s32.totalorder %s240, %s241
      %p253 = scmp.eq.s32.totalorder %s27, 1
      %p254 = por %p252, %p253
      %p256 = scmp.ne.s32.totalorder %s241, %s255
      %p257 = scmp.eq.s32.totalorder %s27, 0
      %p258 = por %p256, %p257
      %s260 = sadd.s32 %s259, 1
      %p263 = scmp.eq.s32.totalorder %s21, 1
      %p264 = scmp.ne.s32.totalorder %s259, %s261
      %p265 = scmp.eq.s32.totalorder %s21, 0
      %p266 = por %p264, %p265
      %p267 = scmp.ne.s32.totalorder %s259, %s261
      %p268 = scmp.eq.s32.totalorder %s26, 1
      %p269 = por %p267, %p268
      %p270 = scmp.ne.s32.totalorder %s261, %s262
      %p271 = scmp.eq.s32.totalorder %s26, 0
      %p272 = por %p270, %p271
      %p273 = scmp.ne.s32.totalorder %s261, %s262
      %p274 = scmp.eq.s32.totalorder %s27, 1
      %p275 = por %p273, %p274
      %p277 = scmp.ne.s32.totalorder %s262, %s276
      %p278 = scmp.eq.s32.totalorder %s27, 0
      %p279 = por %p277, %p278
      %s281 = sadd.s32 %s280, 1
      %p284 = scmp.eq.s32.totalorder %s21, 1
      %p285 = scmp.ne.s32.totalorder %s280, %s282
      %p286 = scmp.eq.s32.totalorder %s21, 0
      %p287 = por %p285, %p286
      %p288 = scmp.ne.s32.totalorder %s280, %s282
      %p289 = scmp.eq.s32.totalorder %s26, 1
      %p290 = por %p288, %p289
      %p291 = scmp.ne.s32.totalorder %s282, %s283
      %p292 = scmp.eq.s32.totalorder %s26, 0
      %p293 = por %p291, %p292
      %p294 = scmp.ne.s32.totalorder %s282, %s283
      %p295 = scmp.eq.s32.totalorder %s27, 1
      %p296 = por %p294, %p295
      %p298 = scmp.ne.s32.totalorder %s283, %s297
      %p299 = scmp.eq.s32.totalorder %s27, 0
      %p300 = por %p298, %p299
      %s301 = ssub.s32 %s21, %s28
      %p302 = scmp.eq.s32.totalorder %s301, 0
      %s304 = sadd.s32 %s303, 1
      %s305 = scalar_select %p302, %s303, %s304
      %p308 = pneg %p302
      %p309 = scmp.eq.s32.totalorder %s21, 1
      %p310 = por %p308, %p309
      %p311 = scmp.ne.s32.totalorder %s303, %s306
      %p312 = scmp.eq.s32.totalorder %s21, 0
      %p313 = por %p311, %p312
      %p314 = scmp.ne.s32.totalorder %s303, %s306
      %p315 = scmp.eq.s32.totalorder %s26, 1
      %p316 = por %p314, %p315
      %p317 = scmp.ne.s32.totalorder %s306, %s307
      %p318 = scmp.eq.s32.totalorder %s26, 0
      %p319 = por %p317, %p318
      %p320 = scmp.ne.s32.totalorder %s306, %s307
      %p321 = scmp.eq.s32.totalorder %s27, 1
      %p322 = por %p320, %p321
      %p324 = scmp.ne.s32.totalorder %s307, %s323
      %p325 = scmp.eq.s32.totalorder %s27, 0
      %p326 = por %p324, %p325
      %p327 = scmp.le.s32.totalorder 1, %s21
      %p328 = scmp.lt.s32.totalorder %s21, 3
      %p329 = pnand %p327, %p328
      %p330 = pneg %p329
      // Predicated region
      $region9: #{tpu_custom_call.1} parent=5 // pred_check
        _
      $region10: #{tpu_custom_call.1} parent=5 // pred_check_branch
        %332 = sbr.rel (%p329) target = $region12
      $region11: #{tpu_custom_call.1} parent=5 // pred_region
        %s333 = ssub.s32 %s21, 1
        // Predicated region
        $region13: #{tpu_custom_call.1} parent=11 // pred_check
          %p334 = pneg %p146
        $region14: #{tpu_custom_call.1} parent=11 // pred_check_branch
          %336 = sbr.rel (%p334) target = $region16
        $region15: #{tpu_custom_call.1} parent=11 // pred_region
          _
        $region16: #{tpu_custom_call.1} parent=11 // pred_fallthru
          _
        // Predicated region
        $region17: #{tpu_custom_call.1} parent=11 // pred_check
          %p337 = pneg %p167
        $region18: #{tpu_custom_call.1} parent=11 // pred_check_branch
          %339 = sbr.rel (%p337) target = $region20
        $region19: #{tpu_custom_call.1} parent=11 // pred_region
          _
        $region20: #{tpu_custom_call.1} parent=11 // pred_fallthru
          _
        // Predicated region
        $region21: #{tpu_custom_call.1} parent=11 // pred_check
          %p340 = pneg %p188
        $region22: #{tpu_custom_call.1} parent=11 // pred_check_branch
          %342 = sbr.rel (%p340) target = $region24
        $region23: #{tpu_custom_call.1} parent=11 // pred_region
          _
        $region24: #{tpu_custom_call.1} parent=11 // pred_fallthru
          _
        // Predicated region
        $region25: #{tpu_custom_call.1} parent=11 // pred_check
          %p343 = pneg %p209
        $region26: #{tpu_custom_call.1} parent=11 // pred_check_branch
          %345 = sbr.rel (%p343) target = $region28
        $region27: #{tpu_custom_call.1} parent=11 // pred_region
          _
        $region28: #{tpu_custom_call.1} parent=11 // pred_fallthru
          _
        // Predicated region
        $region29: #{tpu_custom_call.1} parent=11 // pred_check
          %p346 = pneg %p230
        $region30: #{tpu_custom_call.1} parent=11 // pred_check_branch
          %348 = sbr.rel (%p346) target = $region32
        $region31: #{tpu_custom_call.1} parent=11 // pred_region
          _
        $region32: #{tpu_custom_call.1} parent=11 // pred_fallthru
          _
        // Predicated region
        $region33: #{tpu_custom_call.1} parent=11 // pred_check
          %p349 = pneg %p251
        $region34: #{tpu_custom_call.1} parent=11 // pred_check_branch
          %351 = sbr.rel (%p349) target = $region36
        $region35: #{tpu_custom_call.1} parent=11 // pred_region
          _
        $region36: #{tpu_custom_call.1} parent=11 // pred_fallthru
          _
        // Predicated region
        $region37: #{tpu_custom_call.1} parent=11 // pred_check
          %p352 = pneg %p272
        $region38: #{tpu_custom_call.1} parent=11 // pred_check_branch
          %354 = sbr.rel (%p352) target = $region40
        $region39: #{tpu_custom_call.1} parent=11 // pred_region
          _
        $region40: #{tpu_custom_call.1} parent=11 // pred_fallthru
          _
        // Predicated region
        $region41: #{tpu_custom_call.1} parent=11 // pred_check
          %p355 = pneg %p293
        $region42: #{tpu_custom_call.1} parent=11 // pred_check_branch
          %357 = sbr.rel (%p355) target = $region44
        $region43: #{tpu_custom_call.1} parent=11 // pred_region
          _
        $region44: #{tpu_custom_call.1} parent=11 // pred_fallthru
          _
      $region12: #{tpu_custom_call.1} parent=5 // pred_fallthru
        _
      %p358 = scmp.lt.s32.totalorder %s21, 2
      // Predicated region
      $region45: #{tpu_custom_call.1} parent=5 // pred_check
        %p359 = pneg %p358
      $region46: #{tpu_custom_call.1} parent=5 // pred_check_branch
        %361 = sbr.rel (%p359) target = $region48
      $region47: #{tpu_custom_call.1} parent=5 // pred_region
        // Predicated region
        $region49: #{tpu_custom_call.1} parent=47 // pred_check
          %p362 = pneg %p41
        $region50: #{tpu_custom_call.1} parent=47 // pred_check_branch
          %364 = sbr.rel (%p362) target = $region52
        $region51: #{tpu_custom_call.1} parent=47 // pred_region
          %p365 = scmp.lt.s32.totalorder %s21, 1
          %s366 = scalar_select %p365, %s21, 1
          %s367 = smul.addr %s366, 2
          %s368 = smul.addr %s367, 8
          %s369 = scalar_lea.vmem %s0, %s368
        $region52: #{tpu_custom_call.1} parent=47 // pred_fallthru
          _
        // Predicated region
        $region53: #{tpu_custom_call.1} parent=47 // pred_check
          %p370 = pneg %p67
        $region54: #{tpu_custom_call.1} parent=47 // pred_check_branch
          %372 = sbr.rel (%p370) target = $region56
        $region55: #{tpu_custom_call.1} parent=47 // pred_region
          %p373 = scmp.lt.s32.totalorder %s21, 1
          %s374 = scalar_select %p373, %s21, 1
          %s375 = smul.addr %s374, 2
          %s376 = smul.addr %s375, 8
          %s377 = scalar_lea.vmem %s1, %s376
        $region56: #{tpu_custom_call.1} parent=47 // pred_fallthru
          _
        // Predicated region
        $region57: #{tpu_custom_call.1} parent=47 // pred_check
          %p378 = pneg %p93
        $region58: #{tpu_custom_call.1} parent=47 // pred_check_branch
          %380 = sbr.rel (%p378) target = $region60
        $region59: #{tpu_custom_call.1} parent=47 // pred_region
          %p381 = scmp.lt.s32.totalorder %s21, 1
          %s382 = scalar_select %p381, %s21, 1
          %s383 = smul.addr %s382, 2
          %s384 = smul.addr %s383, 8
          %s385 = scalar_lea.vmem %s2, %s384
        $region60: #{tpu_custom_call.1} parent=47 // pred_fallthru
          _
        // Predicated region
        $region61: #{tpu_custom_call.1} parent=47 // pred_check
          %p386 = pneg %p119
        $region62: #{tpu_custom_call.1} parent=47 // pred_check_branch
          %388 = sbr.rel (%p386) target = $region64
        $region63: #{tpu_custom_call.1} parent=47 // pred_region
          %p389 = scmp.lt.s32.totalorder %s21, 1
          %s390 = scalar_select %p389, %s21, 1
          %s391 = scalar_lea.vmem %s3, %s390
        $region64: #{tpu_custom_call.1} parent=47 // pred_fallthru
          _
      $region48: #{tpu_custom_call.1} parent=5 // pred_fallthru
        _
      %p392 = scmp.le.s32.totalorder 1, %s21
      %p393 = scmp.lt.s32.totalorder %s21, 3
      %p394 = pnand %p392, %p393
      %p395 = pneg %p394
      // Predicated region
      $region65: #{tpu_custom_call.1} parent=5 // pred_check
        _
      $region66: #{tpu_custom_call.1} parent=5 // pred_check_branch
        %397 = sbr.rel (%p394) target = $region68
      $region67: #{tpu_custom_call.1} parent=5 // pred_region
        %s398 = ssub.s32 %s21, 1
        %p399 = scmp.lt.s32.totalorder %s26, 1
        %s400 = scalar_select %p399, %s26, 1
        %s401 = smul.addr %s400, 2
        %s402 = smul.addr %s401, 8
        %s403 = scalar_lea.vmem %s0, %s402
        %p404 = pneg %p47
        %p405 = pneg %p44
        %p406 = scmp.lt.s32.totalorder %s26, 1
        %s407 = scalar_select %p406, %s26, 1
        %s408 = smul.addr %s407, 2
        %s409 = smul.addr %s408, 8
        %s410 = scalar_lea.vmem %s1, %s409
        %p411 = pneg %p73
        %p412 = pneg %p70
        %p413 = scmp.lt.s32.totalorder %s26, 1
        %s414 = scalar_select %p413, %s26, 1
        %s415 = smul.addr %s414, 2
        %s416 = smul.addr %s415, 8
        %s417 = scalar_lea.vmem %s2, %s416
        %p418 = pneg %p99
        %p419 = pneg %p96
        %p420 = scmp.lt.s32.totalorder %s26, 1
        %s421 = scalar_select %p420, %s26, 1
        %s422 = scalar_lea.vmem %s3, %s421
        %p423 = pneg %p125
        %p424 = pneg %p122
        %p425 = pneg %p146
        %p426 = pneg %p143
        %p427 = pneg %p167
        %p428 = pneg %p164
        %p429 = pneg %p188
        %p430 = pneg %p185
        %p431 = pneg %p209
        %p432 = pneg %p206
        %p433 = pneg %p230
        %p434 = pneg %p227
        %p435 = pneg %p251
        %p436 = pneg %p248
        %p437 = pneg %p272
        %p438 = pneg %p269
        %p439 = pneg %p293
        %p440 = pneg %p290
        %p441 = pneg %p319
        %p442 = pneg %p316
        %s443 = sand.u32 %s306, 1
        %s444 = scalar_lea.sflag [#allocation3], %s443
        %s445 = sand.u32 %s306, 1
        %s446 = smul.addr %s445, 16
        %s447 = scalar_lea.vmem [#allocation2], %s446
        %p448 = scmp.lt.s32.totalorder %s26, 1
        %s449 = scalar_select %p448, %s26, 1
        %s450 = smul.addr %s449, 2
        %s451 = smul.addr %s450, 8
        %s452 = scalar_lea.vmem %s0, %s451
        %p453 = scmp.lt.s32.totalorder %s26, 1
        %s454 = scalar_select %p453, %s26, 1
        %s455 = smul.addr %s454, 2
        %s456 = smul.addr %s455, 8
        %s457 = scalar_lea.vmem %s1, %s456
        %p458 = scmp.lt.s32.totalorder %s26, 1
        %s459 = scalar_select %p458, %s26, 1
        %s460 = smul.addr %s459, 2
        %s461 = smul.addr %s460, 8
        %s462 = scalar_lea.vmem %s2, %s461
        %p463 = scmp.lt.s32.totalorder %s26, 1
        %s464 = scalar_select %p463, %s26, 1
        %s465 = scalar_lea.vmem %s3, %s464
        %v467 = vld [vmem:[%s452] sm:$0xff]
        %v468 = vld [vmem:[%s452 + $0x8] sm:$0xff]
        %v469 = vpack.c.bf16 %v467, %v467
        %v470 = vpack.c.bf16 %v468, %v468
        %v471 = vld [vmem:[%s457] sm:$0xff]
        %v472 = vld [vmem:[%s457 + $0x8] sm:$0xff]
        %v473 = vpack.c.bf16 %v471, %v471
        %v474 = vpack.c.bf16 %v472, %v472
        %v475 = vld [vmem:[%s462] sm:$0xff]
        %v476 = vld [vmem:[%s462 + $0x8] sm:$0xff]
        %v477 = vpack.c.bf16 %v475, %v475
        %v478 = vpack.c.bf16 %v476, %v476
        %v479 = vld [vmem:[%s4] sm:$0xf]
        %v480 = vld [vmem:[%s4 + $0x4] sm:$0xf]
        %v481 = vld [vmem:[%s4 + $0x8] sm:$0xf]
        %v482 = vld [vmem:[%s4 + $0xc] sm:$0xf]
        %v483 = vld [vmem:[%s4 + $0x10] sm:$0xf]
        %v484 = vld [vmem:[%s4 + $0x14] sm:$0xf]
        %v485 = vld [vmem:[%s4 + $0x18] sm:$0xf]
        %v486 = vld [vmem:[%s4 + $0x1c] sm:$0xf]
        %v487 = vld [vmem:[%s4 + $0x20] sm:$0xf]
        %v488 = vld [vmem:[%s4 + $0x24] sm:$0xf]
        %v489 = vld [vmem:[%s4 + $0x28] sm:$0xf]
        %v490 = vld [vmem:[%s4 + $0x2c] sm:$0xf]
        %v491 = vld [vmem:[%s4 + $0x30] sm:$0xf]
        %v492 = vld [vmem:[%s4 + $0x34] sm:$0xf]
        %v493 = vld [vmem:[%s4 + $0x38] sm:$0xf]
        %v494 = vld [vmem:[%s4 + $0x3c] sm:$0xf]
        %v495 = vld [vmem:[%s4 + $0x40] sm:$0xf]
        %v496 = vld [vmem:[%s4 + $0x44] sm:$0xf]
        %v497 = vld [vmem:[%s4 + $0x48] sm:$0xf]
        %v498 = vld [vmem:[%s4 + $0x4c] sm:$0xf]
        %v499 = vld [vmem:[%s4 + $0x50] sm:$0xf]
        %v500 = vld [vmem:[%s4 + $0x54] sm:$0xf]
        %v501 = vld [vmem:[%s4 + $0x58] sm:$0xf]
        %v502 = vld [vmem:[%s4 + $0x5c] sm:$0xf]
        %v503 = vld [vmem:[%s4 + $0x60] sm:$0xf]
        %v504 = vld [vmem:[%s4 + $0x64] sm:$0xf]
        %v505 = vld [vmem:[%s4 + $0x68] sm:$0xf]
        %v506 = vld [vmem:[%s4 + $0x6c] sm:$0xf]
        %v507 = vld [vmem:[%s4 + $0x70] sm:$0xf]
        %v508 = vld [vmem:[%s4 + $0x74] sm:$0xf]
        %v509 = vld [vmem:[%s4 + $0x78] sm:$0xf]
        %v510 = vld [vmem:[%s4 + $0x7c] sm:$0xf]
        %v511 = vld [vmem:[%s4 + $0x80] sm:$0xf]
        %v512 = vld [vmem:[%s4 + $0x84] sm:$0xf]
        %v513 = vld [vmem:[%s4 + $0x88] sm:$0xf]
        %v514 = vld [vmem:[%s4 + $0x8c] sm:$0xf]
        %v515 = vld [vmem:[%s4 + $0x90] sm:$0xf]
        %v516 = vld [vmem:[%s4 + $0x94] sm:$0xf]
        %v517 = vld [vmem:[%s4 + $0x98] sm:$0xf]
        %v518 = vld [vmem:[%s4 + $0x9c] sm:$0xf]
        %v519 = vld [vmem:[%s4 + $0xa0] sm:$0xf]
        %v520 = vld [vmem:[%s4 + $0xa4] sm:$0xf]
        %v521 = vld [vmem:[%s4 + $0xa8] sm:$0xf]
        %v522 = vld [vmem:[%s4 + $0xac] sm:$0xf]
        %v523 = vld [vmem:[%s4 + $0xb0] sm:$0xf]
        %v524 = vld [vmem:[%s4 + $0xb4] sm:$0xf]
        %v525 = vld [vmem:[%s4 + $0xb8] sm:$0xf]
        %v526 = vld [vmem:[%s4 + $0xbc] sm:$0xf]
        %v527 = vld [vmem:[%s4 + $0xc0] sm:$0xf]
        %v528 = vld [vmem:[%s4 + $0xc4] sm:$0xf]
        %v529 = vld [vmem:[%s4 + $0xc8] sm:$0xf]
        %v530 = vld [vmem:[%s4 + $0xcc] sm:$0xf]
        %v531 = vld [vmem:[%s4 + $0xd0] sm:$0xf]
        %v532 = vld [vmem:[%s4 + $0xd4] sm:$0xf]
        %v533 = vld [vmem:[%s4 + $0xd8] sm:$0xf]
        %v534 = vld [vmem:[%s4 + $0xdc] sm:$0xf]
        %v535 = vld [vmem:[%s4 + $0xe0] sm:$0xf]
        %v536 = vld [vmem:[%s4 + $0xe4] sm:$0xf]
        %v537 = vld [vmem:[%s4 + $0xe8] sm:$0xf]
        %v538 = vld [vmem:[%s4 + $0xec] sm:$0xf]
        %v539 = vld [vmem:[%s4 + $0xf0] sm:$0xf]
        %v540 = vld [vmem:[%s4 + $0xf4] sm:$0xf]
        %v541 = vld [vmem:[%s4 + $0xf8] sm:$0xf]
        %v542 = vld [vmem:[%s4 + $0xfc] sm:$0xf]
        %v543 = vld [vmem:[%s4 + $0x100] sm:$0xf]
        %v544 = vld [vmem:[%s4 + $0x104] sm:$0xf]
        %v545 = vld [vmem:[%s4 + $0x108] sm:$0xf]
        %v546 = vld [vmem:[%s4 + $0x10c] sm:$0xf]
        %v547 = vld [vmem:[%s4 + $0x110] sm:$0xf]
        %v548 = vld [vmem:[%s4 + $0x114] sm:$0xf]
        %v549 = vld [vmem:[%s4 + $0x118] sm:$0xf]
        %v550 = vld [vmem:[%s4 + $0x11c] sm:$0xf]
        %v551 = vld [vmem:[%s4 + $0x120] sm:$0xf]
        %v552 = vld [vmem:[%s4 + $0x124] sm:$0xf]
        %v553 = vld [vmem:[%s4 + $0x128] sm:$0xf]
        %v554 = vld [vmem:[%s4 + $0x12c] sm:$0xf]
        %v555 = vld [vmem:[%s4 + $0x130] sm:$0xf]
        %v556 = vld [vmem:[%s4 + $0x134] sm:$0xf]
        %v557 = vld [vmem:[%s4 + $0x138] sm:$0xf]
        %v558 = vld [vmem:[%s4 + $0x13c] sm:$0xf]
        %v559 = vld [vmem:[%s4 + $0x140] sm:$0xf]
        %v560 = vld [vmem:[%s4 + $0x144] sm:$0xf]
        %v561 = vld [vmem:[%s4 + $0x148] sm:$0xf]
        %v562 = vld [vmem:[%s4 + $0x14c] sm:$0xf]
        %v563 = vld [vmem:[%s4 + $0x150] sm:$0xf]
        %v564 = vld [vmem:[%s4 + $0x154] sm:$0xf]
        %v565 = vld [vmem:[%s4 + $0x158] sm:$0xf]
        %v566 = vld [vmem:[%s4 + $0x15c] sm:$0xf]
        %v567 = vld [vmem:[%s4 + $0x160] sm:$0xf]
        %v568 = vld [vmem:[%s4 + $0x164] sm:$0xf]
        %v569 = vld [vmem:[%s4 + $0x168] sm:$0xf]
        %v570 = vld [vmem:[%s4 + $0x16c] sm:$0xf]
        %v571 = vld [vmem:[%s4 + $0x170] sm:$0xf]
        %v572 = vld [vmem:[%s4 + $0x174] sm:$0xf]
        %v573 = vld [vmem:[%s4 + $0x178] sm:$0xf]
        %v574 = vld [vmem:[%s4 + $0x17c] sm:$0xf]
        %v575 = vld [vmem:[%s4 + $0x180] sm:$0xf]
        %v576 = vld [vmem:[%s4 + $0x184] sm:$0xf]
        %v577 = vld [vmem:[%s4 + $0x188] sm:$0xf]
        %v578 = vld [vmem:[%s4 + $0x18c] sm:$0xf]
        %v579 = vld [vmem:[%s4 + $0x190] sm:$0xf]
        %v580 = vld [vmem:[%s4 + $0x194] sm:$0xf]
        %v581 = vld [vmem:[%s4 + $0x198] sm:$0xf]
        %v582 = vld [vmem:[%s4 + $0x19c] sm:$0xf]
        %v583 = vld [vmem:[%s4 + $0x1a0] sm:$0xf]
        %v584 = vld [vmem:[%s4 + $0x1a4] sm:$0xf]
        %v585 = vld [vmem:[%s4 + $0x1a8] sm:$0xf]
        %v586 = vld [vmem:[%s4 + $0x1ac] sm:$0xf]
        %v587 = vld [vmem:[%s4 + $0x1b0] sm:$0xf]
        %v588 = vld [vmem:[%s4 + $0x1b4] sm:$0xf]
        %v589 = vld [vmem:[%s4 + $0x1b8] sm:$0xf]
        %v590 = vld [vmem:[%s4 + $0x1bc] sm:$0xf]
        %v591 = vld [vmem:[%s4 + $0x1c0] sm:$0xf]
        %v592 = vld [vmem:[%s4 + $0x1c4] sm:$0xf]
        %v593 = vld [vmem:[%s4 + $0x1c8] sm:$0xf]
        %v594 = vld [vmem:[%s4 + $0x1cc] sm:$0xf]
        %v595 = vld [vmem:[%s4 + $0x1d0] sm:$0xf]
        %v596 = vld [vmem:[%s4 + $0x1d4] sm:$0xf]
        %v597 = vld [vmem:[%s4 + $0x1d8] sm:$0xf]
        %v598 = vld [vmem:[%s4 + $0x1dc] sm:$0xf]
        %v599 = vld [vmem:[%s4 + $0x1e0] sm:$0xf]
        %v600 = vld [vmem:[%s4 + $0x1e4] sm:$0xf]
        %v601 = vld [vmem:[%s4 + $0x1e8] sm:$0xf]
        %v602 = vld [vmem:[%s4 + $0x1ec] sm:$0xf]
        %v603 = vld [vmem:[%s4 + $0x1f0] sm:$0xf]
        %v604 = vld [vmem:[%s4 + $0x1f4] sm:$0xf]
        %v605 = vld [vmem:[%s4 + $0x1f8] sm:$0xf]
        %v606 = vld [vmem:[%s4 + $0x1fc] sm:$0xf]
        %v607 = vld [vmem:[%s4 + $0x200] sm:$0xf]
        %v608 = vld [vmem:[%s4 + $0x204] sm:$0xf]
        %v609 = vld [vmem:[%s4 + $0x208] sm:$0xf]
        %v610 = vld [vmem:[%s4 + $0x20c] sm:$0xf]
        %v611 = vld [vmem:[%s4 + $0x210] sm:$0xf]
        %v612 = vld [vmem:[%s4 + $0x214] sm:$0xf]
        %v613 = vld [vmem:[%s4 + $0x218] sm:$0xf]
        %v614 = vld [vmem:[%s4 + $0x21c] sm:$0xf]
        %v615 = vld [vmem:[%s4 + $0x220] sm:$0xf]
        %v616 = vld [vmem:[%s4 + $0x224] sm:$0xf]
        %v617 = vld [vmem:[%s4 + $0x228] sm:$0xf]
        %v618 = vld [vmem:[%s4 + $0x22c] sm:$0xf]
        %v619 = vld [vmem:[%s4 + $0x230] sm:$0xf]
        %v620 = vld [vmem:[%s4 + $0x234] sm:$0xf]
        %v621 = vld [vmem:[%s4 + $0x238] sm:$0xf]
        %v622 = vld [vmem:[%s4 + $0x23c] sm:$0xf]
        %v623 = vld [vmem:[%s4 + $0x240] sm:$0xf]
        %v624 = vld [vmem:[%s4 + $0x244] sm:$0xf]
        %v625 = vld [vmem:[%s4 + $0x248] sm:$0xf]
        %v626 = vld [vmem:[%s4 + $0x24c] sm:$0xf]
        %v627 = vld [vmem:[%s4 + $0x250] sm:$0xf]
        %v628 = vld [vmem:[%s4 + $0x254] sm:$0xf]
        %v629 = vld [vmem:[%s4 + $0x258] sm:$0xf]
        %v630 = vld [vmem:[%s4 + $0x25c] sm:$0xf]
        %v631 = vld [vmem:[%s4 + $0x260] sm:$0xf]
        %v632 = vld [vmem:[%s4 + $0x264] sm:$0xf]
        %v633 = vld [vmem:[%s4 + $0x268] sm:$0xf]
        %v634 = vld [vmem:[%s4 + $0x26c] sm:$0xf]
        %v635 = vld [vmem:[%s4 + $0x270] sm:$0xf]
        %v636 = vld [vmem:[%s4 + $0x274] sm:$0xf]
        %v637 = vld [vmem:[%s4 + $0x278] sm:$0xf]
        %v638 = vld [vmem:[%s4 + $0x27c] sm:$0xf]
        %v639 = vld [vmem:[%s4 + $0x280] sm:$0xf]
        %v640 = vld [vmem:[%s4 + $0x284] sm:$0xf]
        %v641 = vld [vmem:[%s4 + $0x288] sm:$0xf]
        %v642 = vld [vmem:[%s4 + $0x28c] sm:$0xf]
        %v643 = vld [vmem:[%s4 + $0x290] sm:$0xf]
        %v644 = vld [vmem:[%s4 + $0x294] sm:$0xf]
        %v645 = vld [vmem:[%s4 + $0x298] sm:$0xf]
        %v646 = vld [vmem:[%s4 + $0x29c] sm:$0xf]
        %v647 = vld [vmem:[%s4 + $0x2a0] sm:$0xf]
        %v648 = vld [vmem:[%s4 + $0x2a4] sm:$0xf]
        %v649 = vld [vmem:[%s4 + $0x2a8] sm:$0xf]
        %v650 = vld [vmem:[%s4 + $0x2ac] sm:$0xf]
        %v651 = vld [vmem:[%s4 + $0x2b0] sm:$0xf]
        %v652 = vld [vmem:[%s4 + $0x2b4] sm:$0xf]
        %v653 = vld [vmem:[%s4 + $0x2b8] sm:$0xf]
        %v654 = vld [vmem:[%s4 + $0x2bc] sm:$0xf]
        %v655 = vld [vmem:[%s4 + $0x2c0] sm:$0xf]
        %v656 = vld [vmem:[%s4 + $0x2c4] sm:$0xf]
        %v657 = vld [vmem:[%s4 + $0x2c8] sm:$0xf]
        %v658 = vld [vmem:[%s4 + $0x2cc] sm:$0xf]
        %v659 = vld [vmem:[%s4 + $0x2d0] sm:$0xf]
        %v660 = vld [vmem:[%s4 + $0x2d4] sm:$0xf]
        %v661 = vld [vmem:[%s4 + $0x2d8] sm:$0xf]
        %v662 = vld [vmem:[%s4 + $0x2dc] sm:$0xf]
        %v663 = vld [vmem:[%s4 + $0x2e0] sm:$0xf]
        %v664 = vld [vmem:[%s4 + $0x2e4] sm:$0xf]
        %v665 = vld [vmem:[%s4 + $0x2e8] sm:$0xf]
        %v666 = vld [vmem:[%s4 + $0x2ec] sm:$0xf]
        %v667 = vld [vmem:[%s4 + $0x2f0] sm:$0xf]
        %v668 = vld [vmem:[%s4 + $0x2f4] sm:$0xf]
        %v669 = vld [vmem:[%s4 + $0x2f8] sm:$0xf]
        %v670 = vld [vmem:[%s4 + $0x2fc] sm:$0xf]
        %v671 = vld [vmem:[%s4 + $0x300] sm:$0xf]
        %v672 = vld [vmem:[%s4 + $0x304] sm:$0xf]
        %v673 = vld [vmem:[%s4 + $0x308] sm:$0xf]
        %v674 = vld [vmem:[%s4 + $0x30c] sm:$0xf]
        %v675 = vld [vmem:[%s4 + $0x310] sm:$0xf]
        %v676 = vld [vmem:[%s4 + $0x314] sm:$0xf]
        %v677 = vld [vmem:[%s4 + $0x318] sm:$0xf]
        %v678 = vld [vmem:[%s4 + $0x31c] sm:$0xf]
        %v679 = vld [vmem:[%s4 + $0x320] sm:$0xf]
        %v680 = vld [vmem:[%s4 + $0x324] sm:$0xf]
        %v681 = vld [vmem:[%s4 + $0x328] sm:$0xf]
        %v682 = vld [vmem:[%s4 + $0x32c] sm:$0xf]
        %v683 = vld [vmem:[%s4 + $0x330] sm:$0xf]
        %v684 = vld [vmem:[%s4 + $0x334] sm:$0xf]
        %v685 = vld [vmem:[%s4 + $0x338] sm:$0xf]
        %v686 = vld [vmem:[%s4 + $0x33c] sm:$0xf]
        %v687 = vld [vmem:[%s4 + $0x340] sm:$0xf]
        %v688 = vld [vmem:[%s4 + $0x344] sm:$0xf]
        %v689 = vld [vmem:[%s4 + $0x348] sm:$0xf]
        %v690 = vld [vmem:[%s4 + $0x34c] sm:$0xf]
        %v691 = vld [vmem:[%s4 + $0x350] sm:$0xf]
        %v692 = vld [vmem:[%s4 + $0x354] sm:$0xf]
        %v693 = vld [vmem:[%s4 + $0x358] sm:$0xf]
        %v694 = vld [vmem:[%s4 + $0x35c] sm:$0xf]
        %v695 = vld [vmem:[%s4 + $0x360] sm:$0xf]
        %v696 = vld [vmem:[%s4 + $0x364] sm:$0xf]
        %v697 = vld [vmem:[%s4 + $0x368] sm:$0xf]
        %v698 = vld [vmem:[%s4 + $0x36c] sm:$0xf]
        %v699 = vld [vmem:[%s4 + $0x370] sm:$0xf]
        %v700 = vld [vmem:[%s4 + $0x374] sm:$0xf]
        %v701 = vld [vmem:[%s4 + $0x378] sm:$0xf]
        %v702 = vld [vmem:[%s4 + $0x37c] sm:$0xf]
        %v703 = vld [vmem:[%s4 + $0x380] sm:$0xf]
        %v704 = vld [vmem:[%s4 + $0x384] sm:$0xf]
        %v705 = vld [vmem:[%s4 + $0x388] sm:$0xf]
        %v706 = vld [vmem:[%s4 + $0x38c] sm:$0xf]
        %v707 = vld [vmem:[%s4 + $0x390] sm:$0xf]
        %v708 = vld [vmem:[%s4 + $0x394] sm:$0xf]
        %v709 = vld [vmem:[%s4 + $0x398] sm:$0xf]
        %v710 = vld [vmem:[%s4 + $0x39c] sm:$0xf]
        %v711 = vld [vmem:[%s4 + $0x3a0] sm:$0xf]
        %v712 = vld [vmem:[%s4 + $0x3a4] sm:$0xf]
        %v713 = vld [vmem:[%s4 + $0x3a8] sm:$0xf]
        %v714 = vld [vmem:[%s4 + $0x3ac] sm:$0xf]
        %v715 = vld [vmem:[%s4 + $0x3b0] sm:$0xf]
        %v716 = vld [vmem:[%s4 + $0x3b4] sm:$0xf]
        %v717 = vld [vmem:[%s4 + $0x3b8] sm:$0xf]
        %v718 = vld [vmem:[%s4 + $0x3bc] sm:$0xf]
        %v719 = vld [vmem:[%s4 + $0x3c0] sm:$0xf]
        %v720 = vld [vmem:[%s4 + $0x3c4] sm:$0xf]
        %v721 = vld [vmem:[%s4 + $0x3c8] sm:$0xf]
        %v722 = vld [vmem:[%s4 + $0x3cc] sm:$0xf]
        %v723 = vld [vmem:[%s4 + $0x3d0] sm:$0xf]
        %v724 = vld [vmem:[%s4 + $0x3d4] sm:$0xf]
        %v725 = vld [vmem:[%s4 + $0x3d8] sm:$0xf]
        %v726 = vld [vmem:[%s4 + $0x3dc] sm:$0xf]
        %v727 = vld [vmem:[%s4 + $0x3e0] sm:$0xf]
        %v728 = vld [vmem:[%s4 + $0x3e4] sm:$0xf]
        %v729 = vld [vmem:[%s4 + $0x3e8] sm:$0xf]
        %v730 = vld [vmem:[%s4 + $0x3ec] sm:$0xf]
        %v731 = vld [vmem:[%s4 + $0x3f0] sm:$0xf]
        %v732 = vld [vmem:[%s4 + $0x3f4] sm:$0xf]
        %v733 = vld [vmem:[%s4 + $0x3f8] sm:$0xf]
        %v734 = vld [vmem:[%s4 + $0x3fc] sm:$0xf]
        %v735 = vld [vmem:[%s5] sm:$0x1]
        %v736 = vld [vmem:[%s5 + $0x1] sm:$0x1]
        %v737 = vld [vmem:[%s5 + $0x2] sm:$0x1]
        %v738 = vld [vmem:[%s5 + $0x3] sm:$0x1]
        %v739 = vld [vmem:[%s5 + $0x4] sm:$0x1]
        %v740 = vld [vmem:[%s5 + $0x5] sm:$0x1]
        %v741 = vld [vmem:[%s5 + $0x6] sm:$0x1]
        %v742 = vld [vmem:[%s5 + $0x7] sm:$0x1]
        %v751 = vlaneseq
        %v752 = vshrl.u32 %v751, 7
        %v753 = vsub.s32 0, %v752
        %v754 = vrot.slane %v735, %v753
        %v755 = vlaneseq
        %v756 = vshrl.u32 %v755, 7
        %v757 = vsub.s32 0, %v756
        %v758 = vrot.slane %v736, %v757
        %v759 = vlaneseq
        %v760 = vshrl.u32 %v759, 7
        %v761 = vsub.s32 0, %v760
        %v762 = vrot.slane %v737, %v761
        %v763 = vlaneseq
        %v764 = vshrl.u32 %v763, 7
        %v765 = vsub.s32 0, %v764
        %v766 = vrot.slane %v738, %v765
        %v767 = vlaneseq
        %v768 = vshrl.u32 %v767, 7
        %v769 = vsub.s32 0, %v768
        %v770 = vrot.slane %v739, %v769
        %v771 = vlaneseq
        %v772 = vshrl.u32 %v771, 7
        %v773 = vsub.s32 0, %v772
        %v774 = vrot.slane %v740, %v773
        %v775 = vlaneseq
        %v776 = vshrl.u32 %v775, 7
        %v777 = vsub.s32 0, %v776
        %v778 = vrot.slane %v741, %v777
        %v779 = vlaneseq
        %v780 = vshrl.u32 %v779, 7
        %v781 = vsub.s32 0, %v780
        %v782 = vrot.slane %v742, %v781
        %v823 = vunpack.c.l.b16 %v479
        %v824 = vunpack.c.l.b16 %v480
        %v825 = vunpack.c.l.b16 %v481
        %v826 = vunpack.c.l.b16 %v482
        %v827 = vunpack.c.l.b16 %v483
        %v828 = vunpack.c.l.b16 %v484
        %v829 = vunpack.c.l.b16 %v485
        %v830 = vunpack.c.l.b16 %v486
        %v831 = vunpack.c.l.b16 %v487
        %v832 = vunpack.c.l.b16 %v488
        %v833 = vunpack.c.l.b16 %v489
        %v834 = vunpack.c.l.b16 %v490
        %v835 = vunpack.c.l.b16 %v491
        %v836 = vunpack.c.l.b16 %v492
        %v837 = vunpack.c.l.b16 %v493
        %v838 = vunpack.c.l.b16 %v494
        %v839 = vunpack.c.l.b16 %v495
        %v840 = vunpack.c.l.b16 %v496
        %v841 = vunpack.c.l.b16 %v497
        %v842 = vunpack.c.l.b16 %v498
        %v843 = vunpack.c.l.b16 %v499
        %v844 = vunpack.c.l.b16 %v500
        %v845 = vunpack.c.l.b16 %v501
        %v846 = vunpack.c.l.b16 %v502
        %v847 = vunpack.c.l.b16 %v503
        %v848 = vunpack.c.l.b16 %v504
        %v849 = vunpack.c.l.b16 %v505
        %v850 = vunpack.c.l.b16 %v506
        %v851 = vunpack.c.l.b16 %v507
        %v852 = vunpack.c.l.b16 %v508
        %v853 = vunpack.c.l.b16 %v509
        %v854 = vunpack.c.l.b16 %v510
        %v855 = vpack.c.b16 %v824, %v823
        %v856 = vpack.c.b16 %v826, %v825
        %v857 = vpack.c.b16 %v828, %v827
        %v858 = vpack.c.b16 %v830, %v829
        %v859 = vpack.c.b16 %v832, %v831
        %v860 = vpack.c.b16 %v834, %v833
        %v861 = vpack.c.b16 %v836, %v835
        %v862 = vpack.c.b16 %v838, %v837
        %v863 = vpack.c.b16 %v840, %v839
        %v864 = vpack.c.b16 %v842, %v841
        %v865 = vpack.c.b16 %v844, %v843
        %v866 = vpack.c.b16 %v846, %v845
        %v867 = vpack.c.b16 %v848, %v847
        %v868 = vpack.c.b16 %v850, %v849
        %v869 = vpack.c.b16 %v852, %v851
        %v870 = vpack.c.b16 %v854, %v853
        %887 = vmatprep.subr.bf16.mxu0 0
        %888 = vmatpush1.bf16.msra.mxu0 %v855
        %889 = vmatprep.subr.bf16.mxu0 0
        %890 = vmatpush1.bf16.msra.mxu0 %v856
        %891 = vmatprep.subr.bf16.mxu0 0
        %892 = vmatpush1.bf16.msra.mxu0 %v857
        %893 = vmatprep.subr.bf16.mxu0 0
        %894 = vmatpush1.bf16.msra.mxu0 %v858
        %895 = vmatprep.subr.bf16.mxu0 0
        %896 = vmatpush1.bf16.msra.mxu0 %v859
        %897 = vmatprep.subr.bf16.mxu0 0
        %898 = vmatpush1.bf16.msra.mxu0 %v860
        %899 = vmatprep.subr.bf16.mxu0 0
        %900 = vmatpush1.bf16.msra.mxu0 %v861
        %901 = vmatprep.subr.bf16.mxu0 0
        %902 = vmatpush1.bf16.msra.mxu0 %v862
        %903 = vmatprep.subr.bf16.mxu0 0
        %904 = vmatpush1.bf16.msra.mxu0 %v863
        %905 = vmatprep.subr.bf16.mxu0 0
        %906 = vmatpush1.bf16.msra.mxu0 %v864
        %907 = vmatprep.subr.bf16.mxu0 0
        %908 = vmatpush1.bf16.msra.mxu0 %v865
        %909 = vmatprep.subr.bf16.mxu0 0
        %910 = vmatpush1.bf16.msra.mxu0 %v866
        %911 = vmatprep.subr.bf16.mxu0 0
        %912 = vmatpush1.bf16.msra.mxu0 %v867
        %913 = vmatprep.subr.bf16.mxu0 0
        %914 = vmatpush1.bf16.msra.mxu0 %v868
        %915 = vmatprep.subr.bf16.mxu0 0
        %916 = vmatpush1.bf16.msra.mxu0 %v869
        %917 = vmatprep.subr.bf16.mxu0 0
        %918 = vmatpush1.bf16.msra.mxu0 %v870
        %919 = vmatprep.mubr.bf16.mxu0 %v470
        %920 = vmatmul.mubr.bf16.gmra.mrb[0].mxu0 %v469
        %v921 = vpop.f32.mrb[0].mxu0
        %v922 = vadd.f32 %v754, %v921
        %v923 = vpop.f32.mrb[0].mxu0
        %v924 = vpop.f32.mrb[0].mxu0
        %v925 = vpop.f32.mrb[0].mxu0
        %926 = vdwg.mxu0
        %v959 = vunpack.c.l.b16 %v511
        %v960 = vunpack.c.l.b16 %v512
        %v961 = vunpack.c.l.b16 %v513
        %v962 = vunpack.c.l.b16 %v514
        %v963 = vunpack.c.l.b16 %v515
        %v964 = vunpack.c.l.b16 %v516
        %v965 = vunpack.c.l.b16 %v517
        %v966 = vunpack.c.l.b16 %v518
        %v967 = vunpack.c.l.b16 %v519
        %v968 = vunpack.c.l.b16 %v520
        %v969 = vunpack.c.l.b16 %v521
        %v970 = vunpack.c.l.b16 %v522
        %v971 = vunpack.c.l.b16 %v523
        %v972 = vunpack.c.l.b16 %v524
        %v973 = vunpack.c.l.b16 %v525
        %v974 = vunpack.c.l.b16 %v526
        %v975 = vunpack.c.l.b16 %v527
        %v976 = vunpack.c.l.b16 %v528
        %v977 = vunpack.c.l.b16 %v529
        %v978 = vunpack.c.l.b16 %v530
        %v979 = vunpack.c.l.b16 %v531
        %v980 = vunpack.c.l.b16 %v532
        %v981 = vunpack.c.l.b16 %v533
        %v982 = vunpack.c.l.b16 %v534
        %v983 = vunpack.c.l.b16 %v535
        %v984 = vunpack.c.l.b16 %v536
        %v985 = vunpack.c.l.b16 %v537
        %v986 = vunpack.c.l.b16 %v538
        %v987 = vunpack.c.l.b16 %v539
        %v988 = vunpack.c.l.b16 %v540
        %v989 = vunpack.c.l.b16 %v541
        %v990 = vunpack.c.l.b16 %v542
        %v991 = vpack.c.b16 %v960, %v959
        %v992 = vpack.c.b16 %v962, %v961
        %v993 = vpack.c.b16 %v964, %v963
        %v994 = vpack.c.b16 %v966, %v965
        %v995 = vpack.c.b16 %v968, %v967
        %v996 = vpack.c.b16 %v970, %v969
        %v997 = vpack.c.b16 %v972, %v971
        %v998 = vpack.c.b16 %v974, %v973
        %v999 = vpack.c.b16 %v976, %v975
        %v1000 = vpack.c.b16 %v978, %v977
        %v1001 = vpack.c.b16 %v980, %v979
        %v1002 = vpack.c.b16 %v982, %v981
        %v1003 = vpack.c.b16 %v984, %v983
        %v1004 = vpack.c.b16 %v986, %v985
        %v1005 = vpack.c.b16 %v988, %v987
        %v1006 = vpack.c.b16 %v990, %v989
        %1023 = vmatprep.subr.bf16.mxu0 0
        %1024 = vmatpush1.bf16.msra.mxu0 %v991
        %1025 = vmatprep.subr.bf16.mxu0 0
        %1026 = vmatpush1.bf16.msra.mxu0 %v992
        %1027 = vmatprep.subr.bf16.mxu0 0
        %1028 = vmatpush1.bf16.msra.mxu0 %v993
        %1029 = vmatprep.subr.bf16.mxu0 0
        %1030 = vmatpush1.bf16.msra.mxu0 %v994
        %1031 = vmatprep.subr.bf16.mxu0 0
        %1032 = vmatpush1.bf16.msra.mxu0 %v995
        %1033 = vmatprep.subr.bf16.mxu0 0
        %1034 = vmatpush1.bf16.msra.mxu0 %v996
        %1035 = vmatprep.subr.bf16.mxu0 0
        %1036 = vmatpush1.bf16.msra.mxu0 %v997
        %1037 = vmatprep.subr.bf16.mxu0 0
        %1038 = vmatpush1.bf16.msra.mxu0 %v998
        %1039 = vmatprep.subr.bf16.mxu0 0
        %1040 = vmatpush1.bf16.msra.mxu0 %v999
        %1041 = vmatprep.subr.bf16.mxu0 0
        %1042 = vmatpush1.bf16.msra.mxu0 %v1000
        %1043 = vmatprep.subr.bf16.mxu0 0
        %1044 = vmatpush1.bf16.msra.mxu0 %v1001
        %1045 = vmatprep.subr.bf16.mxu0 0
        %1046 = vmatpush1.bf16.msra.mxu0 %v1002
        %1047 = vmatprep.subr.bf16.mxu0 0
        %1048 = vmatpush1.bf16.msra.mxu0 %v1003
        %1049 = vmatprep.subr.bf16.mxu0 0
        %1050 = vmatpush1.bf16.msra.mxu0 %v1004
        %1051 = vmatprep.subr.bf16.mxu0 0
        %1052 = vmatpush1.bf16.msra.mxu0 %v1005
        %1053 = vmatprep.subr.bf16.mxu0 0
        %1054 = vmatpush1.bf16.msra.mxu0 %v1006
        %1055 = vmatprep.mubr.bf16.mxu0 %v470
        %1056 = vmatmul.mubr.bf16.gmra.mrb[0].mxu0 %v469
        %v1057 = vpop.f32.mrb[0].mxu0
        %v1058 = vadd.f32 %v758, %v1057
        %v1059 = vpop.f32.mrb[0].mxu0
        %v1060 = vpop.f32.mrb[0].mxu0
        %v1061 = vpop.f32.mrb[0].mxu0
        %1062 = vdwg.mxu0
        %v1095 = vunpack.c.l.b16 %v543
        %v1096 = vunpack.c.l.b16 %v544
        %v1097 = vunpack.c.l.b16 %v545
        %v1098 = vunpack.c.l.b16 %v546
        %v1099 = vunpack.c.l.b16 %v547
        %v1100 = vunpack.c.l.b16 %v548
        %v1101 = vunpack.c.l.b16 %v549
        %v1102 = vunpack.c.l.b16 %v550
        %v1103 = vunpack.c.l.b16 %v551
        %v1104 = vunpack.c.l.b16 %v552
        %v1105 = vunpack.c.l.b16 %v553
        %v1106 = vunpack.c.l.b16 %v554
        %v1107 = vunpack.c.l.b16 %v555
        %v1108 = vunpack.c.l.b16 %v556
        %v1109 = vunpack.c.l.b16 %v557
        %v1110 = vunpack.c.l.b16 %v558
        %v1111 = vunpack.c.l.b16 %v559
        %v1112 = vunpack.c.l.b16 %v560
        %v1113 = vunpack.c.l.b16 %v561
        %v1114 = vunpack.c.l.b16 %v562
        %v1115 = vunpack.c.l.b16 %v563
        %v1116 = vunpack.c.l.b16 %v564
        %v1117 = vunpack.c.l.b16 %v565
        %v1118 = vunpack.c.l.b16 %v566
        %v1119 = vunpack.c.l.b16 %v567
        %v1120 = vunpack.c.l.b16 %v568
        %v1121 = vunpack.c.l.b16 %v569
        %v1122 = vunpack.c.l.b16 %v570
        %v1123 = vunpack.c.l.b16 %v571
        %v1124 = vunpack.c.l.b16 %v572
        %v1125 = vunpack.c.l.b16 %v573
        %v1126 = vunpack.c.l.b16 %v574
        %v1127 = vpack.c.b16 %v1096, %v1095
        %v1128 = vpack.c.b16 %v1098, %v1097
        %v1129 = vpack.c.b16 %v1100, %v1099
        %v1130 = vpack.c.b16 %v1102, %v1101
        %v1131 = vpack.c.b16 %v1104, %v1103
        %v1132 = vpack.c.b16 %v1106, %v1105
        %v1133 = vpack.c.b16 %v1108, %v1107
        %v1134 = vpack.c.b16 %v1110, %v1109
        %v1135 = vpack.c.b16 %v1112, %v1111
        %v1136 = vpack.c.b16 %v1114, %v1113
        %v1137 = vpack.c.b16 %v1116, %v1115
        %v1138 = vpack.c.b16 %v1118, %v1117
        %v1139 = vpack.c.b16 %v1120, %v1119
        %v1140 = vpack.c.b16 %v1122, %v1121
        %v1141 = vpack.c.b16 %v1124, %v1123
        %v1142 = vpack.c.b16 %v1126, %v1125
        %1159 = vmatprep.subr.bf16.mxu0 0
        %1160 = vmatpush1.bf16.msra.mxu0 %v1127
        %1161 = vmatprep.subr.bf16.mxu0 0
        %1162 = vmatpush1.bf16.msra.mxu0 %v1128
        %1163 = vmatprep.subr.bf16.mxu0 0
        %1164 = vmatpush1.bf16.msra.mxu0 %v1129
        %1165 = vmatprep.subr.bf16.mxu0 0
        %1166 = vmatpush1.bf16.msra.mxu0 %v1130
        %1167 = vmatprep.subr.bf16.mxu0 0
        %1168 = vmatpush1.bf16.msra.mxu0 %v1131
        %1169 = vmatprep.subr.bf16.mxu0 0
        %1170 = vmatpush1.bf16.msra.mxu0 %v1132
        %1171 = vmatprep.subr.bf16.mxu0 0
        %1172 = vmatpush1.bf16.msra.mxu0 %v1133
        %1173 = vmatprep.subr.bf16.mxu0 0
        %1174 = vmatpush1.bf16.msra.mxu0 %v1134
        %1175 = vmatprep.subr.bf16.mxu0 0
        %1176 = vmatpush1.bf16.msra.mxu0 %v1135
        %1177 = vmatprep.subr.bf16.mxu0 0
        %1178 = vmatpush1.bf16.msra.mxu0 %v1136
        %1179 = vmatprep.subr.bf16.mxu0 0
        %1180 = vmatpush1.bf16.msra.mxu0 %v1137
        %1181 = vmatprep.subr.bf16.mxu0 0
        %1182 = vmatpush1.bf16.msra.mxu0 %v1138
        %1183 = vmatprep.subr.bf16.mxu0 0
        %1184 = vmatpush1.bf16.msra.mxu0 %v1139
        %1185 = vmatprep.subr.bf16.mxu0 0
        %1186 = vmatpush1.bf16.msra.mxu0 %v1140
        %1187 = vmatprep.subr.bf16.mxu0 0
        %1188 = vmatpush1.bf16.msra.mxu0 %v1141
        %1189 = vmatprep.subr.bf16.mxu0 0
        %1190 = vmatpush1.bf16.msra.mxu0 %v1142
        %1191 = vmatprep.mubr.bf16.mxu0 %v470
        %1192 = vmatmul.mubr.bf16.gmra.mrb[0].mxu0 %v469
        %v1193 = vpop.f32.mrb[0].mxu0
        %v1194 = vadd.f32 %v762, %v1193
        %v1195 = vpop.f32.mrb[0].mxu0
        %v1196 = vpop.f32.mrb[0].mxu0
        %v1197 = vpop.f32.mrb[0].mxu0
        %1198 = vdwg.mxu0
        %v1231 = vunpack.c.l.b16 %v575
        %v1232 = vunpack.c.l.b16 %v576
        %v1233 = vunpack.c.l.b16 %v577
        %v1234 = vunpack.c.l.b16 %v578
        %v1235 = vunpack.c.l.b16 %v579
        %v1236 = vunpack.c.l.b16 %v580
        %v1237 = vunpack.c.l.b16 %v581
        %v1238 = vunpack.c.l.b16 %v582
        %v1239 = vunpack.c.l.b16 %v583
        %v1240 = vunpack.c.l.b16 %v584
        %v1241 = vunpack.c.l.b16 %v585
        %v1242 = vunpack.c.l.b16 %v586
        %v1243 = vunpack.c.l.b16 %v587
        %v1244 = vunpack.c.l.b16 %v588
        %v1245 = vunpack.c.l.b16 %v589
        %v1246 = vunpack.c.l.b16 %v590
        %v1247 = vunpack.c.l.b16 %v591
        %v1248 = vunpack.c.l.b16 %v592
        %v1249 = vunpack.c.l.b16 %v593
        %v1250 = vunpack.c.l.b16 %v594
        %v1251 = vunpack.c.l.b16 %v595
        %v1252 = vunpack.c.l.b16 %v596
        %v1253 = vunpack.c.l.b16 %v597
        %v1254 = vunpack.c.l.b16 %v598
        %v1255 = vunpack.c.l.b16 %v599
        %v1256 = vunpack.c.l.b16 %v600
        %v1257 = vunpack.c.l.b16 %v601
        %v1258 = vunpack.c.l.b16 %v602
        %v1259 = vunpack.c.l.b16 %v603
        %v1260 = vunpack.c.l.b16 %v604
        %v1261 = vunpack.c.l.b16 %v605
        %v1262 = vunpack.c.l.b16 %v606
        %v1263 = vpack.c.b16 %v1232, %v1231
        %v1264 = vpack.c.b16 %v1234, %v1233
        %v1265 = vpack.c.b16 %v1236, %v1235
        %v1266 = vpack.c.b16 %v1238, %v1237
        %v1267 = vpack.c.b16 %v1240, %v1239
        %v1268 = vpack.c.b16 %v1242, %v1241
        %v1269 = vpack.c.b16 %v1244, %v1243
        %v1270 = vpack.c.b16 %v1246, %v1245
        %v1271 = vpack.c.b16 %v1248, %v1247
        %v1272 = vpack.c.b16 %v1250, %v1249
        %v1273 = vpack.c.b16 %v1252, %v1251
        %v1274 = vpack.c.b16 %v1254, %v1253
        %v1275 = vpack.c.b16 %v1256, %v1255
        %v1276 = vpack.c.b16 %v1258, %v1257
        %v1277 = vpack.c.b16 %v1260, %v1259
        %v1278 = vpack.c.b16 %v1262, %v1261
        %1295 = vmatprep.subr.bf16.mxu0 0
        %1296 = vmatpush1.bf16.msra.mxu0 %v1263
        %1297 = vmatprep.subr.bf16.mxu0 0
        %1298 = vmatpush1.bf16.msra.mxu0 %v1264
        %1299 = vmatprep.subr.bf16.mxu0 0
        %1300 = vmatpush1.bf16.msra.mxu0 %v1265
        %1301 = vmatprep.subr.bf16.mxu0 0
        %1302 = vmatpush1.bf16.msra.mxu0 %v1266
        %1303 = vmatprep.subr.bf16.mxu0 0
        %1304 = vmatpush1.bf16.msra.mxu0 %v1267
        %1305 = vmatprep.subr.bf16.mxu0 0
        %1306 = vmatpush1.bf16.msra.mxu0 %v1268
        %1307 = vmatprep.subr.bf16.mxu0 0
        %1308 = vmatpush1.bf16.msra.mxu0 %v1269
        %1309 = vmatprep.subr.bf16.mxu0 0
        %1310 = vmatpush1.bf16.msra.mxu0 %v1270
        %1311 = vmatprep.subr.bf16.mxu0 0
        %1312 = vmatpush1.bf16.msra.mxu0 %v1271
        %1313 = vmatprep.subr.bf16.mxu0 0
        %1314 = vmatpush1.bf16.msra.mxu0 %v1272
        %1315 = vmatprep.subr.bf16.mxu0 0
        %1316 = vmatpush1.bf16.msra.mxu0 %v1273
        %1317 = vmatprep.subr.bf16.mxu0 0
        %1318 = vmatpush1.bf16.msra.mxu0 %v1274
        %1319 = vmatprep.subr.bf16.mxu0 0
        %1320 = vmatpush1.bf16.msra.mxu0 %v1275
        %1321 = vmatprep.subr.bf16.mxu0 0
        %1322 = vmatpush1.bf16.msra.mxu0 %v1276
        %1323 = vmatprep.subr.bf16.mxu0 0
        %1324 = vmatpush1.bf16.msra.mxu0 %v1277
        %1325 = vmatprep.subr.bf16.mxu0 0
        %1326 = vmatpush1.bf16.msra.mxu0 %v1278
        %1327 = vmatprep.mubr.bf16.mxu0 %v470
        %1328 = vmatmul.mubr.bf16.gmra.mrb[0].mxu0 %v469
        %v1329 = vpop.f32.mrb[0].mxu0
        %v1330 = vadd.f32 %v766, %v1329
        %v1331 = vpop.f32.mrb[0].mxu0
        %v1332 = vpop.f32.mrb[0].mxu0
        %v1333 = vpop.f32.mrb[0].mxu0
        %1334 = vdwg.mxu0
        %v1367 = vunpack.c.l.b16 %v607
        %v1368 = vunpack.c.l.b16 %v608
        %v1369 = vunpack.c.l.b16 %v609
        %v1370 = vunpack.c.l.b16 %v610
        %v1371 = vunpack.c.l.b16 %v611
        %v1372 = vunpack.c.l.b16 %v612
        %v1373 = vunpack.c.l.b16 %v613
        %v1374 = vunpack.c.l.b16 %v614
        %v1375 = vunpack.c.l.b16 %v615
        %v1376 = vunpack.c.l.b16 %v616
        %v1377 = vunpack.c.l.b16 %v617
        %v1378 = vunpack.c.l.b16 %v618
        %v1379 = vunpack.c.l.b16 %v619
        %v1380 = vunpack.c.l.b16 %v620
        %v1381 = vunpack.c.l.b16 %v621
        %v1382 = vunpack.c.l.b16 %v622
        %v1383 = vunpack.c.l.b16 %v623
        %v1384 = vunpack.c.l.b16 %v624
        %v1385 = vunpack.c.l.b16 %v625
        %v1386 = vunpack.c.l.b16 %v626
        %v1387 = vunpack.c.l.b16 %v627
        %v1388 = vunpack.c.l.b16 %v628
        %v1389 = vunpack.c.l.b16 %v629
        %v1390 = vunpack.c.l.b16 %v630
        %v1391 = vunpack.c.l.b16 %v631
        %v1392 = vunpack.c.l.b16 %v632
        %v1393 = vunpack.c.l.b16 %v633
        %v1394 = vunpack.c.l.b16 %v634
        %v1395 = vunpack.c.l.b16 %v635
        %v1396 = vunpack.c.l.b16 %v636
        %v1397 = vunpack.c.l.b16 %v637
        %v1398 = vunpack.c.l.b16 %v638
        %v1399 = vpack.c.b16 %v1368, %v1367
        %v1400 = vpack.c.b16 %v1370, %v1369
        %v1401 = vpack.c.b16 %v1372, %v1371
        %v1402 = vpack.c.b16 %v1374, %v1373
        %v1403 = vpack.c.b16 %v1376, %v1375
        %v1404 = vpack.c.b16 %v1378, %v1377
        %v1405 = vpack.c.b16 %v1380, %v1379
        %v1406 = vpack.c.b16 %v1382, %v1381
        %v1407 = vpack.c.b16 %v1384, %v1383
        %v1408 = vpack.c.b16 %v1386, %v1385
        %v1409 = vpack.c.b16 %v1388, %v1387
        %v1410 = vpack.c.b16 %v1390, %v1389
        %v1411 = vpack.c.b16 %v1392, %v1391
        %v1412 = vpack.c.b16 %v1394, %v1393
        %v1413 = vpack.c.b16 %v1396, %v1395
        %v1414 = vpack.c.b16 %v1398, %v1397
        %1431 = vmatprep.subr.bf16.mxu0 0
        %1432 = vmatpush1.bf16.msra.mxu0 %v1399
        %1433 = vmatprep.subr.bf16.mxu0 0
        %1434 = vmatpush1.bf16.msra.mxu0 %v1400
        %1435 = vmatprep.subr.bf16.mxu0 0
        %1436 = vmatpush1.bf16.msra.mxu0 %v1401
        %1437 = vmatprep.subr.bf16.mxu0 0
        %1438 = vmatpush1.bf16.msra.mxu0 %v1402
        %1439 = vmatprep.subr.bf16.mxu0 0
        %1440 = vmatpush1.bf16.msra.mxu0 %v1403
        %1441 = vmatprep.subr.bf16.mxu0 0
        %1442 = vmatpush1.bf16.msra.mxu0 %v1404
        %1443 = vmatprep.subr.bf16.mxu0 0
        %1444 = vmatpush1.bf16.msra.mxu0 %v1405
        %1445 = vmatprep.subr.bf16.mxu0 0
        %1446 = vmatpush1.bf16.msra.mxu0 %v1406
        %1447 = vmatprep.subr.bf16.mxu0 0
        %1448 = vmatpush1.bf16.msra.mxu0 %v1407
        %1449 = vmatprep.subr.bf16.mxu0 0
        %1450 = vmatpush1.bf16.msra.mxu0 %v1408
        %1451 = vmatprep.subr.bf16.mxu0 0
        %1452 = vmatpush1.bf16.msra.mxu0 %v1409
        %1453 = vmatprep.subr.bf16.mxu0 0
        %1454 = vmatpush1.bf16.msra.mxu0 %v1410
        %1455 = vmatprep.subr.bf16.mxu0 0
        %1456 = vmatpush1.bf16.msra.mxu0 %v1411
        %1457 = vmatprep.subr.bf16.mxu0 0
        %1458 = vmatpush1.bf16.msra.mxu0 %v1412
        %1459 = vmatprep.subr.bf16.mxu0 0
        %1460 = vmatpush1.bf16.msra.mxu0 %v1413
        %1461 = vmatprep.subr.bf16.mxu0 0
        %1462 = vmatpush1.bf16.msra.mxu0 %v1414
        %1463 = vmatprep.mubr.bf16.mxu0 %v470
        %1464 = vmatmul.mubr.bf16.gmra.mrb[0].mxu0 %v469
        %v1465 = vpop.f32.mrb[0].mxu0
        %v1466 = vadd.f32 %v770, %v1465
        %v1467 = vpop.f32.mrb[0].mxu0
        %v1468 = vpop.f32.mrb[0].mxu0
        %v1469 = vpop.f32.mrb[0].mxu0
        %1470 = vdwg.mxu0
        %v1503 = vunpack.c.l.b16 %v639
        %v1504 = vunpack.c.l.b16 %v640
        %v1505 = vunpack.c.l.b16 %v641
        %v1506 = vunpack.c.l.b16 %v642
        %v1507 = vunpack.c.l.b16 %v643
        %v1508 = vunpack.c.l.b16 %v644
        %v1509 = vunpack.c.l.b16 %v645
        %v1510 = vunpack.c.l.b16 %v646
        %v1511 = vunpack.c.l.b16 %v647
        %v1512 = vunpack.c.l.b16 %v648
        %v1513 = vunpack.c.l.b16 %v649
        %v1514 = vunpack.c.l.b16 %v650
        %v1515 = vunpack.c.l.b16 %v651
        %v1516 = vunpack.c.l.b16 %v652
        %v1517 = vunpack.c.l.b16 %v653
        %v1518 = vunpack.c.l.b16 %v654
        %v1519 = vunpack.c.l.b16 %v655
        %v1520 = vunpack.c.l.b16 %v656
        %v1521 = vunpack.c.l.b16 %v657
        %v1522 = vunpack.c.l.b16 %v658
        %v1523 = vunpack.c.l.b16 %v659
        %v1524 = vunpack.c.l.b16 %v660
        %v1525 = vunpack.c.l.b16 %v661
        %v1526 = vunpack.c.l.b16 %v662
        %v1527 = vunpack.c.l.b16 %v663
        %v1528 = vunpack.c.l.b16 %v664
        %v1529 = vunpack.c.l.b16 %v665
        %v1530 = vunpack.c.l.b16 %v666
        %v1531 = vunpack.c.l.b16 %v667
        %v1532 = vunpack.c.l.b16 %v668
        %v1533 = vunpack.c.l.b16 %v669
        %v1534 = vunpack.c.l.b16 %v670
        %v1535 = vpack.c.b16 %v1504, %v1503
        %v1536 = vpack.c.b16 %v1506, %v1505
        %v1537 = vpack.c.b16 %v1508, %v1507
        %v1538 = vpack.c.b16 %v1510, %v1509
        %v1539 = vpack.c.b16 %v1512, %v1511
        %v1540 = vpack.c.b16 %v1514, %v1513
        %v1541 = vpack.c.b16 %v1516, %v1515
        %v1542 = vpack.c.b16 %v1518, %v1517
        %v1543 = vpack.c.b16 %v1520, %v1519
        %v1544 = vpack.c.b16 %v1522, %v1521
        %v1545 = vpack.c.b16 %v1524, %v1523
        %v1546 = vpack.c.b16 %v1526, %v1525
        %v1547 = vpack.c.b16 %v1528, %v1527
        %v1548 = vpack.c.b16 %v1530, %v1529
        %v1549 = vpack.c.b16 %v1532, %v1531
        %v1550 = vpack.c.b16 %v1534, %v1533
        %1567 = vmatprep.subr.bf16.mxu0 0
        %1568 = vmatpush1.bf16.msra.mxu0 %v1535
        %1569 = vmatprep.subr.bf16.mxu0 0
        %1570 = vmatpush1.bf16.msra.mxu0 %v1536
        %1571 = vmatprep.subr.bf16.mxu0 0
        %1572 = vmatpush1.bf16.msra.mxu0 %v1537
        %1573 = vmatprep.subr.bf16.mxu0 0
        %1574 = vmatpush1.bf16.msra.mxu0 %v1538
        %1575 = vmatprep.subr.bf16.mxu0 0
        %1576 = vmatpush1.bf16.msra.mxu0 %v1539
        %1577 = vmatprep.subr.bf16.mxu0 0
        %1578 = vmatpush1.bf16.msra.mxu0 %v1540
        %1579 = vmatprep.subr.bf16.mxu0 0
        %1580 = vmatpush1.bf16.msra.mxu0 %v1541
        %1581 = vmatprep.subr.bf16.mxu0 0
        %1582 = vmatpush1.bf16.msra.mxu0 %v1542
        %1583 = vmatprep.subr.bf16.mxu0 0
        %1584 = vmatpush1.bf16.msra.mxu0 %v1543
        %1585 = vmatprep.subr.bf16.mxu0 0
        %1586 = vmatpush1.bf16.msra.mxu0 %v1544
        %1587 = vmatprep.subr.bf16.mxu0 0
        %1588 = vmatpush1.bf16.msra.mxu0 %v1545
        %1589 = vmatprep.subr.bf16.mxu0 0
        %1590 = vmatpush1.bf16.msra.mxu0 %v1546
        %1591 = vmatprep.subr.bf16.mxu0 0
        %1592 = vmatpush1.bf16.msra.mxu0 %v1547
        %1593 = vmatprep.subr.bf16.mxu0 0
        %1594 = vmatpush1.bf16.msra.mxu0 %v1548
        %1595 = vmatprep.subr.bf16.mxu0 0
        %1596 = vmatpush1.bf16.msra.mxu0 %v1549
        %1597 = vmatprep.subr.bf16.mxu0 0
        %1598 = vmatpush1.bf16.msra.mxu0 %v1550
        %1599 = vmatprep.mubr.bf16.mxu0 %v470
        %1600 = vmatmul.mubr.bf16.gmra.mrb[0].mxu0 %v469
        %v1601 = vpop.f32.mrb[0].mxu0
        %v1602 = vadd.f32 %v774, %v1601
        %v1603 = vpop.f32.mrb[0].mxu0
        %v1604 = vpop.f32.mrb[0].mxu0
        %v1605 = vpop.f32.mrb[0].mxu0
        %1606 = vdwg.mxu0
        %v1639 = vunpack.c.l.b16 %v671
        %v1640 = vunpack.c.l.b16 %v672
        %v1641 = vunpack.c.l.b16 %v673
        %v1642 = vunpack.c.l.b16 %v674
        %v1643 = vunpack.c.l.b16 %v675
        %v1644 = vunpack.c.l.b16 %v676
        %v1645 = vunpack.c.l.b16 %v677
        %v1646 = vunpack.c.l.b16 %v678
        %v1647 = vunpack.c.l.b16 %v679
        %v1648 = vunpack.c.l.b16 %v680
        %v1649 = vunpack.c.l.b16 %v681
        %v1650 = vunpack.c.l.b16 %v682
        %v1651 = vunpack.c.l.b16 %v683
        %v1652 = vunpack.c.l.b16 %v684
        %v1653 = vunpack.c.l.b16 %v685
        %v1654 = vunpack.c.l.b16 %v686
        %v1655 = vunpack.c.l.b16 %v687
        %v1656 = vunpack.c.l.b16 %v688
        %v1657 = vunpack.c.l.b16 %v689
        %v1658 = vunpack.c.l.b16 %v690
        %v1659 = vunpack.c.l.b16 %v691
        %v1660 = vunpack.c.l.b16 %v692
        %v1661 = vunpack.c.l.b16 %v693
        %v1662 = vunpack.c.l.b16 %v694
        %v1663 = vunpack.c.l.b16 %v695
        %v1664 = vunpack.c.l.b16 %v696
        %v1665 = vunpack.c.l.b16 %v697
        %v1666 = vunpack.c.l.b16 %v698
        %v1667 = vunpack.c.l.b16 %v699
        %v1668 = vunpack.c.l.b16 %v700
        %v1669 = vunpack.c.l.b16 %v701
        %v1670 = vunpack.c.l.b16 %v702
        %v1671 = vpack.c.b16 %v1640, %v1639
        %v1672 = vpack.c.b16 %v1642, %v1641
        %v1673 = vpack.c.b16 %v1644, %v1643
        %v1674 = vpack.c.b16 %v1646, %v1645
        %v1675 = vpack.c.b16 %v1648, %v1647
        %v1676 = vpack.c.b16 %v1650, %v1649
        %v1677 = vpack.c.b16 %v1652, %v1651
        %v1678 = vpack.c.b16 %v1654, %v1653
        %v1679 = vpack.c.b16 %v1656, %v1655
        %v1680 = vpack.c.b16 %v1658, %v1657
        %v1681 = vpack.c.b16 %v1660, %v1659
        %v1682 = vpack.c.b16 %v1662, %v1661
        %v1683 = vpack.c.b16 %v1664, %v1663
        %v1684 = vpack.c.b16 %v1666, %v1665
        %v1685 = vpack.c.b16 %v1668, %v1667
        %v1686 = vpack.c.b16 %v1670, %v1669
        %1703 = vmatprep.subr.bf16.mxu0 0
        %1704 = vmatpush1.bf16.msra.mxu0 %v1671
        %1705 = vmatprep.subr.bf16.mxu0 0
        %1706 = vmatpush1.bf16.msra.mxu0 %v1672
        %1707 = vmatprep.subr.bf16.mxu0 0
        %1708 = vmatpush1.bf16.msra.mxu0 %v1673
        %1709 = vmatprep.subr.bf16.mxu0 0
        %1710 = vmatpush1.bf16.msra.mxu0 %v1674
        %1711 = vmatprep.subr.bf16.mxu0 0
        %1712 = vmatpush1.bf16.msra.mxu0 %v1675
        %1713 = vmatprep.subr.bf16.mxu0 0
        %1714 = vmatpush1.bf16.msra.mxu0 %v1676
        %1715 = vmatprep.subr.bf16.mxu0 0
        %1716 = vmatpush1.bf16.msra.mxu0 %v1677
        %1717 = vmatprep.subr.bf16.mxu0 0
        %1718 = vmatpush1.bf16.msra.mxu0 %v1678
        %1719 = vmatprep.subr.bf16.mxu0 0
        %1720 = vmatpush1.bf16.msra.mxu0 %v1679
        %1721 = vmatprep.subr.bf16.mxu0 0
        %1722 = vmatpush1.bf16.msra.mxu0 %v1680
        %1723 = vmatprep.subr.bf16.mxu0 0
        %1724 = vmatpush1.bf16.msra.mxu0 %v1681
        %1725 = vmatprep.subr.bf16.mxu0 0
        %1726 = vmatpush1.bf16.msra.mxu0 %v1682
        %1727 = vmatprep.subr.bf16.mxu0 0
        %1728 = vmatpush1.bf16.msra.mxu0 %v1683
        %1729 = vmatprep.subr.bf16.mxu0 0
        %1730 = vmatpush1.bf16.msra.mxu0 %v1684
        %1731 = vmatprep.subr.bf16.mxu0 0
        %1732 = vmatpush1.bf16.msra.mxu0 %v1685
        %1733 = vmatprep.subr.bf16.mxu0 0
        %1734 = vmatpush1.bf16.msra.mxu0 %v1686
        %1735 = vmatprep.mubr.bf16.mxu0 %v470
        %1736 = vmatmul.mubr.bf16.gmra.mrb[0].mxu0 %v469
        %v1737 = vpop.f32.mrb[0].mxu0
        %v1738 = vadd.f32 %v778, %v1737
        %v1739 = vpop.f32.mrb[0].mxu0
        %v1740 = vpop.f32.mrb[0].mxu0
        %v1741 = vpop.f32.mrb[0].mxu0
        %1742 = vdwg.mxu0
        %v1775 = vunpack.c.l.b16 %v703
        %v1776 = vunpack.c.l.b16 %v704
        %v1777 = vunpack.c.l.b16 %v705
        %v1778 = vunpack.c.l.b16 %v706
        %v1779 = vunpack.c.l.b16 %v707
        %v1780 = vunpack.c.l.b16 %v708
        %v1781 = vunpack.c.l.b16 %v709
        %v1782 = vunpack.c.l.b16 %v710
        %v1783 = vunpack.c.l.b16 %v711
        %v1784 = vunpack.c.l.b16 %v712
        %v1785 = vunpack.c.l.b16 %v713
        %v1786 = vunpack.c.l.b16 %v714
        %v1787 = vunpack.c.l.b16 %v715
        %v1788 = vunpack.c.l.b16 %v716
        %v1789 = vunpack.c.l.b16 %v717
        %v1790 = vunpack.c.l.b16 %v718
        %v1791 = vunpack.c.l.b16 %v719
        %v1792 = vunpack.c.l.b16 %v720
        %v1793 = vunpack.c.l.b16 %v721
        %v1794 = vunpack.c.l.b16 %v722
        %v1795 = vunpack.c.l.b16 %v723
        %v1796 = vunpack.c.l.b16 %v724
        %v1797 = vunpack.c.l.b16 %v725
        %v1798 = vunpack.c.l.b16 %v726
        %v1799 = vunpack.c.l.b16 %v727
        %v1800 = vunpack.c.l.b16 %v728
        %v1801 = vunpack.c.l.b16 %v729
        %v1802 = vunpack.c.l.b16 %v730
        %v1803 = vunpack.c.l.b16 %v731
        %v1804 = vunpack.c.l.b16 %v732
        %v1805 = vunpack.c.l.b16 %v733
        %v1806 = vunpack.c.l.b16 %v734
        %v1807 = vpack.c.b16 %v1776, %v1775
        %v1808 = vpack.c.b16 %v1778, %v1777
        %v1809 = vpack.c.b16 %v1780, %v1779
        %v1810 = vpack.c.b16 %v1782, %v1781
        %v1811 = vpack.c.b16 %v1784, %v1783
        %v1812 = vpack.c.b16 %v1786, %v1785
        %v1813 = vpack.c.b16 %v1788, %v1787
        %v1814 = vpack.c.b16 %v1790, %v1789
        %v1815 = vpack.c.b16 %v1792, %v1791
        %v1816 = vpack.c.b16 %v1794, %v1793
        %v1817 = vpack.c.b16 %v1796, %v1795
        %v1818 = vpack.c.b16 %v1798, %v1797
        %v1819 = vpack.c.b16 %v1800, %v1799
        %v1820 = vpack.c.b16 %v1802, %v1801
        %v1821 = vpack.c.b16 %v1804, %v1803
        %v1822 = vpack.c.b16 %v1806, %v1805
        %1839 = vmatprep.subr.bf16.mxu0 0
        %1840 = vmatpush1.bf16.msra.mxu0 %v1807
        %1841 = vmatprep.subr.bf16.mxu0 0
        %1842 = vmatpush1.bf16.msra.mxu0 %v1808
        %1843 = vmatprep.subr.bf16.mxu0 0
        %1844 = vmatpush1.bf16.msra.mxu0 %v1809
        %1845 = vmatprep.subr.bf16.mxu0 0
        %1846 = vmatpush1.bf16.msra.mxu0 %v1810
        %1847 = vmatprep.subr.bf16.mxu0 0
        %1848 = vmatpush1.bf16.msra.mxu0 %v1811
        %1849 = vmatprep.subr.bf16.mxu0 0
        %1850 = vmatpush1.bf16.msra.mxu0 %v1812
        %1851 = vmatprep.subr.bf16.mxu0 0
        %1852 = vmatpush1.bf16.msra.mxu0 %v1813
        %1853 = vmatprep.subr.bf16.mxu0 0
        %1854 = vmatpush1.bf16.msra.mxu0 %v1814
        %1855 = vmatprep.subr.bf16.mxu0 0
        %1856 = vmatpush1.bf16.msra.mxu0 %v1815
        %1857 = vmatprep.subr.bf16.mxu0 0
        %1858 = vmatpush1.bf16.msra.mxu0 %v1816
        %1859 = vmatprep.subr.bf16.mxu0 0
        %1860 = vmatpush1.bf16.msra.mxu0 %v1817
        %1861 = vmatprep.subr.bf16.mxu0 0
        %1862 = vmatpush1.bf16.msra.mxu0 %v1818
        %1863 = vmatprep.subr.bf16.mxu0 0
        %1864 = vmatpush1.bf16.msra.mxu0 %v1819
        %1865 = vmatprep.subr.bf16.mxu0 0
        %1866 = vmatpush1.bf16.msra.mxu0 %v1820
        %1867 = vmatprep.subr.bf16.mxu0 0
        %1868 = vmatpush1.bf16.msra.mxu0 %v1821
        %1869 = vmatprep.subr.bf16.mxu0 0
        %1870 = vmatpush1.bf16.msra.mxu0 %v1822
        %1871 = vmatprep.mubr.bf16.mxu0 %v470
        %1872 = vmatmul.mubr.bf16.gmra.mrb[0].mxu0 %v469
        %v1873 = vpop.f32.mrb[0].mxu0
        %v1874 = vadd.f32 %v782, %v1873
        %v1875 = vpop.f32.mrb[0].mxu0
        %v1876 = vpop.f32.mrb[0].mxu0
        %v1877 = vpop.f32.mrb[0].mxu0
        %1878 = vdwg.mxu0
        %v1879 = vld [vmem:[%s6] sm:$0xf]
        %v1880 = vld [vmem:[%s6 + $0x4] sm:$0xf]
        %v1881 = vld [vmem:[%s6 + $0x8] sm:$0xf]
        %v1882 = vld [vmem:[%s6 + $0xc] sm:$0xf]
        %v1883 = vld [vmem:[%s6 + $0x10] sm:$0xf]
        %v1884 = vld [vmem:[%s6 + $0x14] sm:$0xf]
        %v1885 = vld [vmem:[%s6 + $0x18] sm:$0xf]
        %v1886 = vld [vmem:[%s6 + $0x1c] sm:$0xf]
        %v1887 = vld [vmem:[%s6 + $0x20] sm:$0xf]
        %v1888 = vld [vmem:[%s6 + $0x24] sm:$0xf]
        %v1889 = vld [vmem:[%s6 + $0x28] sm:$0xf]
        %v1890 = vld [vmem:[%s6 + $0x2c] sm:$0xf]
        %v1891 = vld [vmem:[%s6 + $0x30] sm:$0xf]
        %v1892 = vld [vmem:[%s6 + $0x34] sm:$0xf]
        %v1893 = vld [vmem:[%s6 + $0x38] sm:$0xf]
        %v1894 = vld [vmem:[%s6 + $0x3c] sm:$0xf]
        %v1895 = vld [vmem:[%s6 + $0x40] sm:$0xf]
        %v1896 = vld [vmem:[%s6 + $0x44] sm:$0xf]
        %v1897 = vld [vmem:[%s6 + $0x48] sm:$0xf]
        %v1898 = vld [vmem:[%s6 + $0x4c] sm:$0xf]
        %v1899 = vld [vmem:[%s6 + $0x50] sm:$0xf]
        %v1900 = vld [vmem:[%s6 + $0x54] sm:$0xf]
        %v1901 = vld [vmem:[%s6 + $0x58] sm:$0xf]
        %v1902 = vld [vmem:[%s6 + $0x5c] sm:$0xf]
        %v1903 = vld [vmem:[%s6 + $0x60] sm:$0xf]
        %v1904 = vld [vmem:[%s6 + $0x64] sm:$0xf]
        %v1905 = vld [vmem:[%s6 + $0x68] sm:$0xf]
        %v1906 = vld [vmem:[%s6 + $0x6c] sm:$0xf]
        %v1907 = vld [vmem:[%s6 + $0x70] sm:$0xf]
        %v1908 = vld [vmem:[%s6 + $0x74] sm:$0xf]
        %v1909 = vld [vmem:[%s6 + $0x78] sm:$0xf]
        %v1910 = vld [vmem:[%s6 + $0x7c] sm:$0xf]
        %v1911 = vld [vmem:[%s6 + $0x80] sm:$0xf]
        %v1912 = vld [vmem:[%s6 + $0x84] sm:$0xf]
        %v1913 = vld [vmem:[%s6 + $0x88] sm:$0xf]
        %v1914 = vld [vmem:[%s6 + $0x8c] sm:$0xf]
        %v1915 = vld [vmem:[%s6 + $0x90] sm:$0xf]
        %v1916 = vld [vmem:[%s6 + $0x94] sm:$0xf]
        %v1917 = vld [vmem:[%s6 + $0x98] sm:$0xf]
        %v1918 = vld [vmem:[%s6 + $0x9c] sm:$0xf]
        %v1919 = vld [vmem:[%s6 + $0xa0] sm:$0xf]
        %v1920 = vld [vmem:[%s6 + $0xa4] sm:$0xf]
        %v1921 = vld [vmem:[%s6 + $0xa8] sm:$0xf]
        %v1922 = vld [vmem:[%s6 + $0xac] sm:$0xf]
        %v1923 = vld [vmem:[%s6 + $0xb0] sm:$0xf]
        %v1924 = vld [vmem:[%s6 + $0xb4] sm:$0xf]
        %v1925 = vld [vmem:[%s6 + $0xb8] sm:$0xf]
        %v1926 = vld [vmem:[%s6 + $0xbc] sm:$0xf]
        %v1927 = vld [vmem:[%s6 + $0xc0] sm:$0xf]
        %v1928 = vld [vmem:[%s6 + $0xc4] sm:$0xf]
        %v1929 = vld [vmem:[%s6 + $0xc8] sm:$0xf]
        %v1930 = vld [vmem:[%s6 + $0xcc] sm:$0xf]
        %v1931 = vld [vmem:[%s6 + $0xd0] sm:$0xf]
        %v1932 = vld [vmem:[%s6 + $0xd4] sm:$0xf]
        %v1933 = vld [vmem:[%s6 + $0xd8] sm:$0xf]
        %v1934 = vld [vmem:[%s6 + $0xdc] sm:$0xf]
        %v1935 = vld [vmem:[%s6 + $0xe0] sm:$0xf]
        %v1936 = vld [vmem:[%s6 + $0xe4] sm:$0xf]
        %v1937 = vld [vmem:[%s6 + $0xe8] sm:$0xf]
        %v1938 = vld [vmem:[%s6 + $0xec] sm:$0xf]
        %v1939 = vld [vmem:[%s6 + $0xf0] sm:$0xf]
        %v1940 = vld [vmem:[%s6 + $0xf4] sm:$0xf]
        %v1941 = vld [vmem:[%s6 + $0xf8] sm:$0xf]
        %v1942 = vld [vmem:[%s6 + $0xfc] sm:$0xf]
        %v1943 = vld [vmem:[%s6 + $0x100] sm:$0xf]
        %v1944 = vld [vmem:[%s6 + $0x104] sm:$0xf]
        %v1945 = vld [vmem:[%s6 + $0x108] sm:$0xf]
        %v1946 = vld [vmem:[%s6 + $0x10c] sm:$0xf]
        %v1947 = vld [vmem:[%s6 + $0x110] sm:$0xf]
        %v1948 = vld [vmem:[%s6 + $0x114] sm:$0xf]
        %v1949 = vld [vmem:[%s6 + $0x118] sm:$0xf]
        %v1950 = vld [vmem:[%s6 + $0x11c] sm:$0xf]
        %v1951 = vld [vmem:[%s6 + $0x120] sm:$0xf]
        %v1952 = vld [vmem:[%s6 + $0x124] sm:$0xf]
        %v1953 = vld [vmem:[%s6 + $0x128] sm:$0xf]
        %v1954 = vld [vmem:[%s6 + $0x12c] sm:$0xf]
        %v1955 = vld [vmem:[%s6 + $0x130] sm:$0xf]
        %v1956 = vld [vmem:[%s6 + $0x134] sm:$0xf]
        %v1957 = vld [vmem:[%s6 + $0x138] sm:$0xf]
        %v1958 = vld [vmem:[%s6 + $0x13c] sm:$0xf]
        %v1959 = vld [vmem:[%s6 + $0x140] sm:$0xf]
        %v1960 = vld [vmem:[%s6 + $0x144] sm:$0xf]
        %v1961 = vld [vmem:[%s6 + $0x148] sm:$0xf]
        %v1962 = vld [vmem:[%s6 + $0x14c] sm:$0xf]
        %v1963 = vld [vmem:[%s6 + $0x150] sm:$0xf]
        %v1964 = vld [vmem:[%s6 + $0x154] sm:$0xf]
        %v1965 = vld [vmem:[%s6 + $0x158] sm:$0xf]
        %v1966 = vld [vmem:[%s6 + $0x15c] sm:$0xf]
        %v1967 = vld [vmem:[%s6 + $0x160] sm:$0xf]
        %v1968 = vld [vmem:[%s6 + $0x164] sm:$0xf]
        %v1969 = vld [vmem:[%s6 + $0x168] sm:$0xf]
        %v1970 = vld [vmem:[%s6 + $0x16c] sm:$0xf]
        %v1971 = vld [vmem:[%s6 + $0x170] sm:$0xf]
        %v1972 = vld [vmem:[%s6 + $0x174] sm:$0xf]
        %v1973 = vld [vmem:[%s6 + $0x178] sm:$0xf]
        %v1974 = vld [vmem:[%s6 + $0x17c] sm:$0xf]
        %v1975 = vld [vmem:[%s6 + $0x180] sm:$0xf]
        %v1976 = vld [vmem:[%s6 + $0x184] sm:$0xf]
        %v1977 = vld [vmem:[%s6 + $0x188] sm:$0xf]
        %v1978 = vld [vmem:[%s6 + $0x18c] sm:$0xf]
        %v1979 = vld [vmem:[%s6 + $0x190] sm:$0xf]
        %v1980 = vld [vmem:[%s6 + $0x194] sm:$0xf]
        %v1981 = vld [vmem:[%s6 + $0x198] sm:$0xf]
        %v1982 = vld [vmem:[%s6 + $0x19c] sm:$0xf]
        %v1983 = vld [vmem:[%s6 + $0x1a0] sm:$0xf]
        %v1984 = vld [vmem:[%s6 + $0x1a4] sm:$0xf]
        %v1985 = vld [vmem:[%s6 + $0x1a8] sm:$0xf]
        %v1986 = vld [vmem:[%s6 + $0x1ac] sm:$0xf]
        %v1987 = vld [vmem:[%s6 + $0x1b0] sm:$0xf]
        %v1988 = vld [vmem:[%s6 + $0x1b4] sm:$0xf]
        %v1989 = vld [vmem:[%s6 + $0x1b8] sm:$0xf]
        %v1990 = vld [vmem:[%s6 + $0x1bc] sm:$0xf]
        %v1991 = vld [vmem:[%s6 + $0x1c0] sm:$0xf]
        %v1992 = vld [vmem:[%s6 + $0x1c4] sm:$0xf]
        %v1993 = vld [vmem:[%s6 + $0x1c8] sm:$0xf]
        %v1994 = vld [vmem:[%s6 + $0x1cc] sm:$0xf]
        %v1995 = vld [vmem:[%s6 + $0x1d0] sm:$0xf]
        %v1996 = vld [vmem:[%s6 + $0x1d4] sm:$0xf]
        %v1997 = vld [vmem:[%s6 + $0x1d8] sm:$0xf]
        %v1998 = vld [vmem:[%s6 + $0x1dc] sm:$0xf]
        %v1999 = vld [vmem:[%s6 + $0x1e0] sm:$0xf]
        %v2000 = vld [vmem:[%s6 + $0x1e4] sm:$0xf]
        %v2001 = vld [vmem:[%s6 + $0x1e8] sm:$0xf]
        %v2002 = vld [vmem:[%s6 + $0x1ec] sm:$0xf]
        %v2003 = vld [vmem:[%s6 + $0x1f0] sm:$0xf]
        %v2004 = vld [vmem:[%s6 + $0x1f4] sm:$0xf]
        %v2005 = vld [vmem:[%s6 + $0x1f8] sm:$0xf]
        %v2006 = vld [vmem:[%s6 + $0x1fc] sm:$0xf]
        %v2007 = vld [vmem:[%s6 + $0x200] sm:$0xf]
        %v2008 = vld [vmem:[%s6 + $0x204] sm:$0xf]
        %v2009 = vld [vmem:[%s6 + $0x208] sm:$0xf]
        %v2010 = vld [vmem:[%s6 + $0x20c] sm:$0xf]
        %v2011 = vld [vmem:[%s6 + $0x210] sm:$0xf]
        %v2012 = vld [vmem:[%s6 + $0x214] sm:$0xf]
        %v2013 = vld [vmem:[%s6 + $0x218] sm:$0xf]
        %v2014 = vld [vmem:[%s6 + $0x21c] sm:$0xf]
        %v2015 = vld [vmem:[%s6 + $0x220] sm:$0xf]
        %v2016 = vld [vmem:[%s6 + $0x224] sm:$0xf]
        %v2017 = vld [vmem:[%s6 + $0x228] sm:$0xf]
        %v2018 = vld [vmem:[%s6 + $0x22c] sm:$0xf]
        %v2019 = vld [vmem:[%s6 + $0x230] sm:$0xf]
        %v2020 = vld [vmem:[%s6 + $0x234] sm:$0xf]
        %v2021 = vld [vmem:[%s6 + $0x238] sm:$0xf]
        %v2022 = vld [vmem:[%s6 + $0x23c] sm:$0xf]
        %v2023 = vld [vmem:[%s6 + $0x240] sm:$0xf]
        %v2024 = vld [vmem:[%s6 + $0x244] sm:$0xf]
        %v2025 = vld [vmem:[%s6 + $0x248] sm:$0xf]
        %v2026 = vld [vmem:[%s6 + $0x24c] sm:$0xf]
        %v2027 = vld [vmem:[%s6 + $0x250] sm:$0xf]
        %v2028 = vld [vmem:[%s6 + $0x254] sm:$0xf]
        %v2029 = vld [vmem:[%s6 + $0x258] sm:$0xf]
        %v2030 = vld [vmem:[%s6 + $0x25c] sm:$0xf]
        %v2031 = vld [vmem:[%s6 + $0x260] sm:$0xf]
        %v2032 = vld [vmem:[%s6 + $0x264] sm:$0xf]
        %v2033 = vld [vmem:[%s6 + $0x268] sm:$0xf]
        %v2034 = vld [vmem:[%s6 + $0x26c] sm:$0xf]
        %v2035 = vld [vmem:[%s6 + $0x270] sm:$0xf]
        %v2036 = vld [vmem:[%s6 + $0x274] sm:$0xf]
        %v2037 = vld [vmem:[%s6 + $0x278] sm:$0xf]
        %v2038 = vld [vmem:[%s6 + $0x27c] sm:$0xf]
        %v2039 = vld [vmem:[%s6 + $0x280] sm:$0xf]
        %v2040 = vld [vmem:[%s6 + $0x284] sm:$0xf]
        %v2041 = vld [vmem:[%s6 + $0x288] sm:$0xf]
        %v2042 = vld [vmem:[%s6 + $0x28c] sm:$0xf]
        %v2043 = vld [vmem:[%s6 + $0x290] sm:$0xf]
        %v2044 = vld [vmem:[%s6 + $0x294] sm:$0xf]
        %v2045 = vld [vmem:[%s6 + $0x298] sm:$0xf]
        %v2046 = vld [vmem:[%s6 + $0x29c] sm:$0xf]
        %v2047 = vld [vmem:[%s6 + $0x2a0] sm:$0xf]
        %v2048 = vld [vmem:[%s6 + $0x2a4] sm:$0xf]
        %v2049 = vld [vmem:[%s6 + $0x2a8] sm:$0xf]
        %v2050 = vld [vmem:[%s6 + $0x2ac] sm:$0xf]
        %v2051 = vld [vmem:[%s6 + $0x2b0] sm:$0xf]
        %v2052 = vld [vmem:[%s6 + $0x2b4] sm:$0xf]
        %v2053 = vld [vmem:[%s6 + $0x2b8] sm:$0xf]
        %v2054 = vld [vmem:[%s6 + $0x2bc] sm:$0xf]
        %v2055 = vld [vmem:[%s6 + $0x2c0] sm:$0xf]
        %v2056 = vld [vmem:[%s6 + $0x2c4] sm:$0xf]
        %v2057 = vld [vmem:[%s6 + $0x2c8] sm:$0xf]
        %v2058 = vld [vmem:[%s6 + $0x2cc] sm:$0xf]
        %v2059 = vld [vmem:[%s6 + $0x2d0] sm:$0xf]
        %v2060 = vld [vmem:[%s6 + $0x2d4] sm:$0xf]
        %v2061 = vld [vmem:[%s6 + $0x2d8] sm:$0xf]
        %v2062 = vld [vmem:[%s6 + $0x2dc] sm:$0xf]
        %v2063 = vld [vmem:[%s6 + $0x2e0] sm:$0xf]
        %v2064 = vld [vmem:[%s6 + $0x2e4] sm:$0xf]
        %v2065 = vld [vmem:[%s6 + $0x2e8] sm:$0xf]
        %v2066 = vld [vmem:[%s6 + $0x2ec] sm:$0xf]
        %v2067 = vld [vmem:[%s6 + $0x2f0] sm:$0xf]
        %v2068 = vld [vmem:[%s6 + $0x2f4] sm:$0xf]
        %v2069 = vld [vmem:[%s6 + $0x2f8] sm:$0xf]
        %v2070 = vld [vmem:[%s6 + $0x2fc] sm:$0xf]
        %v2071 = vld [vmem:[%s6 + $0x300] sm:$0xf]
        %v2072 = vld [vmem:[%s6 + $0x304] sm:$0xf]
        %v2073 = vld [vmem:[%s6 + $0x308] sm:$0xf]
        %v2074 = vld [vmem:[%s6 + $0x30c] sm:$0xf]
        %v2075 = vld [vmem:[%s6 + $0x310] sm:$0xf]
        %v2076 = vld [vmem:[%s6 + $0x314] sm:$0xf]
        %v2077 = vld [vmem:[%s6 + $0x318] sm:$0xf]
        %v2078 = vld [vmem:[%s6 + $0x31c] sm:$0xf]
        %v2079 = vld [vmem:[%s6 + $0x320] sm:$0xf]
        %v2080 = vld [vmem:[%s6 + $0x324] sm:$0xf]
        %v2081 = vld [vmem:[%s6 + $0x328] sm:$0xf]
        %v2082 = vld [vmem:[%s6 + $0x32c] sm:$0xf]
        %v2083 = vld [vmem:[%s6 + $0x330] sm:$0xf]
        %v2084 = vld [vmem:[%s6 + $0x334] sm:$0xf]
        %v2085 = vld [vmem:[%s6 + $0x338] sm:$0xf]
        %v2086 = vld [vmem:[%s6 + $0x33c] sm:$0xf]
        %v2087 = vld [vmem:[%s6 + $0x340] sm:$0xf]
        %v2088 = vld [vmem:[%s6 + $0x344] sm:$0xf]
        %v2089 = vld [vmem:[%s6 + $0x348] sm:$0xf]
        %v2090 = vld [vmem:[%s6 + $0x34c] sm:$0xf]
        %v2091 = vld [vmem:[%s6 + $0x350] sm:$0xf]
        %v2092 = vld [vmem:[%s6 + $0x354] sm:$0xf]
        %v2093 = vld [vmem:[%s6 + $0x358] sm:$0xf]
        %v2094 = vld [vmem:[%s6 + $0x35c] sm:$0xf]
        %v2095 = vld [vmem:[%s6 + $0x360] sm:$0xf]
        %v2096 = vld [vmem:[%s6 + $0x364] sm:$0xf]
        %v2097 = vld [vmem:[%s6 + $0x368] sm:$0xf]
        %v2098 = vld [vmem:[%s6 + $0x36c] sm:$0xf]
        %v2099 = vld [vmem:[%s6 + $0x370] sm:$0xf]
        %v2100 = vld [vmem:[%s6 + $0x374] sm:$0xf]
        %v2101 = vld [vmem:[%s6 + $0x378] sm:$0xf]
        %v2102 = vld [vmem:[%s6 + $0x37c] sm:$0xf]
        %v2103 = vld [vmem:[%s6 + $0x380] sm:$0xf]
        %v2104 = vld [vmem:[%s6 + $0x384] sm:$0xf]
        %v2105 = vld [vmem:[%s6 + $0x388] sm:$0xf]
        %v2106 = vld [vmem:[%s6 + $0x38c] sm:$0xf]
        %v2107 = vld [vmem:[%s6 + $0x390] sm:$0xf]
        %v2108 = vld [vmem:[%s6 + $0x394] sm:$0xf]
        %v2109 = vld [vmem:[%s6 + $0x398] sm:$0xf]
        %v2110 = vld [vmem:[%s6 + $0x39c] sm:$0xf]
        %v2111 = vld [vmem:[%s6 + $0x3a0] sm:$0xf]
        %v2112 = vld [vmem:[%s6 + $0x3a4] sm:$0xf]
        %v2113 = vld [vmem:[%s6 + $0x3a8] sm:$0xf]
        %v2114 = vld [vmem:[%s6 + $0x3ac] sm:$0xf]
        %v2115 = vld [vmem:[%s6 + $0x3b0] sm:$0xf]
        %v2116 = vld [vmem:[%s6 + $0x3b4] sm:$0xf]
        %v2117 = vld [vmem:[%s6 + $0x3b8] sm:$0xf]
        %v2118 = vld [vmem:[%s6 + $0x3bc] sm:$0xf]
        %v2119 = vld [vmem:[%s6 + $0x3c0] sm:$0xf]
        %v2120 = vld [vmem:[%s6 + $0x3c4] sm:$0xf]
        %v2121 = vld [vmem:[%s6 + $0x3c8] sm:$0xf]
        %v2122 = vld [vmem:[%s6 + $0x3cc] sm:$0xf]
        %v2123 = vld [vmem:[%s6 + $0x3d0] sm:$0xf]
        %v2124 = vld [vmem:[%s6 + $0x3d4] sm:$0xf]
        %v2125 = vld [vmem:[%s6 + $0x3d8] sm:$0xf]
        %v2126 = vld [vmem:[%s6 + $0x3dc] sm:$0xf]
        %v2127 = vld [vmem:[%s6 + $0x3e0] sm:$0xf]
        %v2128 = vld [vmem:[%s6 + $0x3e4] sm:$0xf]
        %v2129 = vld [vmem:[%s6 + $0x3e8] sm:$0xf]
        %v2130 = vld [vmem:[%s6 + $0x3ec] sm:$0xf]
        %v2131 = vld [vmem:[%s6 + $0x3f0] sm:$0xf]
        %v2132 = vld [vmem:[%s6 + $0x3f4] sm:$0xf]
        %v2133 = vld [vmem:[%s6 + $0x3f8] sm:$0xf]
        %v2134 = vld [vmem:[%s6 + $0x3fc] sm:$0xf]
        %v2135 = vld [vmem:[%s7] sm:$0x1]
        %v2136 = vld [vmem:[%s7 + $0x1] sm:$0x1]
        %v2137 = vld [vmem:[%s7 + $0x2] sm:$0x1]
        %v2138 = vld [vmem:[%s7 + $0x3] sm:$0x1]
        %v2139 = vld [vmem:[%s7 + $0x4] sm:$0x1]
        %v2140 = vld [vmem:[%s7 + $0x5] sm:$0x1]
        %v2141 = vld [vmem:[%s7 + $0x6] sm:$0x1]
        %v2142 = vld [vmem:[%s7 + $0x7] sm:$0x1]
        %v2151 = vlaneseq
        %v2152 = vshrl.u32 %v2151, 7
        %v2153 = vsub.s32 0, %v2152
        %v2154 = vrot.slane %v2135, %v2153
        %v2155 = vlaneseq
        %v2156 = vshrl.u32 %v2155, 7
        %v2157 = vsub.s32 0, %v2156
        %v2158 = vrot.slane %v2136, %v2157
        %v2159 = vlaneseq
        %v2160 = vshrl.u32 %v2159, 7
        %v2161 = vsub.s32 0, %v2160
        %v2162 = vrot.slane %v2137, %v2161
        %v2163 = vlaneseq
        %v2164 = vshrl.u32 %v2163, 7
        %v2165 = vsub.s32 0, %v2164
        %v2166 = vrot.slane %v2138, %v2165
        %v2167 = vlaneseq
        %v2168 = vshrl.u32 %v2167, 7
        %v2169 = vsub.s32 0, %v2168
        %v2170 = vrot.slane %v2139, %v2169
        %v2171 = vlaneseq
        %v2172 = vshrl.u32 %v2171, 7
        %v2173 = vsub.s32 0, %v2172
        %v2174 = vrot.slane %v2140, %v2173
        %v2175 = vlaneseq
        %v2176 = vshrl.u32 %v2175, 7
        %v2177 = vsub.s32 0, %v2176
        %v2178 = vrot.slane %v2141, %v2177
        %v2179 = vlaneseq
        %v2180 = vshrl.u32 %v2179, 7
        %v2181 = vsub.s32 0, %v2180
        %v2182 = vrot.slane %v2142, %v2181
        %v2223 = vunpack.c.l.b16 %v1879
        %v2224 = vunpack.c.l.b16 %v1880
        %v2225 = vunpack.c.l.b16 %v1881
        %v2226 = vunpack.c.l.b16 %v1882
        %v2227 = vunpack.c.l.b16 %v1883
        %v2228 = vunpack.c.l.b16 %v1884
        %v2229 = vunpack.c.l.b16 %v1885
        %v2230 = vunpack.c.l.b16 %v1886
        %v2231 = vunpack.c.l.b16 %v1887
        %v2232 = vunpack.c.l.b16 %v1888
        %v2233 = vunpack.c.l.b16 %v1889
        %v2234 = vunpack.c.l.b16 %v1890
        %v2235 = vunpack.c.l.b16 %v1891
        %v2236 = vunpack.c.l.b16 %v1892
        %v2237 = vunpack.c.l.b16 %v1893
        %v2238 = vunpack.c.l.b16 %v1894
        %v2239 = vunpack.c.l.b16 %v1895
        %v2240 = vunpack.c.l.b16 %v1896
        %v2241 = vunpack.c.l.b16 %v1897
        %v2242 = vunpack.c.l.b16 %v1898
        %v2243 = vunpack.c.l.b16 %v1899
        %v2244 = vunpack.c.l.b16 %v1900
        %v2245 = vunpack.c.l.b16 %v1901
        %v2246 = vunpack.c.l.b16 %v1902
        %v2247 = vunpack.c.l.b16 %v1903
        %v2248 = vunpack.c.l.b16 %v1904
        %v2249 = vunpack.c.l.b16 %v1905
        %v2250 = vunpack.c.l.b16 %v1906
        %v2251 = vunpack.c.l.b16 %v1907
        %v2252 = vunpack.c.l.b16 %v1908
        %v2253 = vunpack.c.l.b16 %v1909
        %v2254 = vunpack.c.l.b16 %v1910
        %v2255 = vpack.c.b16 %v2224, %v2223
        %v2256 = vpack.c.b16 %v2226, %v2225
        %v2257 = vpack.c.b16 %v2228, %v2227
        %v2258 = vpack.c.b16 %v2230, %v2229
        %v2259 = vpack.c.b16 %v2232, %v2231
        %v2260 = vpack.c.b16 %v2234, %v2233
        %v2261 = vpack.c.b16 %v2236, %v2235
        %v2262 = vpack.c.b16 %v2238, %v2237
        %v2263 = vpack.c.b16 %v2240, %v2239
        %v2264 = vpack.c.b16 %v2242, %v2241
        %v2265 = vpack.c.b16 %v2244, %v2243
        %v2266 = vpack.c.b16 %v2246, %v2245
        %v2267 = vpack.c.b16 %v2248, %v2247
        %v2268 = vpack.c.b16 %v2250, %v2249
        %v2269 = vpack.c.b16 %v2252, %v2251
        %v2270 = vpack.c.b16 %v2254, %v2253
        %2287 = vmatprep.subr.bf16.mxu0 0
        %2288 = vmatpush1.bf16.msra.mxu0 %v2255
        %2289 = vmatprep.subr.bf16.mxu0 0
        %2290 = vmatpush1.bf16.msra.mxu0 %v2256
        %2291 = vmatprep.subr.bf16.mxu0 0
        %2292 = vmatpush1.bf16.msra.mxu0 %v2257
        %2293 = vmatprep.subr.bf16.mxu0 0
        %2294 = vmatpush1.bf16.msra.mxu0 %v2258
        %2295 = vmatprep.subr.bf16.mxu0 0
        %2296 = vmatpush1.bf16.msra.mxu0 %v2259
        %2297 = vmatprep.subr.bf16.mxu0 0
        %2298 = vmatpush1.bf16.msra.mxu0 %v2260
        %2299 = vmatprep.subr.bf16.mxu0 0
        %2300 = vmatpush1.bf16.msra.mxu0 %v2261
        %2301 = vmatprep.subr.bf16.mxu0 0
        %2302 = vmatpush1.bf16.msra.mxu0 %v2262
        %2303 = vmatprep.subr.bf16.mxu0 0
        %2304 = vmatpush1.bf16.msra.mxu0 %v2263
        %2305 = vmatprep.subr.bf16.mxu0 0
        %2306 = vmatpush1.bf16.msra.mxu0 %v2264
        %2307 = vmatprep.subr.bf16.mxu0 0
        %2308 = vmatpush1.bf16.msra.mxu0 %v2265
        %2309 = vmatprep.subr.bf16.mxu0 0
        %2310 = vmatpush1.bf16.msra.mxu0 %v2266
        %2311 = vmatprep.subr.bf16.mxu0 0
        %2312 = vmatpush1.bf16.msra.mxu0 %v2267
        %2313 = vmatprep.subr.bf16.mxu0 0
        %2314 = vmatpush1.bf16.msra.mxu0 %v2268
        %2315 = vmatprep.subr.bf16.mxu0 0
        %2316 = vmatpush1.bf16.msra.mxu0 %v2269
        %2317 = vmatprep.subr.bf16.mxu0 0
        %2318 = vmatpush1.bf16.msra.mxu0 %v2270
        %2319 = vmatprep.mubr.bf16.mxu0 %v474
        %2320 = vmatmul.mubr.bf16.gmra.mrb[0].mxu0 %v473
        %v2321 = vpop.f32.mrb[0].mxu0
        %v2322 = vadd.f32 %v2154, %v2321
        %v2323 = vpop.f32.mrb[0].mxu0
        %v2324 = vpop.f32.mrb[0].mxu0
        %v2325 = vpop.f32.mrb[0].mxu0
        %2326 = vdwg.mxu0
        %v2359 = vunpack.c.l.b16 %v1911
        %v2360 = vunpack.c.l.b16 %v1912
        %v2361 = vunpack.c.l.b16 %v1913
        %v2362 = vunpack.c.l.b16 %v1914
        %v2363 = vunpack.c.l.b16 %v1915
        %v2364 = vunpack.c.l.b16 %v1916
        %v2365 = vunpack.c.l.b16 %v1917
        %v2366 = vunpack.c.l.b16 %v1918
        %v2367 = vunpack.c.l.b16 %v1919
        %v2368 = vunpack.c.l.b16 %v1920
        %v2369 = vunpack.c.l.b16 %v1921
        %v2370 = vunpack.c.l.b16 %v1922
        %v2371 = vunpack.c.l.b16 %v1923
        %v2372 = vunpack.c.l.b16 %v1924
        %v2373 = vunpack.c.l.b16 %v1925
        %v2374 = vunpack.c.l.b16 %v1926
        %v2375 = vunpack.c.l.b16 %v1927
        %v2376 = vunpack.c.l.b16 %v1928
        %v2377 = vunpack.c.l.b16 %v1929
        %v2378 = vunpack.c.l.b16 %v1930
        %v2379 = vunpack.c.l.b16 %v1931
        %v2380 = vunpack.c.l.b16 %v1932
        %v2381 = vunpack.c.l.b16 %v1933
        %v2382 = vunpack.c.l.b16 %v1934
        %v2383 = vunpack.c.l.b16 %v1935
        %v2384 = vunpack.c.l.b16 %v1936
        %v2385 = vunpack.c.l.b16 %v1937
        %v2386 = vunpack.c.l.b16 %v1938
        %v2387 = vunpack.c.l.b16 %v1939
        %v2388 = vunpack.c.l.b16 %v1940
        %v2389 = vunpack.c.l.b16 %v1941
        %v2390 = vunpack.c.l.b16 %v1942
        %v2391 = vpack.c.b16 %v2360, %v2359
        %v2392 = vpack.c.b16 %v2362, %v2361
        %v2393 = vpack.c.b16 %v2364, %v2363
        %v2394 = vpack.c.b16 %v2366, %v2365
        %v2395 = vpack.c.b16 %v2368, %v2367
        %v2396 = vpack.c.b16 %v2370, %v2369
        %v2397 = vpack.c.b16 %v2372, %v2371
        %v2398 = vpack.c.b16 %v2374, %v2373
        %v2399 = vpack.c.b16 %v2376, %v2375
        %v2400 = vpack.c.b16 %v2378, %v2377
        %v2401 = vpack.c.b16 %v2380, %v2379
        %v2402 = vpack.c.b16 %v2382, %v2381
        %v2403 = vpack.c.b16 %v2384, %v2383
        %v2404 = vpack.c.b16 %v2386, %v2385
        %v2405 = vpack.c.b16 %v2388, %v2387
        %v2406 = vpack.c.b16 %v2390, %v2389
        %2423 = vmatprep.subr.bf16.mxu0 0
        %2424 = vmatpush1.bf16.msra.mxu0 %v2391
        %2425 = vmatprep.subr.bf16.mxu0 0
        %2426 = vmatpush1.bf16.msra.mxu0 %v2392
        %2427 = vmatprep.subr.bf16.mxu0 0
        %2428 = vmatpush1.bf16.msra.mxu0 %v2393
        %2429 = vmatprep.subr.bf16.mxu0 0
        %2430 = vmatpush1.bf16.msra.mxu0 %v2394
        %2431 = vmatprep.subr.bf16.mxu0 0
        %2432 = vmatpush1.bf16.msra.mxu0 %v2395
        %2433 = vmatprep.subr.bf16.mxu0 0
        %2434 = vmatpush1.bf16.msra.mxu0 %v2396
        %2435 = vmatprep.subr.bf16.mxu0 0
        %2436 = vmatpush1.bf16.msra.mxu0 %v2397
        %2437 = vmatprep.subr.bf16.mxu0 0
        %2438 = vmatpush1.bf16.msra.mxu0 %v2398
        %2439 = vmatprep.subr.bf16.mxu0 0
        %2440 = vmatpush1.bf16.msra.mxu0 %v2399
        %2441 = vmatprep.subr.bf16.mxu0 0
        %2442 = vmatpush1.bf16.msra.mxu0 %v2400
        %2443 = vmatprep.subr.bf16.mxu0 0
        %2444 = vmatpush1.bf16.msra.mxu0 %v2401
        %2445 = vmatprep.subr.bf16.mxu0 0
        %2446 = vmatpush1.bf16.msra.mxu0 %v2402
        %2447 = vmatprep.subr.bf16.mxu0 0
        %2448 = vmatpush1.bf16.msra.mxu0 %v2403
        %2449 = vmatprep.subr.bf16.mxu0 0
        %2450 = vmatpush1.bf16.msra.mxu0 %v2404
        %2451 = vmatprep.subr.bf16.mxu0 0
        %2452 = vmatpush1.bf16.msra.mxu0 %v2405
        %2453 = vmatprep.subr.bf16.mxu0 0
        %2454 = vmatpush1.bf16.msra.mxu0 %v2406
        %2455 = vmatprep.mubr.bf16.mxu0 %v474
        %2456 = vmatmul.mubr.bf16.gmra.mrb[0].mxu0 %v473
        %v2457 = vpop.f32.mrb[0].mxu0
        %v2458 = vadd.f32 %v2158, %v2457
        %v2459 = vpop.f32.mrb[0].mxu0
        %v2460 = vpop.f32.mrb[0].mxu0
        %v2461 = vpop.f32.mrb[0].mxu0
        %2462 = vdwg.mxu0
        %v2495 = vunpack.c.l.b16 %v1943
        %v2496 = vunpack.c.l.b16 %v1944
        %v2497 = vunpack.c.l.b16 %v1945
        %v2498 = vunpack.c.l.b16 %v1946
        %v2499 = vunpack.c.l.b16 %v1947
        %v2500 = vunpack.c.l.b16 %v1948
        %v2501 = vunpack.c.l.b16 %v1949
        %v2502 = vunpack.c.l.b16 %v1950
        %v2503 = vunpack.c.l.b16 %v1951
        %v2504 = vunpack.c.l.b16 %v1952
        %v2505 = vunpack.c.l.b16 %v1953
        %v2506 = vunpack.c.l.b16 %v1954
        %v2507 = vunpack.c.l.b16 %v1955
        %v2508 = vunpack.c.l.b16 %v1956
        %v2509 = vunpack.c.l.b16 %v1957
        %v2510 = vunpack.c.l.b16 %v1958
        %v2511 = vunpack.c.l.b16 %v1959
        %v2512 = vunpack.c.l.b16 %v1960
        %v2513 = vunpack.c.l.b16 %v1961
        %v2514 = vunpack.c.l.b16 %v1962
        %v2515 = vunpack.c.l.b16 %v1963
        %v2516 = vunpack.c.l.b16 %v1964
        %v2517 = vunpack.c.l.b16 %v1965
        %v2518 = vunpack.c.l.b16 %v1966
        %v2519 = vunpack.c.l.b16 %v1967
        %v2520 = vunpack.c.l.b16 %v1968
        %v2521 = vunpack.c.l.b16 %v1969
        %v2522 = vunpack.c.l.b16 %v1970
        %v2523 = vunpack.c.l.b16 %v1971
        %v2524 = vunpack.c.l.b16 %v1972
        %v2525 = vunpack.c.l.b16 %v1973
        %v2526 = vunpack.c.l.b16 %v1974
        %v2527 = vpack.c.b16 %v2496, %v2495
        %v2528 = vpack.c.b16 %v2498, %v2497
        %v2529 = vpack.c.b16 %v2500, %v2499
        %v2530 = vpack.c.b16 %v2502, %v2501
        %v2531 = vpack.c.b16 %v2504, %v2503
        %v2532 = vpack.c.b16 %v2506, %v2505
        %v2533 = vpack.c.b16 %v2508, %v2507
        %v2534 = vpack.c.b16 %v2510, %v2509
        %v2535 = vpack.c.b16 %v2512, %v2511
        %v2536 = vpack.c.b16 %v2514, %v2513
        %v2537 = vpack.c.b16 %v2516, %v2515
        %v2538 = vpack.c.b16 %v2518, %v2517
        %v2539 = vpack.c.b16 %v2520, %v2519
        %v2540 = vpack.c.b16 %v2522, %v2521
        %v2541 = vpack.c.b16 %v2524, %v2523
        %v2542 = vpack.c.b16 %v2526, %v2525
        %2559 = vmatprep.subr.bf16.mxu0 0
        %2560 = vmatpush1.bf16.msra.mxu0 %v2527
        %2561 = vmatprep.subr.bf16.mxu0 0
        %2562 = vmatpush1.bf16.msra.mxu0 %v2528
        %2563 = vmatprep.subr.bf16.mxu0 0
        %2564 = vmatpush1.bf16.msra.mxu0 %v2529
        %2565 = vmatprep.subr.bf16.mxu0 0
        %2566 = vmatpush1.bf16.msra.mxu0 %v2530
        %2567 = vmatprep.subr.bf16.mxu0 0
        %2568 = vmatpush1.bf16.msra.mxu0 %v2531
        %2569 = vmatprep.subr.bf16.mxu0 0
        %2570 = vmatpush1.bf16.msra.mxu0 %v2532
        %2571 = vmatprep.subr.bf16.mxu0 0
        %2572 = vmatpush1.bf16.msra.mxu0 %v2533
        %2573 = vmatprep.subr.bf16.mxu0 0
        %2574 = vmatpush1.bf16.msra.mxu0 %v2534
        %2575 = vmatprep.subr.bf16.mxu0 0
        %2576 = vmatpush1.bf16.msra.mxu0 %v2535
        %2577 = vmatprep.subr.bf16.mxu0 0
        %2578 = vmatpush1.bf16.msra.mxu0 %v2536
        %2579 = vmatprep.subr.bf16.mxu0 0
        %2580 = vmatpush1.bf16.msra.mxu0 %v2537
        %2581 = vmatprep.subr.bf16.mxu0 0
        %2582 = vmatpush1.bf16.msra.mxu0 %v2538
        %2583 = vmatprep.subr.bf16.mxu0 0
        %2584 = vmatpush1.bf16.msra.mxu0 %v2539
        %2585 = vmatprep.subr.bf16.mxu0 0
        %2586 = vmatpush1.bf16.msra.mxu0 %v2540
        %2587 = vmatprep.subr.bf16.mxu0 0
        %2588 = vmatpush1.bf16.msra.mxu0 %v2541
        %2589 = vmatprep.subr.bf16.mxu0 0
        %2590 = vmatpush1.bf16.msra.mxu0 %v2542
        %2591 = vmatprep.mubr.bf16.mxu0 %v474
        %2592 = vmatmul.mubr.bf16.gmra.mrb[0].mxu0 %v473
        %v2593 = vpop.f32.mrb[0].mxu0
        %v2594 = vadd.f32 %v2162, %v2593
        %v2595 = vpop.f32.mrb[0].mxu0
        %v2596 = vpop.f32.mrb[0].mxu0
        %v2597 = vpop.f32.mrb[0].mxu0
        %2598 = vdwg.mxu0
        %v2631 = vunpack.c.l.b16 %v1975
        %v2632 = vunpack.c.l.b16 %v1976
        %v2633 = vunpack.c.l.b16 %v1977
        %v2634 = vunpack.c.l.b16 %v1978
        %v2635 = vunpack.c.l.b16 %v1979
        %v2636 = vunpack.c.l.b16 %v1980
        %v2637 = vunpack.c.l.b16 %v1981
        %v2638 = vunpack.c.l.b16 %v1982
        %v2639 = vunpack.c.l.b16 %v1983
        %v2640 = vunpack.c.l.b16 %v1984
        %v2641 = vunpack.c.l.b16 %v1985
        %v2642 = vunpack.c.l.b16 %v1986
        %v2643 = vunpack.c.l.b16 %v1987
        %v2644 = vunpack.c.l.b16 %v1988
        %v2645 = vunpack.c.l.b16 %v1989
        %v2646 = vunpack.c.l.b16 %v1990
        %v2647 = vunpack.c.l.b16 %v1991
        %v2648 = vunpack.c.l.b16 %v1992
        %v2649 = vunpack.c.l.b16 %v1993
        %v2650 = vunpack.c.l.b16 %v1994
        %v2651 = vunpack.c.l.b16 %v1995
        %v2652 = vunpack.c.l.b16 %v1996
        %v2653 = vunpack.c.l.b16 %v1997
        %v2654 = vunpack.c.l.b16 %v1998
        %v2655 = vunpack.c.l.b16 %v1999
        %v2656 = vunpack.c.l.b16 %v2000
        %v2657 = vunpack.c.l.b16 %v2001
        %v2658 = vunpack.c.l.b16 %v2002
        %v2659 = vunpack.c.l.b16 %v2003
        %v2660 = vunpack.c.l.b16 %v2004
        %v2661 = vunpack.c.l.b16 %v2005
        %v2662 = vunpack.c.l.b16 %v2006
        %v2663 = vpack.c.b16 %v2632, %v2631
        %v2664 = vpack.c.b16 %v2634, %v2633
        %v2665 = vpack.c.b16 %v2636, %v2635
        %v2666 = vpack.c.b16 %v2638, %v2637
        %v2667 = vpack.c.b16 %v2640, %v2639
        %v2668 = vpack.c.b16 %v2642, %v2641
        %v2669 = vpack.c.b16 %v2644, %v2643
        %v2670 = vpack.c.b16 %v2646, %v2645
        %v2671 = vpack.c.b16 %v2648, %v2647
        %v2672 = vpack.c.b16 %v2650, %v2649
        %v2673 = vpack.c.b16 %v2652, %v2651
        %v2674 = vpack.c.b16 %v2654, %v2653
        %v2675 = vpack.c.b16 %v2656, %v2655
        %v2676 = vpack.c.b16 %v2658, %v2657
        %v2677 = vpack.c.b16 %v2660, %v2659
        %v2678 = vpack.c.b16 %v2662, %v2661
        %2695 = vmatprep.subr.bf16.mxu0 0
        %2696 = vmatpush1.bf16.msra.mxu0 %v2663
        %2697 = vmatprep.subr.bf16.mxu0 0
        %2698 = vmatpush1.bf16.msra.mxu0 %v2664
        %2699 = vmatprep.subr.bf16.mxu0 0
        %2700 = vmatpush1.bf16.msra.mxu0 %v2665
        %2701 = vmatprep.subr.bf16.mxu0 0
        %2702 = vmatpush1.bf16.msra.mxu0 %v2666
        %2703 = vmatprep.subr.bf16.mxu0 0
        %2704 = vmatpush1.bf16.msra.mxu0 %v2667
        %2705 = vmatprep.subr.bf16.mxu0 0
        %2706 = vmatpush1.bf16.msra.mxu0 %v2668
        %2707 = vmatprep.subr.bf16.mxu0 0
        %2708 = vmatpush1.bf16.msra.mxu0 %v2669
        %2709 = vmatprep.subr.bf16.mxu0 0
        %2710 = vmatpush1.bf16.msra.mxu0 %v2670
        %2711 = vmatprep.subr.bf16.mxu0 0
        %2712 = vmatpush1.bf16.msra.mxu0 %v2671
        %2713 = vmatprep.subr.bf16.mxu0 0
        %2714 = vmatpush1.bf16.msra.mxu0 %v2672
        %2715 = vmatprep.subr.bf16.mxu0 0
        %2716 = vmatpush1.bf16.msra.mxu0 %v2673
        %2717 = vmatprep.subr.bf16.mxu0 0
        %2718 = vmatpush1.bf16.msra.mxu0 %v2674
        %2719 = vmatprep.subr.bf16.mxu0 0
        %2720 = vmatpush1.bf16.msra.mxu0 %v2675
        %2721 = vmatprep.subr.bf16.mxu0 0
        %2722 = vmatpush1.bf16.msra.mxu0 %v2676
        %2723 = vmatprep.subr.bf16.mxu0 0
        %2724 = vmatpush1.bf16.msra.mxu0 %v2677
        %2725 = vmatprep.subr.bf16.mxu0 0
        %2726 = vmatpush1.bf16.msra.mxu0 %v2678
        %2727 = vmatprep.mubr.bf16.mxu0 %v474
        %2728 = vmatmul.mubr.bf16.gmra.mrb[0].mxu0 %v473
        %v2729 = vpop.f32.mrb[0].mxu0
        %v2730 = vadd.f32 %v2166, %v2729
        %v2731 = vpop.f32.mrb[0].mxu0
        %v2732 = vpop.f32.mrb[0].mxu0
        %v2733 = vpop.f32.mrb[0].mxu0
        %2734 = vdwg.mxu0
        %v2767 = vunpack.c.l.b16 %v2007
        %v2768 = vunpack.c.l.b16 %v2008
        %v2769 = vunpack.c.l.b16 %v2009
        %v2770 = vunpack.c.l.b16 %v2010
        %v2771 = vunpack.c.l.b16 %v2011
        %v2772 = vunpack.c.l.b16 %v2012
        %v2773 = vunpack.c.l.b16 %v2013
        %v2774 = vunpack.c.l.b16 %v2014
        %v2775 = vunpack.c.l.b16 %v2015
        %v2776 = vunpack.c.l.b16 %v2016
        %v2777 = vunpack.c.l.b16 %v2017
        %v2778 = vunpack.c.l.b16 %v2018
        %v2779 = vunpack.c.l.b16 %v2019
        %v2780 = vunpack.c.l.b16 %v2020
        %v2781 = vunpack.c.l.b16 %v2021
        %v2782 = vunpack.c.l.b16 %v2022
        %v2783 = vunpack.c.l.b16 %v2023
        %v2784 = vunpack.c.l.b16 %v2024
        %v2785 = vunpack.c.l.b16 %v2025
        %v2786 = vunpack.c.l.b16 %v2026
        %v2787 = vunpack.c.l.b16 %v2027
        %v2788 = vunpack.c.l.b16 %v2028
        %v2789 = vunpack.c.l.b16 %v2029
        %v2790 = vunpack.c.l.b16 %v2030
        %v2791 = vunpack.c.l.b16 %v2031
        %v2792 = vunpack.c.l.b16 %v2032
        %v2793 = vunpack.c.l.b16 %v2033
        %v2794 = vunpack.c.l.b16 %v2034
        %v2795 = vunpack.c.l.b16 %v2035
        %v2796 = vunpack.c.l.b16 %v2036
        %v2797 = vunpack.c.l.b16 %v2037
        %v2798 = vunpack.c.l.b16 %v2038
        %v2799 = vpack.c.b16 %v2768, %v2767
        %v2800 = vpack.c.b16 %v2770, %v2769
        %v2801 = vpack.c.b16 %v2772, %v2771
        %v2802 = vpack.c.b16 %v2774, %v2773
        %v2803 = vpack.c.b16 %v2776, %v2775
        %v2804 = vpack.c.b16 %v2778, %v2777
        %v2805 = vpack.c.b16 %v2780, %v2779
        %v2806 = vpack.c.b16 %v2782, %v2781
        %v2807 = vpack.c.b16 %v2784, %v2783
        %v2808 = vpack.c.b16 %v2786, %v2785
        %v2809 = vpack.c.b16 %v2788, %v2787
        %v2810 = vpack.c.b16 %v2790, %v2789
        %v2811 = vpack.c.b16 %v2792, %v2791
        %v2812 = vpack.c.b16 %v2794, %v2793
        %v2813 = vpack.c.b16 %v2796, %v2795
        %v2814 = vpack.c.b16 %v2798, %v2797
        %2831 = vmatprep.subr.bf16.mxu0 0
        %2832 = vmatpush1.bf16.msra.mxu0 %v2799
        %2833 = vmatprep.subr.bf16.mxu0 0
        %2834 = vmatpush1.bf16.msra.mxu0 %v2800
        %2835 = vmatprep.subr.bf16.mxu0 0
        %2836 = vmatpush1.bf16.msra.mxu0 %v2801
        %2837 = vmatprep.subr.bf16.mxu0 0
        %2838 = vmatpush1.bf16.msra.mxu0 %v2802
        %2839 = vmatprep.subr.bf16.mxu0 0
        %2840 = vmatpush1.bf16.msra.mxu0 %v2803
        %2841 = vmatprep.subr.bf16.mxu0 0
        %2842 = vmatpush1.bf16.msra.mxu0 %v2804
        %2843 = vmatprep.subr.bf16.mxu0 0
        %2844 = vmatpush1.bf16.msra.mxu0 %v2805
        %2845 = vmatprep.subr.bf16.mxu0 0
        %2846 = vmatpush1.bf16.msra.mxu0 %v2806
        %2847 = vmatprep.subr.bf16.mxu0 0
        %2848 = vmatpush1.bf16.msra.mxu0 %v2807
        %2849 = vmatprep.subr.bf16.mxu0 0
        %2850 = vmatpush1.bf16.msra.mxu0 %v2808
        %2851 = vmatprep.subr.bf16.mxu0 0
        %2852 = vmatpush1.bf16.msra.mxu0 %v2809
        %2853 = vmatprep.subr.bf16.mxu0 0
        %2854 = vmatpush1.bf16.msra.mxu0 %v2810
        %2855 = vmatprep.subr.bf16.mxu0 0
        %2856 = vmatpush1.bf16.msra.mxu0 %v2811
        %2857 = vmatprep.subr.bf16.mxu0 0
        %2858 = vmatpush1.bf16.msra.mxu0 %v2812
        %2859 = vmatprep.subr.bf16.mxu0 0
        %2860 = vmatpush1.bf16.msra.mxu0 %v2813
        %2861 = vmatprep.subr.bf16.mxu0 0
        %2862 = vmatpush1.bf16.msra.mxu0 %v2814
        %2863 = vmatprep.mubr.bf16.mxu0 %v474
        %2864 = vmatmul.mubr.bf16.gmra.mrb[0].mxu0 %v473
        %v2865 = vpop.f32.mrb[0].mxu0
        %v2866 = vadd.f32 %v2170, %v2865
        %v2867 = vpop.f32.mrb[0].mxu0
        %v2868 = vpop.f32.mrb[0].mxu0
        %v2869 = vpop.f32.mrb[0].mxu0
        %2870 = vdwg.mxu0
        %v2903 = vunpack.c.l.b16 %v2039
        %v2904 = vunpack.c.l.b16 %v2040
        %v2905 = vunpack.c.l.b16 %v2041
        %v2906 = vunpack.c.l.b16 %v2042
        %v2907 = vunpack.c.l.b16 %v2043
        %v2908 = vunpack.c.l.b16 %v2044
        %v2909 = vunpack.c.l.b16 %v2045
        %v2910 = vunpack.c.l.b16 %v2046
        %v2911 = vunpack.c.l.b16 %v2047
        %v2912 = vunpack.c.l.b16 %v2048
        %v2913 = vunpack.c.l.b16 %v2049
        %v2914 = vunpack.c.l.b16 %v2050
        %v2915 = vunpack.c.l.b16 %v2051
        %v2916 = vunpack.c.l.b16 %v2052
        %v2917 = vunpack.c.l.b16 %v2053
        %v2918 = vunpack.c.l.b16 %v2054
        %v2919 = vunpack.c.l.b16 %v2055
        %v2920 = vunpack.c.l.b16 %v2056
        %v2921 = vunpack.c.l.b16 %v2057
        %v2922 = vunpack.c.l.b16 %v2058
        %v2923 = vunpack.c.l.b16 %v2059
        %v2924 = vunpack.c.l.b16 %v2060
        %v2925 = vunpack.c.l.b16 %v2061
        %v2926 = vunpack.c.l.b16 %v2062
        %v2927 = vunpack.c.l.b16 %v2063
        %v2928 = vunpack.c.l.b16 %v2064
        %v2929 = vunpack.c.l.b16 %v2065
        %v2930 = vunpack.c.l.b16 %v2066
        %v2931 = vunpack.c.l.b16 %v2067
        %v2932 = vunpack.c.l.b16 %v2068
        %v2933 = vunpack.c.l.b16 %v2069
        %v2934 = vunpack.c.l.b16 %v2070
        %v2935 = vpack.c.b16 %v2904, %v2903
        %v2936 = vpack.c.b16 %v2906, %v2905
        %v2937 = vpack.c.b16 %v2908, %v2907
        %v2938 = vpack.c.b16 %v2910, %v2909
        %v2939 = vpack.c.b16 %v2912, %v2911
        %v2940 = vpack.c.b16 %v2914, %v2913
        %v2941 = vpack.c.b16 %v2916, %v2915
        %v2942 = vpack.c.b16 %v2918, %v2917
        %v2943 = vpack.c.b16 %v2920, %v2919
        %v2944 = vpack.c.b16 %v2922, %v2921
        %v2945 = vpack.c.b16 %v2924, %v2923
        %v2946 = vpack.c.b16 %v2926, %v2925
        %v2947 = vpack.c.b16 %v2928, %v2927
        %v2948 = vpack.c.b16 %v2930, %v2929
        %v2949 = vpack.c.b16 %v2932, %v2931
        %v2950 = vpack.c.b16 %v2934, %v2933
        %2967 = vmatprep.subr.bf16.mxu0 0
        %2968 = vmatpush1.bf16.msra.mxu0 %v2935
        %2969 = vmatprep.subr.bf16.mxu0 0
        %2970 = vmatpush1.bf16.msra.mxu0 %v2936
        %2971 = vmatprep.subr.bf16.mxu0 0
        %2972 = vmatpush1.bf16.msra.mxu0 %v2937
        %2973 = vmatprep.subr.bf16.mxu0 0
        %2974 = vmatpush1.bf16.msra.mxu0 %v2938
        %2975 = vmatprep.subr.bf16.mxu0 0
        %2976 = vmatpush1.bf16.msra.mxu0 %v2939
        %2977 = vmatprep.subr.bf16.mxu0 0
        %2978 = vmatpush1.bf16.msra.mxu0 %v2940
        %2979 = vmatprep.subr.bf16.mxu0 0
        %2980 = vmatpush1.bf16.msra.mxu0 %v2941
        %2981 = vmatprep.subr.bf16.mxu0 0
        %2982 = vmatpush1.bf16.msra.mxu0 %v2942
        %2983 = vmatprep.subr.bf16.mxu0 0
        %2984 = vmatpush1.bf16.msra.mxu0 %v2943
        %2985 = vmatprep.subr.bf16.mxu0 0
        %2986 = vmatpush1.bf16.msra.mxu0 %v2944
        %2987 = vmatprep.subr.bf16.mxu0 0
        %2988 = vmatpush1.bf16.msra.mxu0 %v2945
        %2989 = vmatprep.subr.bf16.mxu0 0
        %2990 = vmatpush1.bf16.msra.mxu0 %v2946
        %2991 = vmatprep.subr.bf16.mxu0 0
        %2992 = vmatpush1.bf16.msra.mxu0 %v2947
        %2993 = vmatprep.subr.bf16.mxu0 0
        %2994 = vmatpush1.bf16.msra.mxu0 %v2948
        %2995 = vmatprep.subr.bf16.mxu0 0
        %2996 = vmatpush1.bf16.msra.mxu0 %v2949
        %2997 = vmatprep.subr.bf16.mxu0 0
        %2998 = vmatpush1.bf16.msra.mxu0 %v2950
        %2999 = vmatprep.mubr.bf16.mxu0 %v474
        %3000 = vmatmul.mubr.bf16.gmra.mrb[0].mxu0 %v473
        %v3001 = vpop.f32.mrb[0].mxu0
        %v3002 = vadd.f32 %v2174, %v3001
        %v3003 = vpop.f32.mrb[0].mxu0
        %v3004 = vpop.f32.mrb[0].mxu0
        %v3005 = vpop.f32.mrb[0].mxu0
        %3006 = vdwg.mxu0
        %v3039 = vunpack.c.l.b16 %v2071
        %v3040 = vunpack.c.l.b16 %v2072
        %v3041 = vunpack.c.l.b16 %v2073
        %v3042 = vunpack.c.l.b16 %v2074
        %v3043 = vunpack.c.l.b16 %v2075
        %v3044 = vunpack.c.l.b16 %v2076
        %v3045 = vunpack.c.l.b16 %v2077
        %v3046 = vunpack.c.l.b16 %v2078
        %v3047 = vunpack.c.l.b16 %v2079
        %v3048 = vunpack.c.l.b16 %v2080
        %v3049 = vunpack.c.l.b16 %v2081
        %v3050 = vunpack.c.l.b16 %v2082
        %v3051 = vunpack.c.l.b16 %v2083
        %v3052 = vunpack.c.l.b16 %v2084
        %v3053 = vunpack.c.l.b16 %v2085
        %v3054 = vunpack.c.l.b16 %v2086
        %v3055 = vunpack.c.l.b16 %v2087
        %v3056 = vunpack.c.l.b16 %v2088
        %v3057 = vunpack.c.l.b16 %v2089
        %v3058 = vunpack.c.l.b16 %v2090
        %v3059 = vunpack.c.l.b16 %v2091
        %v3060 = vunpack.c.l.b16 %v2092
        %v3061 = vunpack.c.l.b16 %v2093
        %v3062 = vunpack.c.l.b16 %v2094
        %v3063 = vunpack.c.l.b16 %v2095
        %v3064 = vunpack.c.l.b16 %v2096
        %v3065 = vunpack.c.l.b16 %v2097
        %v3066 = vunpack.c.l.b16 %v2098
        %v3067 = vunpack.c.l.b16 %v2099
        %v3068 = vunpack.c.l.b16 %v2100
        %v3069 = vunpack.c.l.b16 %v2101
        %v3070 = vunpack.c.l.b16 %v2102
        %v3071 = vpack.c.b16 %v3040, %v3039
        %v3072 = vpack.c.b16 %v3042, %v3041
        %v3073 = vpack.c.b16 %v3044, %v3043
        %v3074 = vpack.c.b16 %v3046, %v3045
        %v3075 = vpack.c.b16 %v3048, %v3047
        %v3076 = vpack.c.b16 %v3050, %v3049
        %v3077 = vpack.c.b16 %v3052, %v3051
        %v3078 = vpack.c.b16 %v3054, %v3053
        %v3079 = vpack.c.b16 %v3056, %v3055
        %v3080 = vpack.c.b16 %v3058, %v3057
        %v3081 = vpack.c.b16 %v3060, %v3059
        %v3082 = vpack.c.b16 %v3062, %v3061
        %v3083 = vpack.c.b16 %v3064, %v3063
        %v3084 = vpack.c.b16 %v3066, %v3065
        %v3085 = vpack.c.b16 %v3068, %v3067
        %v3086 = vpack.c.b16 %v3070, %v3069
        %3103 = vmatprep.subr.bf16.mxu0 0
        %3104 = vmatpush1.bf16.msra.mxu0 %v3071
        %3105 = vmatprep.subr.bf16.mxu0 0
        %3106 = vmatpush1.bf16.msra.mxu0 %v3072
        %3107 = vmatprep.subr.bf16.mxu0 0
        %3108 = vmatpush1.bf16.msra.mxu0 %v3073
        %3109 = vmatprep.subr.bf16.mxu0 0
        %3110 = vmatpush1.bf16.msra.mxu0 %v3074
        %3111 = vmatprep.subr.bf16.mxu0 0
        %3112 = vmatpush1.bf16.msra.mxu0 %v3075
        %3113 = vmatprep.subr.bf16.mxu0 0
        %3114 = vmatpush1.bf16.msra.mxu0 %v3076
        %3115 = vmatprep.subr.bf16.mxu0 0
        %3116 = vmatpush1.bf16.msra.mxu0 %v3077
        %3117 = vmatprep.subr.bf16.mxu0 0
        %3118 = vmatpush1.bf16.msra.mxu0 %v3078
        %3119 = vmatprep.subr.bf16.mxu0 0
        %3120 = vmatpush1.bf16.msra.mxu0 %v3079
        %3121 = vmatprep.subr.bf16.mxu0 0
        %3122 = vmatpush1.bf16.msra.mxu0 %v3080
        %3123 = vmatprep.subr.bf16.mxu0 0
        %3124 = vmatpush1.bf16.msra.mxu0 %v3081
        %3125 = vmatprep.subr.bf16.mxu0 0
        %3126 = vmatpush1.bf16.msra.mxu0 %v3082
        %3127 = vmatprep.subr.bf16.mxu0 0
        %3128 = vmatpush1.bf16.msra.mxu0 %v3083
        %3129 = vmatprep.subr.bf16.mxu0 0
        %3130 = vmatpush1.bf16.msra.mxu0 %v3084
        %3131 = vmatprep.subr.bf16.mxu0 0
        %3132 = vmatpush1.bf16.msra.mxu0 %v3085
        %3133 = vmatprep.subr.bf16.mxu0 0
        %3134 = vmatpush1.bf16.msra.mxu0 %v3086
        %3135 = vmatprep.mubr.bf16.mxu0 %v474
        %3136 = vmatmul.mubr.bf16.gmra.mrb[0].mxu0 %v473
        %v3137 = vpop.f32.mrb[0].mxu0
        %v3138 = vadd.f32 %v2178, %v3137
        %v3139 = vpop.f32.mrb[0].mxu0
        %v3140 = vpop.f32.mrb[0].mxu0
        %v3141 = vpop.f32.mrb[0].mxu0
        %3142 = vdwg.mxu0
        %v3175 = vunpack.c.l.b16 %v2103
        %v3176 = vunpack.c.l.b16 %v2104
        %v3177 = vunpack.c.l.b16 %v2105
        %v3178 = vunpack.c.l.b16 %v2106
        %v3179 = vunpack.c.l.b16 %v2107
        %v3180 = vunpack.c.l.b16 %v2108
        %v3181 = vunpack.c.l.b16 %v2109
        %v3182 = vunpack.c.l.b16 %v2110
        %v3183 = vunpack.c.l.b16 %v2111
        %v3184 = vunpack.c.l.b16 %v2112
        %v3185 = vunpack.c.l.b16 %v2113
        %v3186 = vunpack.c.l.b16 %v2114
        %v3187 = vunpack.c.l.b16 %v2115
        %v3188 = vunpack.c.l.b16 %v2116
        %v3189 = vunpack.c.l.b16 %v2117
        %v3190 = vunpack.c.l.b16 %v2118
        %v3191 = vunpack.c.l.b16 %v2119
        %v3192 = vunpack.c.l.b16 %v2120
        %v3193 = vunpack.c.l.b16 %v2121
        %v3194 = vunpack.c.l.b16 %v2122
        %v3195 = vunpack.c.l.b16 %v2123
        %v3196 = vunpack.c.l.b16 %v2124
        %v3197 = vunpack.c.l.b16 %v2125
        %v3198 = vunpack.c.l.b16 %v2126
        %v3199 = vunpack.c.l.b16 %v2127
        %v3200 = vunpack.c.l.b16 %v2128
        %v3201 = vunpack.c.l.b16 %v2129
        %v3202 = vunpack.c.l.b16 %v2130
        %v3203 = vunpack.c.l.b16 %v2131
        %v3204 = vunpack.c.l.b16 %v2132
        %v3205 = vunpack.c.l.b16 %v2133
        %v3206 = vunpack.c.l.b16 %v2134
        %v3207 = vpack.c.b16 %v3176, %v3175
        %v3208 = vpack.c.b16 %v3178, %v3177
        %v3209 = vpack.c.b16 %v3180, %v3179
        %v3210 = vpack.c.b16 %v3182, %v3181
        %v3211 = vpack.c.b16 %v3184, %v3183
        %v3212 = vpack.c.b16 %v3186, %v3185
        %v3213 = vpack.c.b16 %v3188, %v3187
        %v3214 = vpack.c.b16 %v3190, %v3189
        %v3215 = vpack.c.b16 %v3192, %v3191
        %v3216 = vpack.c.b16 %v3194, %v3193
        %v3217 = vpack.c.b16 %v3196, %v3195
        %v3218 = vpack.c.b16 %v3198, %v3197
        %v3219 = vpack.c.b16 %v3200, %v3199
        %v3220 = vpack.c.b16 %v3202, %v3201
        %v3221 = vpack.c.b16 %v3204, %v3203
        %v3222 = vpack.c.b16 %v3206, %v3205
        %3239 = vmatprep.subr.bf16.mxu0 0
        %3240 = vmatpush1.bf16.msra.mxu0 %v3207
        %3241 = vmatprep.subr.bf16.mxu0 0
        %3242 = vmatpush1.bf16.msra.mxu0 %v3208
        %3243 = vmatprep.subr.bf16.mxu0 0
        %3244 = vmatpush1.bf16.msra.mxu0 %v3209
        %3245 = vmatprep.subr.bf16.mxu0 0
        %3246 = vmatpush1.bf16.msra.mxu0 %v3210
        %3247 = vmatprep.subr.bf16.mxu0 0
        %3248 = vmatpush1.bf16.msra.mxu0 %v3211
        %3249 = vmatprep.subr.bf16.mxu0 0
        %3250 = vmatpush1.bf16.msra.mxu0 %v3212
        %3251 = vmatprep.subr.bf16.mxu0 0
        %3252 = vmatpush1.bf16.msra.mxu0 %v3213
        %3253 = vmatprep.subr.bf16.mxu0 0
        %3254 = vmatpush1.bf16.msra.mxu0 %v3214
        %3255 = vmatprep.subr.bf16.mxu0 0
        %3256 = vmatpush1.bf16.msra.mxu0 %v3215
        %3257 = vmatprep.subr.bf16.mxu0 0
        %3258 = vmatpush1.bf16.msra.mxu0 %v3216
        %3259 = vmatprep.subr.bf16.mxu0 0
        %3260 = vmatpush1.bf16.msra.mxu0 %v3217
        %3261 = vmatprep.subr.bf16.mxu0 0
        %3262 = vmatpush1.bf16.msra.mxu0 %v3218
        %3263 = vmatprep.subr.bf16.mxu0 0
        %3264 = vmatpush1.bf16.msra.mxu0 %v3219
        %3265 = vmatprep.subr.bf16.mxu0 0
        %3266 = vmatpush1.bf16.msra.mxu0 %v3220
        %3267 = vmatprep.subr.bf16.mxu0 0
        %3268 = vmatpush1.bf16.msra.mxu0 %v3221
        %3269 = vmatprep.subr.bf16.mxu0 0
        %3270 = vmatpush1.bf16.msra.mxu0 %v3222
        %3271 = vmatprep.mubr.bf16.mxu0 %v474
        %3272 = vmatmul.mubr.bf16.gmra.mrb[0].mxu0 %v473
        %v3273 = vpop.f32.mrb[0].mxu0
        %v3274 = vadd.f32 %v2182, %v3273
        %v3275 = vpop.f32.mrb[0].mxu0
        %v3276 = vpop.f32.mrb[0].mxu0
        %v3277 = vpop.f32.mrb[0].mxu0
        %3278 = vdwg.mxu0
        %v3279 = vld [vmem:[%s8] sm:$0xf]
        %v3280 = vld [vmem:[%s8 + $0x4] sm:$0xf]
        %v3281 = vld [vmem:[%s8 + $0x8] sm:$0xf]
        %v3282 = vld [vmem:[%s8 + $0xc] sm:$0xf]
        %v3283 = vld [vmem:[%s8 + $0x10] sm:$0xf]
        %v3284 = vld [vmem:[%s8 + $0x14] sm:$0xf]
        %v3285 = vld [vmem:[%s8 + $0x18] sm:$0xf]
        %v3286 = vld [vmem:[%s8 + $0x1c] sm:$0xf]
        %v3287 = vld [vmem:[%s8 + $0x20] sm:$0xf]
        %v3288 = vld [vmem:[%s8 + $0x24] sm:$0xf]
        %v3289 = vld [vmem:[%s8 + $0x28] sm:$0xf]
        %v3290 = vld [vmem:[%s8 + $0x2c] sm:$0xf]
        %v3291 = vld [vmem:[%s8 + $0x30] sm:$0xf]
        %v3292 = vld [vmem:[%s8 + $0x34] sm:$0xf]
        %v3293 = vld [vmem:[%s8 + $0x38] sm:$0xf]
        %v3294 = vld [vmem:[%s8 + $0x3c] sm:$0xf]
        %v3295 = vld [vmem:[%s8 + $0x40] sm:$0xf]
        %v3296 = vld [vmem:[%s8 + $0x44] sm:$0xf]
        %v3297 = vld [vmem:[%s8 + $0x48] sm:$0xf]
        %v3298 = vld [vmem:[%s8 + $0x4c] sm:$0xf]
        %v3299 = vld [vmem:[%s8 + $0x50] sm:$0xf]
        %v3300 = vld [vmem:[%s8 + $0x54] sm:$0xf]
        %v3301 = vld [vmem:[%s8 + $0x58] sm:$0xf]
        %v3302 = vld [vmem:[%s8 + $0x5c] sm:$0xf]
        %v3303 = vld [vmem:[%s8 + $0x60] sm:$0xf]
        %v3304 = vld [vmem:[%s8 + $0x64] sm:$0xf]
        %v3305 = vld [vmem:[%s8 + $0x68] sm:$0xf]
        %v3306 = vld [vmem:[%s8 + $0x6c] sm:$0xf]
        %v3307 = vld [vmem:[%s8 + $0x70] sm:$0xf]
        %v3308 = vld [vmem:[%s8 + $0x74] sm:$0xf]
        %v3309 = vld [vmem:[%s8 + $0x78] sm:$0xf]
        %v3310 = vld [vmem:[%s8 + $0x7c] sm:$0xf]
        %v3311 = vld [vmem:[%s8 + $0x80] sm:$0xf]
        %v3312 = vld [vmem:[%s8 + $0x84] sm:$0xf]
        %v3313 = vld [vmem:[%s8 + $0x88] sm:$0xf]
        %v3314 = vld [vmem:[%s8 + $0x8c] sm:$0xf]
        %v3315 = vld [vmem:[%s8 + $0x90] sm:$0xf]
        %v3316 = vld [vmem:[%s8 + $0x94] sm:$0xf]
        %v3317 = vld [vmem:[%s8 + $0x98] sm:$0xf]
        %v3318 = vld [vmem:[%s8 + $0x9c] sm:$0xf]
        %v3319 = vld [vmem:[%s8 + $0xa0] sm:$0xf]
        %v3320 = vld [vmem:[%s8 + $0xa4] sm:$0xf]
        %v3321 = vld [vmem:[%s8 + $0xa8] sm:$0xf]
        %v3322 = vld [vmem:[%s8 + $0xac] sm:$0xf]
        %v3323 = vld [vmem:[%s8 + $0xb0] sm:$0xf]
        %v3324 = vld [vmem:[%s8 + $0xb4] sm:$0xf]
        %v3325 = vld [vmem:[%s8 + $0xb8] sm:$0xf]
        %v3326 = vld [vmem:[%s8 + $0xbc] sm:$0xf]
        %v3327 = vld [vmem:[%s8 + $0xc0] sm:$0xf]
        %v3328 = vld [vmem:[%s8 + $0xc4] sm:$0xf]
        %v3329 = vld [vmem:[%s8 + $0xc8] sm:$0xf]
        %v3330 = vld [vmem:[%s8 + $0xcc] sm:$0xf]
        %v3331 = vld [vmem:[%s8 + $0xd0] sm:$0xf]
        %v3332 = vld [vmem:[%s8 + $0xd4] sm:$0xf]
        %v3333 = vld [vmem:[%s8 + $0xd8] sm:$0xf]
        %v3334 = vld [vmem:[%s8 + $0xdc] sm:$0xf]
        %v3335 = vld [vmem:[%s8 + $0xe0] sm:$0xf]
        %v3336 = vld [vmem:[%s8 + $0xe4] sm:$0xf]
        %v3337 = vld [vmem:[%s8 + $0xe8] sm:$0xf]
        %v3338 = vld [vmem:[%s8 + $0xec] sm:$0xf]
        %v3339 = vld [vmem:[%s8 + $0xf0] sm:$0xf]
        %v3340 = vld [vmem:[%s8 + $0xf4] sm:$0xf]
        %v3341 = vld [vmem:[%s8 + $0xf8] sm:$0xf]
        %v3342 = vld [vmem:[%s8 + $0xfc] sm:$0xf]
        %v3343 = vld [vmem:[%s8 + $0x100] sm:$0xf]
        %v3344 = vld [vmem:[%s8 + $0x104] sm:$0xf]
        %v3345 = vld [vmem:[%s8 + $0x108] sm:$0xf]
        %v3346 = vld [vmem:[%s8 + $0x10c] sm:$0xf]
        %v3347 = vld [vmem:[%s8 + $0x110] sm:$0xf]
        %v3348 = vld [vmem:[%s8 + $0x114] sm:$0xf]
        %v3349 = vld [vmem:[%s8 + $0x118] sm:$0xf]
        %v3350 = vld [vmem:[%s8 + $0x11c] sm:$0xf]
        %v3351 = vld [vmem:[%s8 + $0x120] sm:$0xf]
        %v3352 = vld [vmem:[%s8 + $0x124] sm:$0xf]
        %v3353 = vld [vmem:[%s8 + $0x128] sm:$0xf]
        %v3354 = vld [vmem:[%s8 + $0x12c] sm:$0xf]
        %v3355 = vld [vmem:[%s8 + $0x130] sm:$0xf]
        %v3356 = vld [vmem:[%s8 + $0x134] sm:$0xf]
        %v3357 = vld [vmem:[%s8 + $0x138] sm:$0xf]
        %v3358 = vld [vmem:[%s8 + $0x13c] sm:$0xf]
        %v3359 = vld [vmem:[%s8 + $0x140] sm:$0xf]
        %v3360 = vld [vmem:[%s8 + $0x144] sm:$0xf]
        %v3361 = vld [vmem:[%s8 + $0x148] sm:$0xf]
        %v3362 = vld [vmem:[%s8 + $0x14c] sm:$0xf]
        %v3363 = vld [vmem:[%s8 + $0x150] sm:$0xf]
        %v3364 = vld [vmem:[%s8 + $0x154] sm:$0xf]
        %v3365 = vld [vmem:[%s8 + $0x158] sm:$0xf]
        %v3366 = vld [vmem:[%s8 + $0x15c] sm:$0xf]
        %v3367 = vld [vmem:[%s8 + $0x160] sm:$0xf]
        %v3368 = vld [vmem:[%s8 + $0x164] sm:$0xf]
        %v3369 = vld [vmem:[%s8 + $0x168] sm:$0xf]
        %v3370 = vld [vmem:[%s8 + $0x16c] sm:$0xf]
        %v3371 = vld [vmem:[%s8 + $0x170] sm:$0xf]
        %v3372 = vld [vmem:[%s8 + $0x174] sm:$0xf]
        %v3373 = vld [vmem:[%s8 + $0x178] sm:$0xf]
        %v3374 = vld [vmem:[%s8 + $0x17c] sm:$0xf]
        %v3375 = vld [vmem:[%s8 + $0x180] sm:$0xf]
        %v3376 = vld [vmem:[%s8 + $0x184] sm:$0xf]
        %v3377 = vld [vmem:[%s8 + $0x188] sm:$0xf]
        %v3378 = vld [vmem:[%s8 + $0x18c] sm:$0xf]
        %v3379 = vld [vmem:[%s8 + $0x190] sm:$0xf]
        %v3380 = vld [vmem:[%s8 + $0x194] sm:$0xf]
        %v3381 = vld [vmem:[%s8 + $0x198] sm:$0xf]
        %v3382 = vld [vmem:[%s8 + $0x19c] sm:$0xf]
        %v3383 = vld [vmem:[%s8 + $0x1a0] sm:$0xf]
        %v3384 = vld [vmem:[%s8 + $0x1a4] sm:$0xf]
        %v3385 = vld [vmem:[%s8 + $0x1a8] sm:$0xf]
        %v3386 = vld [vmem:[%s8 + $0x1ac] sm:$0xf]
        %v3387 = vld [vmem:[%s8 + $0x1b0] sm:$0xf]
        %v3388 = vld [vmem:[%s8 + $0x1b4] sm:$0xf]
        %v3389 = vld [vmem:[%s8 + $0x1b8] sm:$0xf]
        %v3390 = vld [vmem:[%s8 + $0x1bc] sm:$0xf]
        %v3391 = vld [vmem:[%s8 + $0x1c0] sm:$0xf]
        %v3392 = vld [vmem:[%s8 + $0x1c4] sm:$0xf]
        %v3393 = vld [vmem:[%s8 + $0x1c8] sm:$0xf]
        %v3394 = vld [vmem:[%s8 + $0x1cc] sm:$0xf]
        %v3395 = vld [vmem:[%s8 + $0x1d0] sm:$0xf]
        %v3396 = vld [vmem:[%s8 + $0x1d4] sm:$0xf]
        %v3397 = vld [vmem:[%s8 + $0x1d8] sm:$0xf]
        %v3398 = vld [vmem:[%s8 + $0x1dc] sm:$0xf]
        %v3399 = vld [vmem:[%s8 + $0x1e0] sm:$0xf]
        %v3400 = vld [vmem:[%s8 + $0x1e4] sm:$0xf]
        %v3401 = vld [vmem:[%s8 + $0x1e8] sm:$0xf]
        %v3402 = vld [vmem:[%s8 + $0x1ec] sm:$0xf]
        %v3403 = vld [vmem:[%s8 + $0x1f0] sm:$0xf]
        %v3404 = vld [vmem:[%s8 + $0x1f4] sm:$0xf]
        %v3405 = vld [vmem:[%s8 + $0x1f8] sm:$0xf]
        %v3406 = vld [vmem:[%s8 + $0x1fc] sm:$0xf]
        %v3407 = vld [vmem:[%s8 + $0x200] sm:$0xf]
        %v3408 = vld [vmem:[%s8 + $0x204] sm:$0xf]
        %v3409 = vld [vmem:[%s8 + $0x208] sm:$0xf]
        %v3410 = vld [vmem:[%s8 + $0x20c] sm:$0xf]
        %v3411 = vld [vmem:[%s8 + $0x210] sm:$0xf]
        %v3412 = vld [vmem:[%s8 + $0x214] sm:$0xf]
        %v3413 = vld [vmem:[%s8 + $0x218] sm:$0xf]
        %v3414 = vld [vmem:[%s8 + $0x21c] sm:$0xf]
        %v3415 = vld [vmem:[%s8 + $0x220] sm:$0xf]
        %v3416 = vld [vmem:[%s8 + $0x224] sm:$0xf]
        %v3417 = vld [vmem:[%s8 + $0x228] sm:$0xf]
        %v3418 = vld [vmem:[%s8 + $0x22c] sm:$0xf]
        %v3419 = vld [vmem:[%s8 + $0x230] sm:$0xf]
        %v3420 = vld [vmem:[%s8 + $0x234] sm:$0xf]
        %v3421 = vld [vmem:[%s8 + $0x238] sm:$0xf]
        %v3422 = vld [vmem:[%s8 + $0x23c] sm:$0xf]
        %v3423 = vld [vmem:[%s8 + $0x240] sm:$0xf]
        %v3424 = vld [vmem:[%s8 + $0x244] sm:$0xf]
        %v3425 = vld [vmem:[%s8 + $0x248] sm:$0xf]
        %v3426 = vld [vmem:[%s8 + $0x24c] sm:$0xf]
        %v3427 = vld [vmem:[%s8 + $0x250] sm:$0xf]
        %v3428 = vld [vmem:[%s8 + $0x254] sm:$0xf]
        %v3429 = vld [vmem:[%s8 + $0x258] sm:$0xf]
        %v3430 = vld [vmem:[%s8 + $0x25c] sm:$0xf]
        %v3431 = vld [vmem:[%s8 + $0x260] sm:$0xf]
        %v3432 = vld [vmem:[%s8 + $0x264] sm:$0xf]
        %v3433 = vld [vmem:[%s8 + $0x268] sm:$0xf]
        %v3434 = vld [vmem:[%s8 + $0x26c] sm:$0xf]
        %v3435 = vld [vmem:[%s8 + $0x270] sm:$0xf]
        %v3436 = vld [vmem:[%s8 + $0x274] sm:$0xf]
        %v3437 = vld [vmem:[%s8 + $0x278] sm:$0xf]
        %v3438 = vld [vmem:[%s8 + $0x27c] sm:$0xf]
        %v3439 = vld [vmem:[%s8 + $0x280] sm:$0xf]
        %v3440 = vld [vmem:[%s8 + $0x284] sm:$0xf]
        %v3441 = vld [vmem:[%s8 + $0x288] sm:$0xf]
        %v3442 = vld [vmem:[%s8 + $0x28c] sm:$0xf]
        %v3443 = vld [vmem:[%s8 + $0x290] sm:$0xf]
        %v3444 = vld [vmem:[%s8 + $0x294] sm:$0xf]
        %v3445 = vld [vmem:[%s8 + $0x298] sm:$0xf]
        %v3446 = vld [vmem:[%s8 + $0x29c] sm:$0xf]
        %v3447 = vld [vmem:[%s8 + $0x2a0] sm:$0xf]
        %v3448 = vld [vmem:[%s8 + $0x2a4] sm:$0xf]
        %v3449 = vld [vmem:[%s8 + $0x2a8] sm:$0xf]
        %v3450 = vld [vmem:[%s8 + $0x2ac] sm:$0xf]
        %v3451 = vld [vmem:[%s8 + $0x2b0] sm:$0xf]
        %v3452 = vld [vmem:[%s8 + $0x2b4] sm:$0xf]
        %v3453 = vld [vmem:[%s8 + $0x2b8] sm:$0xf]
        %v3454 = vld [vmem:[%s8 + $0x2bc] sm:$0xf]
        %v3455 = vld [vmem:[%s8 + $0x2c0] sm:$0xf]
        %v3456 = vld [vmem:[%s8 + $0x2c4] sm:$0xf]
        %v3457 = vld [vmem:[%s8 + $0x2c8] sm:$0xf]
        %v3458 = vld [vmem:[%s8 + $0x2cc] sm:$0xf]
        %v3459 = vld [vmem:[%s8 + $0x2d0] sm:$0xf]
        %v3460 = vld [vmem:[%s8 + $0x2d4] sm:$0xf]
        %v3461 = vld [vmem:[%s8 + $0x2d8] sm:$0xf]
        %v3462 = vld [vmem:[%s8 + $0x2dc] sm:$0xf]
        %v3463 = vld [vmem:[%s8 + $0x2e0] sm:$0xf]
        %v3464 = vld [vmem:[%s8 + $0x2e4] sm:$0xf]
        %v3465 = vld [vmem:[%s8 + $0x2e8] sm:$0xf]
        %v3466 = vld [vmem:[%s8 + $0x2ec] sm:$0xf]
        %v3467 = vld [vmem:[%s8 + $0x2f0] sm:$0xf]
        %v3468 = vld [vmem:[%s8 + $0x2f4] sm:$0xf]
        %v3469 = vld [vmem:[%s8 + $0x2f8] sm:$0xf]
        %v3470 = vld [vmem:[%s8 + $0x2fc] sm:$0xf]
        %v3471 = vld [vmem:[%s8 + $0x300] sm:$0xf]
        %v3472 = vld [vmem:[%s8 + $0x304] sm:$0xf]
        %v3473 = vld [vmem:[%s8 + $0x308] sm:$0xf]
        %v3474 = vld [vmem:[%s8 + $0x30c] sm:$0xf]
        %v3475 = vld [vmem:[%s8 + $0x310] sm:$0xf]
        %v3476 = vld [vmem:[%s8 + $0x314] sm:$0xf]
        %v3477 = vld [vmem:[%s8 + $0x318] sm:$0xf]
        %v3478 = vld [vmem:[%s8 + $0x31c] sm:$0xf]
        %v3479 = vld [vmem:[%s8 + $0x320] sm:$0xf]
        %v3480 = vld [vmem:[%s8 + $0x324] sm:$0xf]
        %v3481 = vld [vmem:[%s8 + $0x328] sm:$0xf]
        %v3482 = vld [vmem:[%s8 + $0x32c] sm:$0xf]
        %v3483 = vld [vmem:[%s8 + $0x330] sm:$0xf]
        %v3484 = vld [vmem:[%s8 + $0x334] sm:$0xf]
        %v3485 = vld [vmem:[%s8 + $0x338] sm:$0xf]
        %v3486 = vld [vmem:[%s8 + $0x33c] sm:$0xf]
        %v3487 = vld [vmem:[%s8 + $0x340] sm:$0xf]
        %v3488 = vld [vmem:[%s8 + $0x344] sm:$0xf]
        %v3489 = vld [vmem:[%s8 + $0x348] sm:$0xf]
        %v3490 = vld [vmem:[%s8 + $0x34c] sm:$0xf]
        %v3491 = vld [vmem:[%s8 + $0x350] sm:$0xf]
        %v3492 = vld [vmem:[%s8 + $0x354] sm:$0xf]
        %v3493 = vld [vmem:[%s8 + $0x358] sm:$0xf]
        %v3494 = vld [vmem:[%s8 + $0x35c] sm:$0xf]
        %v3495 = vld [vmem:[%s8 + $0x360] sm:$0xf]
        %v3496 = vld [vmem:[%s8 + $0x364] sm:$0xf]
        %v3497 = vld [vmem:[%s8 + $0x368] sm:$0xf]
        %v3498 = vld [vmem:[%s8 + $0x36c] sm:$0xf]
        %v3499 = vld [vmem:[%s8 + $0x370] sm:$0xf]
        %v3500 = vld [vmem:[%s8 + $0x374] sm:$0xf]
        %v3501 = vld [vmem:[%s8 + $0x378] sm:$0xf]
        %v3502 = vld [vmem:[%s8 + $0x37c] sm:$0xf]
        %v3503 = vld [vmem:[%s8 + $0x380] sm:$0xf]
        %v3504 = vld [vmem:[%s8 + $0x384] sm:$0xf]
        %v3505 = vld [vmem:[%s8 + $0x388] sm:$0xf]
        %v3506 = vld [vmem:[%s8 + $0x38c] sm:$0xf]
        %v3507 = vld [vmem:[%s8 + $0x390] sm:$0xf]
        %v3508 = vld [vmem:[%s8 + $0x394] sm:$0xf]
        %v3509 = vld [vmem:[%s8 + $0x398] sm:$0xf]
        %v3510 = vld [vmem:[%s8 + $0x39c] sm:$0xf]
        %v3511 = vld [vmem:[%s8 + $0x3a0] sm:$0xf]
        %v3512 = vld [vmem:[%s8 + $0x3a4] sm:$0xf]
        %v3513 = vld [vmem:[%s8 + $0x3a8] sm:$0xf]
        %v3514 = vld [vmem:[%s8 + $0x3ac] sm:$0xf]
        %v3515 = vld [vmem:[%s8 + $0x3b0] sm:$0xf]
        %v3516 = vld [vmem:[%s8 + $0x3b4] sm:$0xf]
        %v3517 = vld [vmem:[%s8 + $0x3b8] sm:$0xf]
        %v3518 = vld [vmem:[%s8 + $0x3bc] sm:$0xf]
        %v3519 = vld [vmem:[%s8 + $0x3c0] sm:$0xf]
        %v3520 = vld [vmem:[%s8 + $0x3c4] sm:$0xf]
        %v3521 = vld [vmem:[%s8 + $0x3c8] sm:$0xf]
        %v3522 = vld [vmem:[%s8 + $0x3cc] sm:$0xf]
        %v3523 = vld [vmem:[%s8 + $0x3d0] sm:$0xf]
        %v3524 = vld [vmem:[%s8 + $0x3d4] sm:$0xf]
        %v3525 = vld [vmem:[%s8 + $0x3d8] sm:$0xf]
        %v3526 = vld [vmem:[%s8 + $0x3dc] sm:$0xf]
        %v3527 = vld [vmem:[%s8 + $0x3e0] sm:$0xf]
        %v3528 = vld [vmem:[%s8 + $0x3e4] sm:$0xf]
        %v3529 = vld [vmem:[%s8 + $0x3e8] sm:$0xf]
        %v3530 = vld [vmem:[%s8 + $0x3ec] sm:$0xf]
        %v3531 = vld [vmem:[%s8 + $0x3f0] sm:$0xf]
        %v3532 = vld [vmem:[%s8 + $0x3f4] sm:$0xf]
        %v3533 = vld [vmem:[%s8 + $0x3f8] sm:$0xf]
        %v3534 = vld [vmem:[%s8 + $0x3fc] sm:$0xf]
        %v3535 = vld [vmem:[%s9] sm:$0x1]
        %v3536 = vld [vmem:[%s9 + $0x1] sm:$0x1]
        %v3537 = vld [vmem:[%s9 + $0x2] sm:$0x1]
        %v3538 = vld [vmem:[%s9 + $0x3] sm:$0x1]
        %v3539 = vld [vmem:[%s9 + $0x4] sm:$0x1]
        %v3540 = vld [vmem:[%s9 + $0x5] sm:$0x1]
        %v3541 = vld [vmem:[%s9 + $0x6] sm:$0x1]
        %v3542 = vld [vmem:[%s9 + $0x7] sm:$0x1]
        %v3551 = vlaneseq
        %v3552 = vshrl.u32 %v3551, 7
        %v3553 = vsub.s32 0, %v3552
        %v3554 = vrot.slane %v3535, %v3553
        %v3555 = vlaneseq
        %v3556 = vshrl.u32 %v3555, 7
        %v3557 = vsub.s32 0, %v3556
        %v3558 = vrot.slane %v3536, %v3557
        %v3559 = vlaneseq
        %v3560 = vshrl.u32 %v3559, 7
        %v3561 = vsub.s32 0, %v3560
        %v3562 = vrot.slane %v3537, %v3561
        %v3563 = vlaneseq
        %v3564 = vshrl.u32 %v3563, 7
        %v3565 = vsub.s32 0, %v3564
        %v3566 = vrot.slane %v3538, %v3565
        %v3567 = vlaneseq
        %v3568 = vshrl.u32 %v3567, 7
        %v3569 = vsub.s32 0, %v3568
        %v3570 = vrot.slane %v3539, %v3569
        %v3571 = vlaneseq
        %v3572 = vshrl.u32 %v3571, 7
        %v3573 = vsub.s32 0, %v3572
        %v3574 = vrot.slane %v3540, %v3573
        %v3575 = vlaneseq
        %v3576 = vshrl.u32 %v3575, 7
        %v3577 = vsub.s32 0, %v3576
        %v3578 = vrot.slane %v3541, %v3577
        %v3579 = vlaneseq
        %v3580 = vshrl.u32 %v3579, 7
        %v3581 = vsub.s32 0, %v3580
        %v3582 = vrot.slane %v3542, %v3581
        %v3623 = vunpack.c.l.b16 %v3279
        %v3624 = vunpack.c.l.b16 %v3280
        %v3625 = vunpack.c.l.b16 %v3281
        %v3626 = vunpack.c.l.b16 %v3282
        %v3627 = vunpack.c.l.b16 %v3283
        %v3628 = vunpack.c.l.b16 %v3284
        %v3629 = vunpack.c.l.b16 %v3285
        %v3630 = vunpack.c.l.b16 %v3286
        %v3631 = vunpack.c.l.b16 %v3287
        %v3632 = vunpack.c.l.b16 %v3288
        %v3633 = vunpack.c.l.b16 %v3289
        %v3634 = vunpack.c.l.b16 %v3290
        %v3635 = vunpack.c.l.b16 %v3291
        %v3636 = vunpack.c.l.b16 %v3292
        %v3637 = vunpack.c.l.b16 %v3293
        %v3638 = vunpack.c.l.b16 %v3294
        %v3639 = vunpack.c.l.b16 %v3295
        %v3640 = vunpack.c.l.b16 %v3296
        %v3641 = vunpack.c.l.b16 %v3297
        %v3642 = vunpack.c.l.b16 %v3298
        %v3643 = vunpack.c.l.b16 %v3299
        %v3644 = vunpack.c.l.b16 %v3300
        %v3645 = vunpack.c.l.b16 %v3301
        %v3646 = vunpack.c.l.b16 %v3302
        %v3647 = vunpack.c.l.b16 %v3303
        %v3648 = vunpack.c.l.b16 %v3304
        %v3649 = vunpack.c.l.b16 %v3305
        %v3650 = vunpack.c.l.b16 %v3306
        %v3651 = vunpack.c.l.b16 %v3307
        %v3652 = vunpack.c.l.b16 %v3308
        %v3653 = vunpack.c.l.b16 %v3309
        %v3654 = vunpack.c.l.b16 %v3310
        %v3655 = vpack.c.b16 %v3624, %v3623
        %v3656 = vpack.c.b16 %v3626, %v3625
        %v3657 = vpack.c.b16 %v3628, %v3627
        %v3658 = vpack.c.b16 %v3630, %v3629
        %v3659 = vpack.c.b16 %v3632, %v3631
        %v3660 = vpack.c.b16 %v3634, %v3633
        %v3661 = vpack.c.b16 %v3636, %v3635
        %v3662 = vpack.c.b16 %v3638, %v3637
        %v3663 = vpack.c.b16 %v3640, %v3639
        %v3664 = vpack.c.b16 %v3642, %v3641
        %v3665 = vpack.c.b16 %v3644, %v3643
        %v3666 = vpack.c.b16 %v3646, %v3645
        %v3667 = vpack.c.b16 %v3648, %v3647
        %v3668 = vpack.c.b16 %v3650, %v3649
        %v3669 = vpack.c.b16 %v3652, %v3651
        %v3670 = vpack.c.b16 %v3654, %v3653
        %3687 = vmatprep.subr.bf16.mxu0 0
        %3688 = vmatpush1.bf16.msra.mxu0 %v3655
        %3689 = vmatprep.subr.bf16.mxu0 0
        %3690 = vmatpush1.bf16.msra.mxu0 %v3656
        %3691 = vmatprep.subr.bf16.mxu0 0
        %3692 = vmatpush1.bf16.msra.mxu0 %v3657
        %3693 = vmatprep.subr.bf16.mxu0 0
        %3694 = vmatpush1.bf16.msra.mxu0 %v3658
        %3695 = vmatprep.subr.bf16.mxu0 0
        %3696 = vmatpush1.bf16.msra.mxu0 %v3659
        %3697 = vmatprep.subr.bf16.mxu0 0
        %3698 = vmatpush1.bf16.msra.mxu0 %v3660
        %3699 = vmatprep.subr.bf16.mxu0 0
        %3700 = vmatpush1.bf16.msra.mxu0 %v3661
        %3701 = vmatprep.subr.bf16.mxu0 0
        %3702 = vmatpush1.bf16.msra.mxu0 %v3662
        %3703 = vmatprep.subr.bf16.mxu0 0
        %3704 = vmatpush1.bf16.msra.mxu0 %v3663
        %3705 = vmatprep.subr.bf16.mxu0 0
        %3706 = vmatpush1.bf16.msra.mxu0 %v3664
        %3707 = vmatprep.subr.bf16.mxu0 0
        %3708 = vmatpush1.bf16.msra.mxu0 %v3665
        %3709 = vmatprep.subr.bf16.mxu0 0
        %3710 = vmatpush1.bf16.msra.mxu0 %v3666
        %3711 = vmatprep.subr.bf16.mxu0 0
        %3712 = vmatpush1.bf16.msra.mxu0 %v3667
        %3713 = vmatprep.subr.bf16.mxu0 0
        %3714 = vmatpush1.bf16.msra.mxu0 %v3668
        %3715 = vmatprep.subr.bf16.mxu0 0
        %3716 = vmatpush1.bf16.msra.mxu0 %v3669
        %3717 = vmatprep.subr.bf16.mxu0 0
        %3718 = vmatpush1.bf16.msra.mxu0 %v3670
        %3719 = vmatprep.mubr.bf16.mxu0 %v478
        %3720 = vmatmul.mubr.bf16.gmra.mrb[0].mxu0 %v477
        %v3721 = vpop.f32.mrb[0].mxu0
        %v3722 = vadd.f32 %v3554, %v3721
        %v3723 = vpop.f32.mrb[0].mxu0
        %v3724 = vpop.f32.mrb[0].mxu0
        %v3725 = vpop.f32.mrb[0].mxu0
        %3726 = vdwg.mxu0
        %v3759 = vunpack.c.l.b16 %v3311
        %v3760 = vunpack.c.l.b16 %v3312
        %v3761 = vunpack.c.l.b16 %v3313
        %v3762 = vunpack.c.l.b16 %v3314
        %v3763 = vunpack.c.l.b16 %v3315
        %v3764 = vunpack.c.l.b16 %v3316
        %v3765 = vunpack.c.l.b16 %v3317
        %v3766 = vunpack.c.l.b16 %v3318
        %v3767 = vunpack.c.l.b16 %v3319
        %v3768 = vunpack.c.l.b16 %v3320
        %v3769 = vunpack.c.l.b16 %v3321
        %v3770 = vunpack.c.l.b16 %v3322
        %v3771 = vunpack.c.l.b16 %v3323
        %v3772 = vunpack.c.l.b16 %v3324
        %v3773 = vunpack.c.l.b16 %v3325
        %v3774 = vunpack.c.l.b16 %v3326
        %v3775 = vunpack.c.l.b16 %v3327
        %v3776 = vunpack.c.l.b16 %v3328
        %v3777 = vunpack.c.l.b16 %v3329
        %v3778 = vunpack.c.l.b16 %v3330
        %v3779 = vunpack.c.l.b16 %v3331
        %v3780 = vunpack.c.l.b16 %v3332
        %v3781 = vunpack.c.l.b16 %v3333
        %v3782 = vunpack.c.l.b16 %v3334
        %v3783 = vunpack.c.l.b16 %v3335
        %v3784 = vunpack.c.l.b16 %v3336
        %v3785 = vunpack.c.l.b16 %v3337
        %v3786 = vunpack.c.l.b16 %v3338
        %v3787 = vunpack.c.l.b16 %v3339
        %v3788 = vunpack.c.l.b16 %v3340
        %v3789 = vunpack.c.l.b16 %v3341
        %v3790 = vunpack.c.l.b16 %v3342
        %v3791 = vpack.c.b16 %v3760, %v3759
        %v3792 = vpack.c.b16 %v3762, %v3761
        %v3793 = vpack.c.b16 %v3764, %v3763
        %v3794 = vpack.c.b16 %v3766, %v3765
        %v3795 = vpack.c.b16 %v3768, %v3767
        %v3796 = vpack.c.b16 %v3770, %v3769
        %v3797 = vpack.c.b16 %v3772, %v3771
        %v3798 = vpack.c.b16 %v3774, %v3773
        %v3799 = vpack.c.b16 %v3776, %v3775
        %v3800 = vpack.c.b16 %v3778, %v3777
        %v3801 = vpack.c.b16 %v3780, %v3779
        %v3802 = vpack.c.b16 %v3782, %v3781
        %v3803 = vpack.c.b16 %v3784, %v3783
        %v3804 = vpack.c.b16 %v3786, %v3785
        %v3805 = vpack.c.b16 %v3788, %v3787
        %v3806 = vpack.c.b16 %v3790, %v3789
        %3823 = vmatprep.subr.bf16.mxu0 0
        %3824 = vmatpush1.bf16.msra.mxu0 %v3791
        %3825 = vmatprep.subr.bf16.mxu0 0
        %3826 = vmatpush1.bf16.msra.mxu0 %v3792
        %3827 = vmatprep.subr.bf16.mxu0 0
        %3828 = vmatpush1.bf16.msra.mxu0 %v3793
        %3829 = vmatprep.subr.bf16.mxu0 0
        %3830 = vmatpush1.bf16.msra.mxu0 %v3794
        %3831 = vmatprep.subr.bf16.mxu0 0
        %3832 = vmatpush1.bf16.msra.mxu0 %v3795
        %3833 = vmatprep.subr.bf16.mxu0 0
        %3834 = vmatpush1.bf16.msra.mxu0 %v3796
        %3835 = vmatprep.subr.bf16.mxu0 0
        %3836 = vmatpush1.bf16.msra.mxu0 %v3797
        %3837 = vmatprep.subr.bf16.mxu0 0
        %3838 = vmatpush1.bf16.msra.mxu0 %v3798
        %3839 = vmatprep.subr.bf16.mxu0 0
        %3840 = vmatpush1.bf16.msra.mxu0 %v3799
        %3841 = vmatprep.subr.bf16.mxu0 0
        %3842 = vmatpush1.bf16.msra.mxu0 %v3800
        %3843 = vmatprep.subr.bf16.mxu0 0
        %3844 = vmatpush1.bf16.msra.mxu0 %v3801
        %3845 = vmatprep.subr.bf16.mxu0 0
        %3846 = vmatpush1.bf16.msra.mxu0 %v3802
        %3847 = vmatprep.subr.bf16.mxu0 0
        %3848 = vmatpush1.bf16.msra.mxu0 %v3803
        %3849 = vmatprep.subr.bf16.mxu0 0
        %3850 = vmatpush1.bf16.msra.mxu0 %v3804
        %3851 = vmatprep.subr.bf16.mxu0 0
        %3852 = vmatpush1.bf16.msra.mxu0 %v3805
        %3853 = vmatprep.subr.bf16.mxu0 0
        %3854 = vmatpush1.bf16.msra.mxu0 %v3806
        %3855 = vmatprep.mubr.bf16.mxu0 %v478
        %3856 = vmatmul.mubr.bf16.gmra.mrb[0].mxu0 %v477
        %v3857 = vpop.f32.mrb[0].mxu0
        %v3858 = vadd.f32 %v3558, %v3857
        %v3859 = vpop.f32.mrb[0].mxu0
        %v3860 = vpop.f32.mrb[0].mxu0
        %v3861 = vpop.f32.mrb[0].mxu0
        %3862 = vdwg.mxu0
        %v3895 = vunpack.c.l.b16 %v3343
        %v3896 = vunpack.c.l.b16 %v3344
        %v3897 = vunpack.c.l.b16 %v3345
        %v3898 = vunpack.c.l.b16 %v3346
        %v3899 = vunpack.c.l.b16 %v3347
        %v3900 = vunpack.c.l.b16 %v3348
        %v3901 = vunpack.c.l.b16 %v3349
        %v3902 = vunpack.c.l.b16 %v3350
        %v3903 = vunpack.c.l.b16 %v3351
        %v3904 = vunpack.c.l.b16 %v3352
        %v3905 = vunpack.c.l.b16 %v3353
        %v3906 = vunpack.c.l.b16 %v3354
        %v3907 = vunpack.c.l.b16 %v3355
        %v3908 = vunpack.c.l.b16 %v3356
        %v3909 = vunpack.c.l.b16 %v3357
        %v3910 = vunpack.c.l.b16 %v3358
        %v3911 = vunpack.c.l.b16 %v3359
        %v3912 = vunpack.c.l.b16 %v3360
        %v3913 = vunpack.c.l.b16 %v3361
        %v3914 = vunpack.c.l.b16 %v3362
        %v3915 = vunpack.c.l.b16 %v3363
        %v3916 = vunpack.c.l.b16 %v3364
        %v3917 = vunpack.c.l.b16 %v3365
        %v3918 = vunpack.c.l.b16 %v3366
        %v3919 = vunpack.c.l.b16 %v3367
        %v3920 = vunpack.c.l.b16 %v3368
        %v3921 = vunpack.c.l.b16 %v3369
        %v3922 = vunpack.c.l.b16 %v3370
        %v3923 = vunpack.c.l.b16 %v3371
        %v3924 = vunpack.c.l.b16 %v3372
        %v3925 = vunpack.c.l.b16 %v3373
        %v3926 = vunpack.c.l.b16 %v3374
        %v3927 = vpack.c.b16 %v3896, %v3895
        %v3928 = vpack.c.b16 %v3898, %v3897
        %v3929 = vpack.c.b16 %v3900, %v3899
        %v3930 = vpack.c.b16 %v3902, %v3901
        %v3931 = vpack.c.b16 %v3904, %v3903
        %v3932 = vpack.c.b16 %v3906, %v3905
        %v3933 = vpack.c.b16 %v3908, %v3907
        %v3934 = vpack.c.b16 %v3910, %v3909
        %v3935 = vpack.c.b16 %v3912, %v3911
        %v3936 = vpack.c.b16 %v3914, %v3913
        %v3937 = vpack.c.b16 %v3916, %v3915
        %v3938 = vpack.c.b16 %v3918, %v3917
        %v3939 = vpack.c.b16 %v3920, %v3919
        %v3940 = vpack.c.b16 %v3922, %v3921
        %v3941 = vpack.c.b16 %v3924, %v3923
        %v3942 = vpack.c.b16 %v3926, %v3925
        %3959 = vmatprep.subr.bf16.mxu0 0
        %3960 = vmatpush1.bf16.msra.mxu0 %v3927
        %3961 = vmatprep.subr.bf16.mxu0 0
        %3962 = vmatpush1.bf16.msra.mxu0 %v3928
        %3963 = vmatprep.subr.bf16.mxu0 0
        %3964 = vmatpush1.bf16.msra.mxu0 %v3929
        %3965 = vmatprep.subr.bf16.mxu0 0
        %3966 = vmatpush1.bf16.msra.mxu0 %v3930
        %3967 = vmatprep.subr.bf16.mxu0 0
        %3968 = vmatpush1.bf16.msra.mxu0 %v3931
        %3969 = vmatprep.subr.bf16.mxu0 0
        %3970 = vmatpush1.bf16.msra.mxu0 %v3932
        %3971 = vmatprep.subr.bf16.mxu0 0
        %3972 = vmatpush1.bf16.msra.mxu0 %v3933
        %3973 = vmatprep.subr.bf16.mxu0 0
        %3974 = vmatpush1.bf16.msra.mxu0 %v3934
        %3975 = vmatprep.subr.bf16.mxu0 0
        %3976 = vmatpush1.bf16.msra.mxu0 %v3935
        %3977 = vmatprep.subr.bf16.mxu0 0
        %3978 = vmatpush1.bf16.msra.mxu0 %v3936
        %3979 = vmatprep.subr.bf16.mxu0 0
        %3980 = vmatpush1.bf16.msra.mxu0 %v3937
        %3981 = vmatprep.subr.bf16.mxu0 0
        %3982 = vmatpush1.bf16.msra.mxu0 %v3938
        %3983 = vmatprep.subr.bf16.mxu0 0
        %3984 = vmatpush1.bf16.msra.mxu0 %v3939
        %3985 = vmatprep.subr.bf16.mxu0 0
        %3986 = vmatpush1.bf16.msra.mxu0 %v3940
        %3987 = vmatprep.subr.bf16.mxu0 0
        %3988 = vmatpush1.bf16.msra.mxu0 %v3941
        %3989 = vmatprep.subr.bf16.mxu0 0
        %3990 = vmatpush1.bf16.msra.mxu0 %v3942
        %3991 = vmatprep.mubr.bf16.mxu0 %v478
        %3992 = vmatmul.mubr.bf16.gmra.mrb[0].mxu0 %v477
        %v3993 = vpop.f32.mrb[0].mxu0
        %v3994 = vadd.f32 %v3562, %v3993
        %v3995 = vpop.f32.mrb[0].mxu0
        %v3996 = vpop.f32.mrb[0].mxu0
        %v3997 = vpop.f32.mrb[0].mxu0
        %3998 = vdwg.mxu0
        %v4031 = vunpack.c.l.b16 %v3375
        %v4032 = vunpack.c.l.b16 %v3376
        %v4033 = vunpack.c.l.b16 %v3377
        %v4034 = vunpack.c.l.b16 %v3378
        %v4035 = vunpack.c.l.b16 %v3379
        %v4036 = vunpack.c.l.b16 %v3380
        %v4037 = vunpack.c.l.b16 %v3381
        %v4038 = vunpack.c.l.b16 %v3382
        %v4039 = vunpack.c.l.b16 %v3383
        %v4040 = vunpack.c.l.b16 %v3384
        %v4041 = vunpack.c.l.b16 %v3385
        %v4042 = vunpack.c.l.b16 %v3386
        %v4043 = vunpack.c.l.b16 %v3387
        %v4044 = vunpack.c.l.b16 %v3388
        %v4045 = vunpack.c.l.b16 %v3389
        %v4046 = vunpack.c.l.b16 %v3390
        %v4047 = vunpack.c.l.b16 %v3391
        %v4048 = vunpack.c.l.b16 %v3392
        %v4049 = vunpack.c.l.b16 %v3393
        %v4050 = vunpack.c.l.b16 %v3394
        %v4051 = vunpack.c.l.b16 %v3395
        %v4052 = vunpack.c.l.b16 %v3396
        %v4053 = vunpack.c.l.b16 %v3397
        %v4054 = vunpack.c.l.b16 %v3398
        %v4055 = vunpack.c.l.b16 %v3399
        %v4056 = vunpack.c.l.b16 %v3400
        %v4057 = vunpack.c.l.b16 %v3401
        %v4058 = vunpack.c.l.b16 %v3402
        %v4059 = vunpack.c.l.b16 %v3403
        %v4060 = vunpack.c.l.b16 %v3404
        %v4061 = vunpack.c.l.b16 %v3405
        %v4062 = vunpack.c.l.b16 %v3406
        %v4063 = vpack.c.b16 %v4032, %v4031
        %v4064 = vpack.c.b16 %v4034, %v4033
        %v4065 = vpack.c.b16 %v4036, %v4035
        %v4066 = vpack.c.b16 %v4038, %v4037
        %v4067 = vpack.c.b16 %v4040, %v4039
        %v4068 = vpack.c.b16 %v4042, %v4041
        %v4069 = vpack.c.b16 %v4044, %v4043
        %v4070 = vpack.c.b16 %v4046, %v4045
        %v4071 = vpack.c.b16 %v4048, %v4047
        %v4072 = vpack.c.b16 %v4050, %v4049
        %v4073 = vpack.c.b16 %v4052, %v4051
        %v4074 = vpack.c.b16 %v4054, %v4053
        %v4075 = vpack.c.b16 %v4056, %v4055
        %v4076 = vpack.c.b16 %v4058, %v4057
        %v4077 = vpack.c.b16 %v4060, %v4059
        %v4078 = vpack.c.b16 %v4062, %v4061
        %4095 = vmatprep.subr.bf16.mxu0 0
        %4096 = vmatpush1.bf16.msra.mxu0 %v4063
        %4097 = vmatprep.subr.bf16.mxu0 0
        %4098 = vmatpush1.bf16.msra.mxu0 %v4064
        %4099 = vmatprep.subr.bf16.mxu0 0
        %4100 = vmatpush1.bf16.msra.mxu0 %v4065
        %4101 = vmatprep.subr.bf16.mxu0 0
        %4102 = vmatpush1.bf16.msra.mxu0 %v4066
        %4103 = vmatprep.subr.bf16.mxu0 0
        %4104 = vmatpush1.bf16.msra.mxu0 %v4067
        %4105 = vmatprep.subr.bf16.mxu0 0
        %4106 = vmatpush1.bf16.msra.mxu0 %v4068
        %4107 = vmatprep.subr.bf16.mxu0 0
        %4108 = vmatpush1.bf16.msra.mxu0 %v4069
        %4109 = vmatprep.subr.bf16.mxu0 0
        %4110 = vmatpush1.bf16.msra.mxu0 %v4070
        %4111 = vmatprep.subr.bf16.mxu0 0
        %4112 = vmatpush1.bf16.msra.mxu0 %v4071
        %4113 = vmatprep.subr.bf16.mxu0 0
        %4114 = vmatpush1.bf16.msra.mxu0 %v4072
        %4115 = vmatprep.subr.bf16.mxu0 0
        %4116 = vmatpush1.bf16.msra.mxu0 %v4073
        %4117 = vmatprep.subr.bf16.mxu0 0
        %4118 = vmatpush1.bf16.msra.mxu0 %v4074
        %4119 = vmatprep.subr.bf16.mxu0 0
        %4120 = vmatpush1.bf16.msra.mxu0 %v4075
        %4121 = vmatprep.subr.bf16.mxu0 0
        %4122 = vmatpush1.bf16.msra.mxu0 %v4076
        %4123 = vmatprep.subr.bf16.mxu0 0
        %4124 = vmatpush1.bf16.msra.mxu0 %v4077
        %4125 = vmatprep.subr.bf16.mxu0 0
        %4126 = vmatpush1.bf16.msra.mxu0 %v4078
        %4127 = vmatprep.mubr.bf16.mxu0 %v478
        %4128 = vmatmul.mubr.bf16.gmra.mrb[0].mxu0 %v477
        %v4129 = vpop.f32.mrb[0].mxu0
        %v4130 = vadd.f32 %v3566, %v4129
        %v4131 = vpop.f32.mrb[0].mxu0
        %v4132 = vpop.f32.mrb[0].mxu0
        %v4133 = vpop.f32.mrb[0].mxu0
        %4134 = vdwg.mxu0
        %v4167 = vunpack.c.l.b16 %v3407
        %v4168 = vunpack.c.l.b16 %v3408
        %v4169 = vunpack.c.l.b16 %v3409
        %v4170 = vunpack.c.l.b16 %v3410
        %v4171 = vunpack.c.l.b16 %v3411
        %v4172 = vunpack.c.l.b16 %v3412
        %v4173 = vunpack.c.l.b16 %v3413
        %v4174 = vunpack.c.l.b16 %v3414
        %v4175 = vunpack.c.l.b16 %v3415
        %v4176 = vunpack.c.l.b16 %v3416
        %v4177 = vunpack.c.l.b16 %v3417
        %v4178 = vunpack.c.l.b16 %v3418
        %v4179 = vunpack.c.l.b16 %v3419
        %v4180 = vunpack.c.l.b16 %v3420
        %v4181 = vunpack.c.l.b16 %v3421
        %v4182 = vunpack.c.l.b16 %v3422
        %v4183 = vunpack.c.l.b16 %v3423
        %v4184 = vunpack.c.l.b16 %v3424
        %v4185 = vunpack.c.l.b16 %v3425
        %v4186 = vunpack.c.l.b16 %v3426
        %v4187 = vunpack.c.l.b16 %v3427
        %v4188 = vunpack.c.l.b16 %v3428
        %v4189 = vunpack.c.l.b16 %v3429
        %v4190 = vunpack.c.l.b16 %v3430
        %v4191 = vunpack.c.l.b16 %v3431
        %v4192 = vunpack.c.l.b16 %v3432
        %v4193 = vunpack.c.l.b16 %v3433
        %v4194 = vunpack.c.l.b16 %v3434
        %v4195 = vunpack.c.l.b16 %v3435
        %v4196 = vunpack.c.l.b16 %v3436
        %v4197 = vunpack.c.l.b16 %v3437
        %v4198 = vunpack.c.l.b16 %v3438
        %v4199 = vpack.c.b16 %v4168, %v4167
        %v4200 = vpack.c.b16 %v4170, %v4169
        %v4201 = vpack.c.b16 %v4172, %v4171
        %v4202 = vpack.c.b16 %v4174, %v4173
        %v4203 = vpack.c.b16 %v4176, %v4175
        %v4204 = vpack.c.b16 %v4178, %v4177
        %v4205 = vpack.c.b16 %v4180, %v4179
        %v4206 = vpack.c.b16 %v4182, %v4181
        %v4207 = vpack.c.b16 %v4184, %v4183
        %v4208 = vpack.c.b16 %v4186, %v4185
        %v4209 = vpack.c.b16 %v4188, %v4187
        %v4210 = vpack.c.b16 %v4190, %v4189
        %v4211 = vpack.c.b16 %v4192, %v4191
        %v4212 = vpack.c.b16 %v4194, %v4193
        %v4213 = vpack.c.b16 %v4196, %v4195
        %v4214 = vpack.c.b16 %v4198, %v4197
        %4231 = vmatprep.subr.bf16.mxu0 0
        %4232 = vmatpush1.bf16.msra.mxu0 %v4199
        %4233 = vmatprep.subr.bf16.mxu0 0
        %4234 = vmatpush1.bf16.msra.mxu0 %v4200
        %4235 = vmatprep.subr.bf16.mxu0 0
        %4236 = vmatpush1.bf16.msra.mxu0 %v4201
        %4237 = vmatprep.subr.bf16.mxu0 0
        %4238 = vmatpush1.bf16.msra.mxu0 %v4202
        %4239 = vmatprep.subr.bf16.mxu0 0
        %4240 = vmatpush1.bf16.msra.mxu0 %v4203
        %4241 = vmatprep.subr.bf16.mxu0 0
        %4242 = vmatpush1.bf16.msra.mxu0 %v4204
        %4243 = vmatprep.subr.bf16.mxu0 0
        %4244 = vmatpush1.bf16.msra.mxu0 %v4205
        %4245 = vmatprep.subr.bf16.mxu0 0
        %4246 = vmatpush1.bf16.msra.mxu0 %v4206
        %4247 = vmatprep.subr.bf16.mxu0 0
        %4248 = vmatpush1.bf16.msra.mxu0 %v4207
        %4249 = vmatprep.subr.bf16.mxu0 0
        %4250 = vmatpush1.bf16.msra.mxu0 %v4208
        %4251 = vmatprep.subr.bf16.mxu0 0
        %4252 = vmatpush1.bf16.msra.mxu0 %v4209
        %4253 = vmatprep.subr.bf16.mxu0 0
        %4254 = vmatpush1.bf16.msra.mxu0 %v4210
        %4255 = vmatprep.subr.bf16.mxu0 0
        %4256 = vmatpush1.bf16.msra.mxu0 %v4211
        %4257 = vmatprep.subr.bf16.mxu0 0
        %4258 = vmatpush1.bf16.msra.mxu0 %v4212
        %4259 = vmatprep.subr.bf16.mxu0 0
        %4260 = vmatpush1.bf16.msra.mxu0 %v4213
        %4261 = vmatprep.subr.bf16.mxu0 0
        %4262 = vmatpush1.bf16.msra.mxu0 %v4214
        %4263 = vmatprep.mubr.bf16.mxu0 %v478
        %4264 = vmatmul.mubr.bf16.gmra.mrb[0].mxu0 %v477
        %v4265 = vpop.f32.mrb[0].mxu0
        %v4266 = vadd.f32 %v3570, %v4265
        %v4267 = vpop.f32.mrb[0].mxu0
        %v4268 = vpop.f32.mrb[0].mxu0
        %v4269 = vpop.f32.mrb[0].mxu0
        %4270 = vdwg.mxu0
        %v4303 = vunpack.c.l.b16 %v3439
        %v4304 = vunpack.c.l.b16 %v3440
        %v4305 = vunpack.c.l.b16 %v3441
        %v4306 = vunpack.c.l.b16 %v3442
        %v4307 = vunpack.c.l.b16 %v3443
        %v4308 = vunpack.c.l.b16 %v3444
        %v4309 = vunpack.c.l.b16 %v3445
        %v4310 = vunpack.c.l.b16 %v3446
        %v4311 = vunpack.c.l.b16 %v3447
        %v4312 = vunpack.c.l.b16 %v3448
        %v4313 = vunpack.c.l.b16 %v3449
        %v4314 = vunpack.c.l.b16 %v3450
        %v4315 = vunpack.c.l.b16 %v3451
        %v4316 = vunpack.c.l.b16 %v3452
        %v4317 = vunpack.c.l.b16 %v3453
        %v4318 = vunpack.c.l.b16 %v3454
        %v4319 = vunpack.c.l.b16 %v3455
        %v4320 = vunpack.c.l.b16 %v3456
        %v4321 = vunpack.c.l.b16 %v3457
        %v4322 = vunpack.c.l.b16 %v3458
        %v4323 = vunpack.c.l.b16 %v3459
        %v4324 = vunpack.c.l.b16 %v3460
        %v4325 = vunpack.c.l.b16 %v3461
        %v4326 = vunpack.c.l.b16 %v3462
        %v4327 = vunpack.c.l.b16 %v3463
        %v4328 = vunpack.c.l.b16 %v3464
        %v4329 = vunpack.c.l.b16 %v3465
        %v4330 = vunpack.c.l.b16 %v3466
        %v4331 = vunpack.c.l.b16 %v3467
        %v4332 = vunpack.c.l.b16 %v3468
        %v4333 = vunpack.c.l.b16 %v3469
        %v4334 = vunpack.c.l.b16 %v3470
        %v4335 = vpack.c.b16 %v4304, %v4303
        %v4336 = vpack.c.b16 %v4306, %v4305
        %v4337 = vpack.c.b16 %v4308, %v4307
        %v4338 = vpack.c.b16 %v4310, %v4309
        %v4339 = vpack.c.b16 %v4312, %v4311
        %v4340 = vpack.c.b16 %v4314, %v4313
        %v4341 = vpack.c.b16 %v4316, %v4315
        %v4342 = vpack.c.b16 %v4318, %v4317
        %v4343 = vpack.c.b16 %v4320, %v4319
        %v4344 = vpack.c.b16 %v4322, %v4321
        %v4345 = vpack.c.b16 %v4324, %v4323
        %v4346 = vpack.c.b16 %v4326, %v4325
        %v4347 = vpack.c.b16 %v4328, %v4327
        %v4348 = vpack.c.b16 %v4330, %v4329
        %v4349 = vpack.c.b16 %v4332, %v4331
        %v4350 = vpack.c.b16 %v4334, %v4333
        %4367 = vmatprep.subr.bf16.mxu0 0
        %4368 = vmatpush1.bf16.msra.mxu0 %v4335
        %4369 = vmatprep.subr.bf16.mxu0 0
        %4370 = vmatpush1.bf16.msra.mxu0 %v4336
        %4371 = vmatprep.subr.bf16.mxu0 0
        %4372 = vmatpush1.bf16.msra.mxu0 %v4337
        %4373 = vmatprep.subr.bf16.mxu0 0
        %4374 = vmatpush1.bf16.msra.mxu0 %v4338
        %4375 = vmatprep.subr.bf16.mxu0 0
        %4376 = vmatpush1.bf16.msra.mxu0 %v4339
        %4377 = vmatprep.subr.bf16.mxu0 0
        %4378 = vmatpush1.bf16.msra.mxu0 %v4340
        %4379 = vmatprep.subr.bf16.mxu0 0
        %4380 = vmatpush1.bf16.msra.mxu0 %v4341
        %4381 = vmatprep.subr.bf16.mxu0 0
        %4382 = vmatpush1.bf16.msra.mxu0 %v4342
        %4383 = vmatprep.subr.bf16.mxu0 0
        %4384 = vmatpush1.bf16.msra.mxu0 %v4343
        %4385 = vmatprep.subr.bf16.mxu0 0
        %4386 = vmatpush1.bf16.msra.mxu0 %v4344
        %4387 = vmatprep.subr.bf16.mxu0 0
        %4388 = vmatpush1.bf16.msra.mxu0 %v4345
        %4389 = vmatprep.subr.bf16.mxu0 0
        %4390 = vmatpush1.bf16.msra.mxu0 %v4346
        %4391 = vmatprep.subr.bf16.mxu0 0
        %4392 = vmatpush1.bf16.msra.mxu0 %v4347
        %4393 = vmatprep.subr.bf16.mxu0 0
        %4394 = vmatpush1.bf16.msra.mxu0 %v4348
        %4395 = vmatprep.subr.bf16.mxu0 0
        %4396 = vmatpush1.bf16.msra.mxu0 %v4349
        %4397 = vmatprep.subr.bf16.mxu0 0
        %4398 = vmatpush1.bf16.msra.mxu0 %v4350
        %4399 = vmatprep.mubr.bf16.mxu0 %v478
        %4400 = vmatmul.mubr.bf16.gmra.mrb[0].mxu0 %v477
        %v4401 = vpop.f32.mrb[0].mxu0
        %v4402 = vadd.f32 %v3574, %v4401
        %v4403 = vpop.f32.mrb[0].mxu0
        %v4404 = vpop.f32.mrb[0].mxu0
        %v4405 = vpop.f32.mrb[0].mxu0
        %4406 = vdwg.mxu0
        %v4439 = vunpack.c.l.b16 %v3471
        %v4440 = vunpack.c.l.b16 %v3472
        %v4441 = vunpack.c.l.b16 %v3473
        %v4442 = vunpack.c.l.b16 %v3474
        %v4443 = vunpack.c.l.b16 %v3475
        %v4444 = vunpack.c.l.b16 %v3476
        %v4445 = vunpack.c.l.b16 %v3477
        %v4446 = vunpack.c.l.b16 %v3478
        %v4447 = vunpack.c.l.b16 %v3479
        %v4448 = vunpack.c.l.b16 %v3480
        %v4449 = vunpack.c.l.b16 %v3481
        %v4450 = vunpack.c.l.b16 %v3482
        %v4451 = vunpack.c.l.b16 %v3483
        %v4452 = vunpack.c.l.b16 %v3484
        %v4453 = vunpack.c.l.b16 %v3485
        %v4454 = vunpack.c.l.b16 %v3486
        %v4455 = vunpack.c.l.b16 %v3487
        %v4456 = vunpack.c.l.b16 %v3488
        %v4457 = vunpack.c.l.b16 %v3489
        %v4458 = vunpack.c.l.b16 %v3490
        %v4459 = vunpack.c.l.b16 %v3491
        %v4460 = vunpack.c.l.b16 %v3492
        %v4461 = vunpack.c.l.b16 %v3493
        %v4462 = vunpack.c.l.b16 %v3494
        %v4463 = vunpack.c.l.b16 %v3495
        %v4464 = vunpack.c.l.b16 %v3496
        %v4465 = vunpack.c.l.b16 %v3497
        %v4466 = vunpack.c.l.b16 %v3498
        %v4467 = vunpack.c.l.b16 %v3499
        %v4468 = vunpack.c.l.b16 %v3500
        %v4469 = vunpack.c.l.b16 %v3501
        %v4470 = vunpack.c.l.b16 %v3502
        %v4471 = vpack.c.b16 %v4440, %v4439
        %v4472 = vpack.c.b16 %v4442, %v4441
        %v4473 = vpack.c.b16 %v4444, %v4443
        %v4474 = vpack.c.b16 %v4446, %v4445
        %v4475 = vpack.c.b16 %v4448, %v4447
        %v4476 = vpack.c.b16 %v4450, %v4449
        %v4477 = vpack.c.b16 %v4452, %v4451
        %v4478 = vpack.c.b16 %v4454, %v4453
        %v4479 = vpack.c.b16 %v4456, %v4455
        %v4480 = vpack.c.b16 %v4458, %v4457
        %v4481 = vpack.c.b16 %v4460, %v4459
        %v4482 = vpack.c.b16 %v4462, %v4461
        %v4483 = vpack.c.b16 %v4464, %v4463
        %v4484 = vpack.c.b16 %v4466, %v4465
        %v4485 = vpack.c.b16 %v4468, %v4467
        %v4486 = vpack.c.b16 %v4470, %v4469
        %4503 = vmatprep.subr.bf16.mxu0 0
        %4504 = vmatpush1.bf16.msra.mxu0 %v4471
        %4505 = vmatprep.subr.bf16.mxu0 0
        %4506 = vmatpush1.bf16.msra.mxu0 %v4472
        %4507 = vmatprep.subr.bf16.mxu0 0
        %4508 = vmatpush1.bf16.msra.mxu0 %v4473
        %4509 = vmatprep.subr.bf16.mxu0 0
        %4510 = vmatpush1.bf16.msra.mxu0 %v4474
        %4511 = vmatprep.subr.bf16.mxu0 0
        %4512 = vmatpush1.bf16.msra.mxu0 %v4475
        %4513 = vmatprep.subr.bf16.mxu0 0
        %4514 = vmatpush1.bf16.msra.mxu0 %v4476
        %4515 = vmatprep.subr.bf16.mxu0 0
        %4516 = vmatpush1.bf16.msra.mxu0 %v4477
        %4517 = vmatprep.subr.bf16.mxu0 0
        %4518 = vmatpush1.bf16.msra.mxu0 %v4478
        %4519 = vmatprep.subr.bf16.mxu0 0
        %4520 = vmatpush1.bf16.msra.mxu0 %v4479
        %4521 = vmatprep.subr.bf16.mxu0 0
        %4522 = vmatpush1.bf16.msra.mxu0 %v4480
        %4523 = vmatprep.subr.bf16.mxu0 0
        %4524 = vmatpush1.bf16.msra.mxu0 %v4481
        %4525 = vmatprep.subr.bf16.mxu0 0
        %4526 = vmatpush1.bf16.msra.mxu0 %v4482
        %4527 = vmatprep.subr.bf16.mxu0 0
        %4528 = vmatpush1.bf16.msra.mxu0 %v4483
        %4529 = vmatprep.subr.bf16.mxu0 0
        %4530 = vmatpush1.bf16.msra.mxu0 %v4484
        %4531 = vmatprep.subr.bf16.mxu0 0
        %4532 = vmatpush1.bf16.msra.mxu0 %v4485
        %4533 = vmatprep.subr.bf16.mxu0 0
        %4534 = vmatpush1.bf16.msra.mxu0 %v4486
        %4535 = vmatprep.mubr.bf16.mxu0 %v478
        %4536 = vmatmul.mubr.bf16.gmra.mrb[0].mxu0 %v477
        %v4537 = vpop.f32.mrb[0].mxu0
        %v4538 = vadd.f32 %v3578, %v4537
        %v4539 = vpop.f32.mrb[0].mxu0
        %v4540 = vpop.f32.mrb[0].mxu0
        %v4541 = vpop.f32.mrb[0].mxu0
        %4542 = vdwg.mxu0
        %v4575 = vunpack.c.l.b16 %v3503
        %v4576 = vunpack.c.l.b16 %v3504
        %v4577 = vunpack.c.l.b16 %v3505
        %v4578 = vunpack.c.l.b16 %v3506
        %v4579 = vunpack.c.l.b16 %v3507
        %v4580 = vunpack.c.l.b16 %v3508
        %v4581 = vunpack.c.l.b16 %v3509
        %v4582 = vunpack.c.l.b16 %v3510
        %v4583 = vunpack.c.l.b16 %v3511
        %v4584 = vunpack.c.l.b16 %v3512
        %v4585 = vunpack.c.l.b16 %v3513
        %v4586 = vunpack.c.l.b16 %v3514
        %v4587 = vunpack.c.l.b16 %v3515
        %v4588 = vunpack.c.l.b16 %v3516
        %v4589 = vunpack.c.l.b16 %v3517
        %v4590 = vunpack.c.l.b16 %v3518
        %v4591 = vunpack.c.l.b16 %v3519
        %v4592 = vunpack.c.l.b16 %v3520
        %v4593 = vunpack.c.l.b16 %v3521
        %v4594 = vunpack.c.l.b16 %v3522
        %v4595 = vunpack.c.l.b16 %v3523
        %v4596 = vunpack.c.l.b16 %v3524
        %v4597 = vunpack.c.l.b16 %v3525
        %v4598 = vunpack.c.l.b16 %v3526
        %v4599 = vunpack.c.l.b16 %v3527
        %v4600 = vunpack.c.l.b16 %v3528
        %v4601 = vunpack.c.l.b16 %v3529
        %v4602 = vunpack.c.l.b16 %v3530
        %v4603 = vunpack.c.l.b16 %v3531
        %v4604 = vunpack.c.l.b16 %v3532
        %v4605 = vunpack.c.l.b16 %v3533
        %v4606 = vunpack.c.l.b16 %v3534
        %v4607 = vpack.c.b16 %v4576, %v4575
        %v4608 = vpack.c.b16 %v4578, %v4577
        %v4609 = vpack.c.b16 %v4580, %v4579
        %v4610 = vpack.c.b16 %v4582, %v4581
        %v4611 = vpack.c.b16 %v4584, %v4583
        %v4612 = vpack.c.b16 %v4586, %v4585
        %v4613 = vpack.c.b16 %v4588, %v4587
        %v4614 = vpack.c.b16 %v4590, %v4589
        %v4615 = vpack.c.b16 %v4592, %v4591
        %v4616 = vpack.c.b16 %v4594, %v4593
        %v4617 = vpack.c.b16 %v4596, %v4595
        %v4618 = vpack.c.b16 %v4598, %v4597
        %v4619 = vpack.c.b16 %v4600, %v4599
        %v4620 = vpack.c.b16 %v4602, %v4601
        %v4621 = vpack.c.b16 %v4604, %v4603
        %v4622 = vpack.c.b16 %v4606, %v4605
        %4639 = vmatprep.subr.bf16.mxu0 0
        %4640 = vmatpush1.bf16.msra.mxu0 %v4607
        %4641 = vmatprep.subr.bf16.mxu0 0
        %4642 = vmatpush1.bf16.msra.mxu0 %v4608
        %4643 = vmatprep.subr.bf16.mxu0 0
        %4644 = vmatpush1.bf16.msra.mxu0 %v4609
        %4645 = vmatprep.subr.bf16.mxu0 0
        %4646 = vmatpush1.bf16.msra.mxu0 %v4610
        %4647 = vmatprep.subr.bf16.mxu0 0
        %4648 = vmatpush1.bf16.msra.mxu0 %v4611
        %4649 = vmatprep.subr.bf16.mxu0 0
        %4650 = vmatpush1.bf16.msra.mxu0 %v4612
        %4651 = vmatprep.subr.bf16.mxu0 0
        %4652 = vmatpush1.bf16.msra.mxu0 %v4613
        %4653 = vmatprep.subr.bf16.mxu0 0
        %4654 = vmatpush1.bf16.msra.mxu0 %v4614
        %4655 = vmatprep.subr.bf16.mxu0 0
        %4656 = vmatpush1.bf16.msra.mxu0 %v4615
        %4657 = vmatprep.subr.bf16.mxu0 0
        %4658 = vmatpush1.bf16.msra.mxu0 %v4616
        %4659 = vmatprep.subr.bf16.mxu0 0
        %4660 = vmatpush1.bf16.msra.mxu0 %v4617
        %4661 = vmatprep.subr.bf16.mxu0 0
        %4662 = vmatpush1.bf16.msra.mxu0 %v4618
        %4663 = vmatprep.subr.bf16.mxu0 0
        %4664 = vmatpush1.bf16.msra.mxu0 %v4619
        %4665 = vmatprep.subr.bf16.mxu0 0
        %4666 = vmatpush1.bf16.msra.mxu0 %v4620
        %4667 = vmatprep.subr.bf16.mxu0 0
        %4668 = vmatpush1.bf16.msra.mxu0 %v4621
        %4669 = vmatprep.subr.bf16.mxu0 0
        %4670 = vmatpush1.bf16.msra.mxu0 %v4622
        %4671 = vmatprep.mubr.bf16.mxu0 %v478
        %4672 = vmatmul.mubr.bf16.gmra.mrb[0].mxu0 %v477
        %v4673 = vpop.f32.mrb[0].mxu0
        %v4674 = vadd.f32 %v3582, %v4673
        %v4675 = vpop.f32.mrb[0].mxu0
        %v4676 = vpop.f32.mrb[0].mxu0
        %v4677 = vpop.f32.mrb[0].mxu0
        %4678 = vdwg.mxu0
        %v4679 = vpack.c.bf16 %v922, %v922
        %v4680 = vpack.c.bf16 %v1058, %v1058
        %v4681 = vpack.c.bf16 %v1194, %v1194
        %v4682 = vpack.c.bf16 %v1330, %v1330
        %v4683 = vpack.c.bf16 %v1466, %v1466
        %v4684 = vpack.c.bf16 %v1602, %v1602
        %v4685 = vpack.c.bf16 %v1738, %v1738
        %v4686 = vpack.c.bf16 %v1874, %v1874
        %v4687 = vpack.c.bf16 %v2322, %v2322
        %v4688 = vpack.c.bf16 %v2458, %v2458
        %v4689 = vpack.c.bf16 %v2594, %v2594
        %v4690 = vpack.c.bf16 %v2730, %v2730
        %v4691 = vpack.c.bf16 %v2866, %v2866
        %v4692 = vpack.c.bf16 %v3002, %v3002
        %v4693 = vpack.c.bf16 %v3138, %v3138
        %v4694 = vpack.c.bf16 %v3274, %v3274
        %vm4695 = vcmask 261120
        %v4697 = vsel %vm4695, %v4679, 0
        %v4700 = vsel %vm4695, %v4687, 0
        %4702 = vmatprep.subr.bf16.mxu0 0
        %4703 = vmatpush1.bf16.xpose.msra.mxu0 %v4700
        %4704 = vmatprep.subr.bf16.mxu0 0
        %4705 = vmatpush1.bf16.xpose.msra.mxu0 0
        %4706 = vmatprep.subr.bf16.mxu0 0
        %4707 = vmatpush1.bf16.xpose.msra.mxu0 0
        %4708 = vmatprep.subr.bf16.mxu0 0
        %4709 = vmatpush1.bf16.xpose.msra.mxu0 0
        %4710 = vmatprep.subr.bf16.mxu0 0
        %4711 = vmatpush1.bf16.xpose.msra.mxu0 0
        %4712 = vmatprep.subr.bf16.mxu0 0
        %4713 = vmatpush1.bf16.xpose.msra.mxu0 0
        %4714 = vmatprep.subr.bf16.mxu0 0
        %4715 = vmatpush1.bf16.xpose.msra.mxu0 0
        %4716 = vmatprep.subr.bf16.mxu0 0
        %4717 = vmatpush1.bf16.xpose.msra.mxu0 0
        %4718 = vmatprep.subr.bf16.mxu0 0
        %4719 = vmatpush1.bf16.xpose.msra.mxu0 0
        %4720 = vmatprep.subr.bf16.mxu0 0
        %4721 = vmatpush1.bf16.xpose.msra.mxu0 0
        %4722 = vmatprep.subr.bf16.mxu0 0
        %4723 = vmatpush1.bf16.xpose.msra.mxu0 0
        %4724 = vmatprep.subr.bf16.mxu0 0
        %4725 = vmatpush1.bf16.xpose.msra.mxu0 0
        %4726 = vmatprep.subr.bf16.mxu0 0
        %4727 = vmatpush1.bf16.xpose.msra.mxu0 0
        %4728 = vmatprep.subr.bf16.mxu0 0
        %4729 = vmatpush1.bf16.xpose.msra.mxu0 0
        %4730 = vmatprep.subr.bf16.mxu0 0
        %4731 = vmatpush1.bf16.xpose.msra.mxu0 0
        %4732 = vmatprep.subr.bf16.mxu0 0
        %4733 = vmatpush1.bf16.xpose.msra.mxu0 0
        %4734 = vmatprep.mubr.bf16.mxu0 0
        %4735 = vmatmul.mubr.bf16.gmra.mrb[0].mxu0 %v4697
        %v4736 = vpop.f32.mrb[0].mxu0
        %v4737 = vadd.f32 0.0, %v4736
        %v4738 = vpop.f32.mrb[0].mxu0
        %v4739 = vpop.f32.mrb[0].mxu0
        %v4740 = vpop.f32.mrb[0].mxu0
        %4741 = vdwg.mxu0
        %v4743 = vsel %vm4695, %v4680, 0
        %v4746 = vsel %vm4695, %v4688, 0
        %4748 = vmatprep.subr.bf16.mxu0 0
        %4749 = vmatpush1.bf16.xpose.msra.mxu0 %v4746
        %4750 = vmatprep.subr.bf16.mxu0 0
        %4751 = vmatpush1.bf16.xpose.msra.mxu0 0
        %4752 = vmatprep.subr.bf16.mxu0 0
        %4753 = vmatpush1.bf16.xpose.msra.mxu0 0
        %4754 = vmatprep.subr.bf16.mxu0 0
        %4755 = vmatpush1.bf16.xpose.msra.mxu0 0
        %4756 = vmatprep.subr.bf16.mxu0 0
        %4757 = vmatpush1.bf16.xpose.msra.mxu0 0
        %4758 = vmatprep.subr.bf16.mxu0 0
        %4759 = vmatpush1.bf16.xpose.msra.mxu0 0
        %4760 = vmatprep.subr.bf16.mxu0 0
        %4761 = vmatpush1.bf16.xpose.msra.mxu0 0
        %4762 = vmatprep.subr.bf16.mxu0 0
        %4763 = vmatpush1.bf16.xpose.msra.mxu0 0
        %4764 = vmatprep.subr.bf16.mxu0 0
        %4765 = vmatpush1.bf16.xpose.msra.mxu0 0
        %4766 = vmatprep.subr.bf16.mxu0 0
        %4767 = vmatpush1.bf16.xpose.msra.mxu0 0
        %4768 = vmatprep.subr.bf16.mxu0 0
        %4769 = vmatpush1.bf16.xpose.msra.mxu0 0
        %4770 = vmatprep.subr.bf16.mxu0 0
        %4771 = vmatpush1.bf16.xpose.msra.mxu0 0
        %4772 = vmatprep.subr.bf16.mxu0 0
        %4773 = vmatpush1.bf16.xpose.msra.mxu0 0
        %4774 = vmatprep.subr.bf16.mxu0 0
        %4775 = vmatpush1.bf16.xpose.msra.mxu0 0
        %4776 = vmatprep.subr.bf16.mxu0 0
        %4777 = vmatpush1.bf16.xpose.msra.mxu0 0
        %4778 = vmatprep.subr.bf16.mxu0 0
        %4779 = vmatpush1.bf16.xpose.msra.mxu0 0
        %4780 = vmatprep.mubr.bf16.mxu0 0
        %4781 = vmatmul.mubr.bf16.gmra.mrb[0].mxu0 %v4743
        %v4782 = vpop.f32.mrb[0].mxu0
        %v4783 = vadd.f32 0.0, %v4782
        %v4784 = vpop.f32.mrb[0].mxu0
        %v4785 = vpop.f32.mrb[0].mxu0
        %v4786 = vpop.f32.mrb[0].mxu0
        %4787 = vdwg.mxu0
        %v4789 = vsel %vm4695, %v4681, 0
        %v4792 = vsel %vm4695, %v4689, 0
        %4794 = vmatprep.subr.bf16.mxu0 0
        %4795 = vmatpush1.bf16.xpose.msra.mxu0 %v4792
        %4796 = vmatprep.subr.bf16.mxu0 0
        %4797 = vmatpush1.bf16.xpose.msra.mxu0 0
        %4798 = vmatprep.subr.bf16.mxu0 0
        %4799 = vmatpush1.bf16.xpose.msra.mxu0 0
        %4800 = vmatprep.subr.bf16.mxu0 0
        %4801 = vmatpush1.bf16.xpose.msra.mxu0 0
        %4802 = vmatprep.subr.bf16.mxu0 0
        %4803 = vmatpush1.bf16.xpose.msra.mxu0 0
        %4804 = vmatprep.subr.bf16.mxu0 0
        %4805 = vmatpush1.bf16.xpose.msra.mxu0 0
        %4806 = vmatprep.subr.bf16.mxu0 0
        %4807 = vmatpush1.bf16.xpose.msra.mxu0 0
        %4808 = vmatprep.subr.bf16.mxu0 0
        %4809 = vmatpush1.bf16.xpose.msra.mxu0 0
        %4810 = vmatprep.subr.bf16.mxu0 0
        %4811 = vmatpush1.bf16.xpose.msra.mxu0 0
        %4812 = vmatprep.subr.bf16.mxu0 0
        %4813 = vmatpush1.bf16.xpose.msra.mxu0 0
        %4814 = vmatprep.subr.bf16.mxu0 0
        %4815 = vmatpush1.bf16.xpose.msra.mxu0 0
        %4816 = vmatprep.subr.bf16.mxu0 0
        %4817 = vmatpush1.bf16.xpose.msra.mxu0 0
        %4818 = vmatprep.subr.bf16.mxu0 0
        %4819 = vmatpush1.bf16.xpose.msra.mxu0 0
        %4820 = vmatprep.subr.bf16.mxu0 0
        %4821 = vmatpush1.bf16.xpose.msra.mxu0 0
        %4822 = vmatprep.subr.bf16.mxu0 0
        %4823 = vmatpush1.bf16.xpose.msra.mxu0 0
        %4824 = vmatprep.subr.bf16.mxu0 0
        %4825 = vmatpush1.bf16.xpose.msra.mxu0 0
        %4826 = vmatprep.mubr.bf16.mxu0 0
        %4827 = vmatmul.mubr.bf16.gmra.mrb[0].mxu0 %v4789
        %v4828 = vpop.f32.mrb[0].mxu0
        %v4829 = vadd.f32 0.0, %v4828
        %v4830 = vpop.f32.mrb[0].mxu0
        %v4831 = vpop.f32.mrb[0].mxu0
        %v4832 = vpop.f32.mrb[0].mxu0
        %4833 = vdwg.mxu0
        %v4835 = vsel %vm4695, %v4682, 0
        %v4838 = vsel %vm4695, %v4690, 0
        %4840 = vmatprep.subr.bf16.mxu0 0
        %4841 = vmatpush1.bf16.xpose.msra.mxu0 %v4838
        %4842 = vmatprep.subr.bf16.mxu0 0
        %4843 = vmatpush1.bf16.xpose.msra.mxu0 0
        %4844 = vmatprep.subr.bf16.mxu0 0
        %4845 = vmatpush1.bf16.xpose.msra.mxu0 0
        %4846 = vmatprep.subr.bf16.mxu0 0
        %4847 = vmatpush1.bf16.xpose.msra.mxu0 0
        %4848 = vmatprep.subr.bf16.mxu0 0
        %4849 = vmatpush1.bf16.xpose.msra.mxu0 0
        %4850 = vmatprep.subr.bf16.mxu0 0
        %4851 = vmatpush1.bf16.xpose.msra.mxu0 0
        %4852 = vmatprep.subr.bf16.mxu0 0
        %4853 = vmatpush1.bf16.xpose.msra.mxu0 0
        %4854 = vmatprep.subr.bf16.mxu0 0
        %4855 = vmatpush1.bf16.xpose.msra.mxu0 0
        %4856 = vmatprep.subr.bf16.mxu0 0
        %4857 = vmatpush1.bf16.xpose.msra.mxu0 0
        %4858 = vmatprep.subr.bf16.mxu0 0
        %4859 = vmatpush1.bf16.xpose.msra.mxu0 0
        %4860 = vmatprep.subr.bf16.mxu0 0
        %4861 = vmatpush1.bf16.xpose.msra.mxu0 0
        %4862 = vmatprep.subr.bf16.mxu0 0
        %4863 = vmatpush1.bf16.xpose.msra.mxu0 0
        %4864 = vmatprep.subr.bf16.mxu0 0
        %4865 = vmatpush1.bf16.xpose.msra.mxu0 0
        %4866 = vmatprep.subr.bf16.mxu0 0
        %4867 = vmatpush1.bf16.xpose.msra.mxu0 0
        %4868 = vmatprep.subr.bf16.mxu0 0
        %4869 = vmatpush1.bf16.xpose.msra.mxu0 0
        %4870 = vmatprep.subr.bf16.mxu0 0
        %4871 = vmatpush1.bf16.xpose.msra.mxu0 0
        %4872 = vmatprep.mubr.bf16.mxu0 0
        %4873 = vmatmul.mubr.bf16.gmra.mrb[0].mxu0 %v4835
        %v4874 = vpop.f32.mrb[0].mxu0
        %v4875 = vadd.f32 0.0, %v4874
        %v4876 = vpop.f32.mrb[0].mxu0
        %v4877 = vpop.f32.mrb[0].mxu0
        %v4878 = vpop.f32.mrb[0].mxu0
        %4879 = vdwg.mxu0
        %v4881 = vsel %vm4695, %v4683, 0
        %v4884 = vsel %vm4695, %v4691, 0
        %4886 = vmatprep.subr.bf16.mxu0 0
        %4887 = vmatpush1.bf16.xpose.msra.mxu0 %v4884
        %4888 = vmatprep.subr.bf16.mxu0 0
        %4889 = vmatpush1.bf16.xpose.msra.mxu0 0
        %4890 = vmatprep.subr.bf16.mxu0 0
        %4891 = vmatpush1.bf16.xpose.msra.mxu0 0
        %4892 = vmatprep.subr.bf16.mxu0 0
        %4893 = vmatpush1.bf16.xpose.msra.mxu0 0
        %4894 = vmatprep.subr.bf16.mxu0 0
        %4895 = vmatpush1.bf16.xpose.msra.mxu0 0
        %4896 = vmatprep.subr.bf16.mxu0 0
        %4897 = vmatpush1.bf16.xpose.msra.mxu0 0
        %4898 = vmatprep.subr.bf16.mxu0 0
        %4899 = vmatpush1.bf16.xpose.msra.mxu0 0
        %4900 = vmatprep.subr.bf16.mxu0 0
        %4901 = vmatpush1.bf16.xpose.msra.mxu0 0
        %4902 = vmatprep.subr.bf16.mxu0 0
        %4903 = vmatpush1.bf16.xpose.msra.mxu0 0
        %4904 = vmatprep.subr.bf16.mxu0 0
        %4905 = vmatpush1.bf16.xpose.msra.mxu0 0
        %4906 = vmatprep.subr.bf16.mxu0 0
        %4907 = vmatpush1.bf16.xpose.msra.mxu0 0
        %4908 = vmatprep.subr.bf16.mxu0 0
        %4909 = vmatpush1.bf16.xpose.msra.mxu0 0
        %4910 = vmatprep.subr.bf16.mxu0 0
        %4911 = vmatpush1.bf16.xpose.msra.mxu0 0
        %4912 = vmatprep.subr.bf16.mxu0 0
        %4913 = vmatpush1.bf16.xpose.msra.mxu0 0
        %4914 = vmatprep.subr.bf16.mxu0 0
        %4915 = vmatpush1.bf16.xpose.msra.mxu0 0
        %4916 = vmatprep.subr.bf16.mxu0 0
        %4917 = vmatpush1.bf16.xpose.msra.mxu0 0
        %4918 = vmatprep.mubr.bf16.mxu0 0
        %4919 = vmatmul.mubr.bf16.gmra.mrb[0].mxu0 %v4881
        %v4920 = vpop.f32.mrb[0].mxu0
        %v4921 = vadd.f32 0.0, %v4920
        %v4922 = vpop.f32.mrb[0].mxu0
        %v4923 = vpop.f32.mrb[0].mxu0
        %v4924 = vpop.f32.mrb[0].mxu0
        %4925 = vdwg.mxu0
        %v4927 = vsel %vm4695, %v4684, 0
        %v4930 = vsel %vm4695, %v4692, 0
        %4932 = vmatprep.subr.bf16.mxu0 0
        %4933 = vmatpush1.bf16.xpose.msra.mxu0 %v4930
        %4934 = vmatprep.subr.bf16.mxu0 0
        %4935 = vmatpush1.bf16.xpose.msra.mxu0 0
        %4936 = vmatprep.subr.bf16.mxu0 0
        %4937 = vmatpush1.bf16.xpose.msra.mxu0 0
        %4938 = vmatprep.subr.bf16.mxu0 0
        %4939 = vmatpush1.bf16.xpose.msra.mxu0 0
        %4940 = vmatprep.subr.bf16.mxu0 0
        %4941 = vmatpush1.bf16.xpose.msra.mxu0 0
        %4942 = vmatprep.subr.bf16.mxu0 0
        %4943 = vmatpush1.bf16.xpose.msra.mxu0 0
        %4944 = vmatprep.subr.bf16.mxu0 0
        %4945 = vmatpush1.bf16.xpose.msra.mxu0 0
        %4946 = vmatprep.subr.bf16.mxu0 0
        %4947 = vmatpush1.bf16.xpose.msra.mxu0 0
        %4948 = vmatprep.subr.bf16.mxu0 0
        %4949 = vmatpush1.bf16.xpose.msra.mxu0 0
        %4950 = vmatprep.subr.bf16.mxu0 0
        %4951 = vmatpush1.bf16.xpose.msra.mxu0 0
        %4952 = vmatprep.subr.bf16.mxu0 0
        %4953 = vmatpush1.bf16.xpose.msra.mxu0 0
        %4954 = vmatprep.subr.bf16.mxu0 0
        %4955 = vmatpush1.bf16.xpose.msra.mxu0 0
        %4956 = vmatprep.subr.bf16.mxu0 0
        %4957 = vmatpush1.bf16.xpose.msra.mxu0 0
        %4958 = vmatprep.subr.bf16.mxu0 0
        %4959 = vmatpush1.bf16.xpose.msra.mxu0 0
        %4960 = vmatprep.subr.bf16.mxu0 0
        %4961 = vmatpush1.bf16.xpose.msra.mxu0 0
        %4962 = vmatprep.subr.bf16.mxu0 0
        %4963 = vmatpush1.bf16.xpose.msra.mxu0 0
        %4964 = vmatprep.mubr.bf16.mxu0 0
        %4965 = vmatmul.mubr.bf16.gmra.mrb[0].mxu0 %v4927
        %v4966 = vpop.f32.mrb[0].mxu0
        %v4967 = vadd.f32 0.0, %v4966
        %v4968 = vpop.f32.mrb[0].mxu0
        %v4969 = vpop.f32.mrb[0].mxu0
        %v4970 = vpop.f32.mrb[0].mxu0
        %4971 = vdwg.mxu0
        %v4973 = vsel %vm4695, %v4685, 0
        %v4976 = vsel %vm4695, %v4693, 0
        %4978 = vmatprep.subr.bf16.mxu0 0
        %4979 = vmatpush1.bf16.xpose.msra.mxu0 %v4976
        %4980 = vmatprep.subr.bf16.mxu0 0
        %4981 = vmatpush1.bf16.xpose.msra.mxu0 0
        %4982 = vmatprep.subr.bf16.mxu0 0
        %4983 = vmatpush1.bf16.xpose.msra.mxu0 0
        %4984 = vmatprep.subr.bf16.mxu0 0
        %4985 = vmatpush1.bf16.xpose.msra.mxu0 0
        %4986 = vmatprep.subr.bf16.mxu0 0
        %4987 = vmatpush1.bf16.xpose.msra.mxu0 0
        %4988 = vmatprep.subr.bf16.mxu0 0
        %4989 = vmatpush1.bf16.xpose.msra.mxu0 0
        %4990 = vmatprep.subr.bf16.mxu0 0
        %4991 = vmatpush1.bf16.xpose.msra.mxu0 0
        %4992 = vmatprep.subr.bf16.mxu0 0
        %4993 = vmatpush1.bf16.xpose.msra.mxu0 0
        %4994 = vmatprep.subr.bf16.mxu0 0
        %4995 = vmatpush1.bf16.xpose.msra.mxu0 0
        %4996 = vmatprep.subr.bf16.mxu0 0
        %4997 = vmatpush1.bf16.xpose.msra.mxu0 0
        %4998 = vmatprep.subr.bf16.mxu0 0
        %4999 = vmatpush1.bf16.xpose.msra.mxu0 0
        %5000 = vmatprep.subr.bf16.mxu0 0
        %5001 = vmatpush1.bf16.xpose.msra.mxu0 0
        %5002 = vmatprep.subr.bf16.mxu0 0
        %5003 = vmatpush1.bf16.xpose.msra.mxu0 0
        %5004 = vmatprep.subr.bf16.mxu0 0
        %5005 = vmatpush1.bf16.xpose.msra.mxu0 0
        %5006 = vmatprep.subr.bf16.mxu0 0
        %5007 = vmatpush1.bf16.xpose.msra.mxu0 0
        %5008 = vmatprep.subr.bf16.mxu0 0
        %5009 = vmatpush1.bf16.xpose.msra.mxu0 0
        %5010 = vmatprep.mubr.bf16.mxu0 0
        %5011 = vmatmul.mubr.bf16.gmra.mrb[0].mxu0 %v4973
        %v5012 = vpop.f32.mrb[0].mxu0
        %v5013 = vadd.f32 0.0, %v5012
        %v5014 = vpop.f32.mrb[0].mxu0
        %v5015 = vpop.f32.mrb[0].mxu0
        %v5016 = vpop.f32.mrb[0].mxu0
        %5017 = vdwg.mxu0
        %v5019 = vsel %vm4695, %v4686, 0
        %v5022 = vsel %vm4695, %v4694, 0
        %5024 = vmatprep.subr.bf16.mxu0 0
        %5025 = vmatpush1.bf16.xpose.msra.mxu0 %v5022
        %5026 = vmatprep.subr.bf16.mxu0 0
        %5027 = vmatpush1.bf16.xpose.msra.mxu0 0
        %5028 = vmatprep.subr.bf16.mxu0 0
        %5029 = vmatpush1.bf16.xpose.msra.mxu0 0
        %5030 = vmatprep.subr.bf16.mxu0 0
        %5031 = vmatpush1.bf16.xpose.msra.mxu0 0
        %5032 = vmatprep.subr.bf16.mxu0 0
        %5033 = vmatpush1.bf16.xpose.msra.mxu0 0
        %5034 = vmatprep.subr.bf16.mxu0 0
        %5035 = vmatpush1.bf16.xpose.msra.mxu0 0
        %5036 = vmatprep.subr.bf16.mxu0 0
        %5037 = vmatpush1.bf16.xpose.msra.mxu0 0
        %5038 = vmatprep.subr.bf16.mxu0 0
        %5039 = vmatpush1.bf16.xpose.msra.mxu0 0
        %5040 = vmatprep.subr.bf16.mxu0 0
        %5041 = vmatpush1.bf16.xpose.msra.mxu0 0
        %5042 = vmatprep.subr.bf16.mxu0 0
        %5043 = vmatpush1.bf16.xpose.msra.mxu0 0
        %5044 = vmatprep.subr.bf16.mxu0 0
        %5045 = vmatpush1.bf16.xpose.msra.mxu0 0
        %5046 = vmatprep.subr.bf16.mxu0 0
        %5047 = vmatpush1.bf16.xpose.msra.mxu0 0
        %5048 = vmatprep.subr.bf16.mxu0 0
        %5049 = vmatpush1.bf16.xpose.msra.mxu0 0
        %5050 = vmatprep.subr.bf16.mxu0 0
        %5051 = vmatpush1.bf16.xpose.msra.mxu0 0
        %5052 = vmatprep.subr.bf16.mxu0 0
        %5053 = vmatpush1.bf16.xpose.msra.mxu0 0
        %5054 = vmatprep.subr.bf16.mxu0 0
        %5055 = vmatpush1.bf16.xpose.msra.mxu0 0
        %5056 = vmatprep.mubr.bf16.mxu0 0
        %5057 = vmatmul.mubr.bf16.gmra.mrb[0].mxu0 %v5019
        %v5058 = vpop.f32.mrb[0].mxu0
        %v5059 = vadd.f32 0.0, %v5058
        %v5060 = vpop.f32.mrb[0].mxu0
        %v5061 = vpop.f32.mrb[0].mxu0
        %v5062 = vpop.f32.mrb[0].mxu0
        %5063 = vdwg.mxu0
        %v5064 = vmul.f32 %v4737, 0.17677669
        %v5065 = vmul.f32 %v4783, 0.17677669
        %v5066 = vmul.f32 %v4829, 0.17677669
        %v5067 = vmul.f32 %v4875, 0.17677669
        %v5068 = vmul.f32 %v4921, 0.17677669
        %v5069 = vmul.f32 %v4967, 0.17677669
        %v5070 = vmul.f32 %v5013, 0.17677669
        %v5071 = vmul.f32 %v5059, 0.17677669
        %v5072 = vld [vmem:[%s465] sm:$0x1]
        %v5073 = vmul.f32 %v5072, -1e+09
        %v5075 = vlaneseq
        %v5076 = vshrl.u32 %v5075, 7
        %v5077 = vsub.s32 0, %v5076
        %v5078 = vrot.slane %v5073, %v5077
        %v5080 = vadd.f32 %v5064, %v5078
        %v5081 = vadd.f32 %v5065, %v5078
        %v5082 = vadd.f32 %v5066, %v5078
        %v5083 = vadd.f32 %v5067, %v5078
        %v5084 = vadd.f32 %v5068, %v5078
        %v5085 = vadd.f32 %v5069, %v5078
        %v5086 = vadd.f32 %v5070, %v5078
        %v5087 = vadd.f32 %v5071, %v5078
        %vm5088 = vcmask 64512
        %v5089 = vsel %vm5088, %v5080, -inf
        %5090 = vmax.xlane.f32.xlu0 %v5089
        %v5091 = vpop.xlane.xlu0 %5090
        %v5092 = vsel %vm5088, %v5081, -inf
        %5093 = vmax.xlane.f32.xlu0 %v5092
        %v5094 = vpop.xlane.xlu0 %5093
        %v5095 = vsel %vm5088, %v5082, -inf
        %5096 = vmax.xlane.f32.xlu0 %v5095
        %v5097 = vpop.xlane.xlu0 %5096
        %v5098 = vsel %vm5088, %v5083, -inf
        %5099 = vmax.xlane.f32.xlu0 %v5098
        %v5100 = vpop.xlane.xlu0 %5099
        %v5101 = vsel %vm5088, %v5084, -inf
        %5102 = vmax.xlane.f32.xlu0 %v5101
        %v5103 = vpop.xlane.xlu0 %5102
        %v5104 = vsel %vm5088, %v5085, -inf
        %5105 = vmax.xlane.f32.xlu0 %v5104
        %v5106 = vpop.xlane.xlu0 %5105
        %v5107 = vsel %vm5088, %v5086, -inf
        %5108 = vmax.xlane.f32.xlu0 %v5107
        %v5109 = vpop.xlane.xlu0 %5108
        %v5110 = vsel %vm5088, %v5087, -inf
        %5111 = vmax.xlane.f32.xlu0 %v5110
        %v5112 = vpop.xlane.xlu0 %5111
        %v5113 = vsub.f32 %v5080, %v5091
        %v5114 = vsub.f32 %v5081, %v5094
        %v5115 = vsub.f32 %v5082, %v5097
        %v5116 = vsub.f32 %v5083, %v5100
        %v5117 = vsub.f32 %v5084, %v5103
        %v5118 = vsub.f32 %v5085, %v5106
        %v5119 = vsub.f32 %v5086, %v5109
        %v5120 = vsub.f32 %v5087, %v5112
        %v5121 = vmul.f32 %v5113, 1.442695
        %v5122 = vpow.pop %v5121
        %v5123 = vmul.f32 %v5114, 1.442695
        %v5124 = vpow.pop %v5123
        %v5125 = vmul.f32 %v5115, 1.442695
        %v5126 = vpow.pop %v5125
        %v5127 = vmul.f32 %v5116, 1.442695
        %v5128 = vpow.pop %v5127
        %v5129 = vmul.f32 %v5117, 1.442695
        %v5130 = vpow.pop %v5129
        %v5131 = vmul.f32 %v5118, 1.442695
        %v5132 = vpow.pop %v5131
        %v5133 = vmul.f32 %v5119, 1.442695
        %v5134 = vpow.pop %v5133
        %v5135 = vmul.f32 %v5120, 1.442695
        %v5136 = vpow.pop %v5135
        %v5137 = vsel %vm5088, %v5122, 0.0
        %5138 = vadd.xlane.f32.xlu0 %v5137
        %v5139 = vpop.xlane.xlu0 %5138
        %v5140 = vsel %vm5088, %v5124, 0.0
        %5141 = vadd.xlane.f32.xlu0 %v5140
        %v5142 = vpop.xlane.xlu0 %5141
        %v5143 = vsel %vm5088, %v5126, 0.0
        %5144 = vadd.xlane.f32.xlu0 %v5143
        %v5145 = vpop.xlane.xlu0 %5144
        %v5146 = vsel %vm5088, %v5128, 0.0
        %5147 = vadd.xlane.f32.xlu0 %v5146
        %v5148 = vpop.xlane.xlu0 %5147
        %v5149 = vsel %vm5088, %v5130, 0.0
        %5150 = vadd.xlane.f32.xlu0 %v5149
        %v5151 = vpop.xlane.xlu0 %5150
        %v5152 = vsel %vm5088, %v5132, 0.0
        %5153 = vadd.xlane.f32.xlu0 %v5152
        %v5154 = vpop.xlane.xlu0 %5153
        %v5155 = vsel %vm5088, %v5134, 0.0
        %5156 = vadd.xlane.f32.xlu0 %v5155
        %v5157 = vpop.xlane.xlu0 %5156
        %v5158 = vsel %vm5088, %v5136, 0.0
        %5159 = vadd.xlane.f32.xlu0 %v5158
        %v5160 = vpop.xlane.xlu0 %5159
        %v5161 = vrcp.pop %v5139
        %v5162 = vrcp.pop %v5142
        %v5163 = vrcp.pop %v5145
        %v5164 = vrcp.pop %v5148
        %v5165 = vrcp.pop %v5151
        %v5166 = vrcp.pop %v5154
        %v5167 = vrcp.pop %v5157
        %v5168 = vrcp.pop %v5160
        %v5169 = vmul.f32 %v5122, %v5161
        %v5170 = vmul.f32 %v5124, %v5162
        %v5171 = vmul.f32 %v5126, %v5163
        %v5172 = vmul.f32 %v5128, %v5164
        %v5173 = vmul.f32 %v5130, %v5165
        %v5174 = vmul.f32 %v5132, %v5166
        %v5175 = vmul.f32 %v5134, %v5167
        %v5176 = vmul.f32 %v5136, %v5168
        %v5177 = vpack.c.bf16 %v5169, %v5169
        %v5178 = vpack.c.bf16 %v5170, %v5170
        %v5179 = vpack.c.bf16 %v5171, %v5171
        %v5180 = vpack.c.bf16 %v5172, %v5172
        %v5181 = vpack.c.bf16 %v5173, %v5173
        %v5182 = vpack.c.bf16 %v5174, %v5174
        %v5183 = vpack.c.bf16 %v5175, %v5175
        %v5184 = vpack.c.bf16 %v5176, %v5176
        %v5185 = vpack.c.bf16 %v3722, %v3722
        %v5186 = vpack.c.bf16 %v3858, %v3858
        %v5187 = vpack.c.bf16 %v3994, %v3994
        %v5188 = vpack.c.bf16 %v4130, %v4130
        %v5189 = vpack.c.bf16 %v4266, %v4266
        %v5190 = vpack.c.bf16 %v4402, %v4402
        %v5191 = vpack.c.bf16 %v4538, %v4538
        %v5192 = vpack.c.bf16 %v4674, %v4674
        %v5194 = vsel %vm5088, %v5177, 0
        %vm5196 = vcmask 1043456
        %v5198 = vsel %vm5196, %v5185, 0
        %5200 = vmatprep.subr.bf16.mxu0 0
        %5201 = vmatpush1.bf16.msra.mxu0 %v5198
        %5202 = vmatprep.subr.bf16.mxu0 0
        %5203 = vmatpush1.bf16.msra.mxu0 0
        %5204 = vmatprep.subr.bf16.mxu0 0
        %5205 = vmatpush1.bf16.msra.mxu0 0
        %5206 = vmatprep.subr.bf16.mxu0 0
        %5207 = vmatpush1.bf16.msra.mxu0 0
        %5208 = vmatprep.subr.bf16.mxu0 0
        %5209 = vmatpush1.bf16.msra.mxu0 0
        %5210 = vmatprep.subr.bf16.mxu0 0
        %5211 = vmatpush1.bf16.msra.mxu0 0
        %5212 = vmatprep.subr.bf16.mxu0 0
        %5213 = vmatpush1.bf16.msra.mxu0 0
        %5214 = vmatprep.subr.bf16.mxu0 0
        %5215 = vmatpush1.bf16.msra.mxu0 0
        %5216 = vmatprep.subr.bf16.mxu0 0
        %5217 = vmatpush1.bf16.msra.mxu0 0
        %5218 = vmatprep.subr.bf16.mxu0 0
        %5219 = vmatpush1.bf16.msra.mxu0 0
        %5220 = vmatprep.subr.bf16.mxu0 0
        %5221 = vmatpush1.bf16.msra.mxu0 0
        %5222 = vmatprep.subr.bf16.mxu0 0
        %5223 = vmatpush1.bf16.msra.mxu0 0
        %5224 = vmatprep.subr.bf16.mxu0 0
        %5225 = vmatpush1.bf16.msra.mxu0 0
        %5226 = vmatprep.subr.bf16.mxu0 0
        %5227 = vmatpush1.bf16.msra.mxu0 0
        %5228 = vmatprep.subr.bf16.mxu0 0
        %5229 = vmatpush1.bf16.msra.mxu0 0
        %5230 = vmatprep.subr.bf16.mxu0 0
        %5231 = vmatpush1.bf16.msra.mxu0 0
        %5232 = vmatprep.mubr.bf16.mxu0 0
        %5233 = vmatmul.mubr.bf16.gmra.mrb[0].mxu0 %v5194
        %v5234 = vpop.f32.mrb[0].mxu0
        %v5235 = vadd.f32 0.0, %v5234
        %v5236 = vpop.f32.mrb[0].mxu0
        %v5237 = vpop.f32.mrb[0].mxu0
        %v5238 = vpop.f32.mrb[0].mxu0
        %5239 = vdwg.mxu0
        %v5241 = vsel %vm5088, %v5178, 0
        %v5244 = vsel %vm5196, %v5186, 0
        %5246 = vmatprep.subr.bf16.mxu0 0
        %5247 = vmatpush1.bf16.msra.mxu0 %v5244
        %5248 = vmatprep.subr.bf16.mxu0 0
        %5249 = vmatpush1.bf16.msra.mxu0 0
        %5250 = vmatprep.subr.bf16.mxu0 0
        %5251 = vmatpush1.bf16.msra.mxu0 0
        %5252 = vmatprep.subr.bf16.mxu0 0
        %5253 = vmatpush1.bf16.msra.mxu0 0
        %5254 = vmatprep.subr.bf16.mxu0 0
        %5255 = vmatpush1.bf16.msra.mxu0 0
        %5256 = vmatprep.subr.bf16.mxu0 0
        %5257 = vmatpush1.bf16.msra.mxu0 0
        %5258 = vmatprep.subr.bf16.mxu0 0
        %5259 = vmatpush1.bf16.msra.mxu0 0
        %5260 = vmatprep.subr.bf16.mxu0 0
        %5261 = vmatpush1.bf16.msra.mxu0 0
        %5262 = vmatprep.subr.bf16.mxu0 0
        %5263 = vmatpush1.bf16.msra.mxu0 0
        %5264 = vmatprep.subr.bf16.mxu0 0
        %5265 = vmatpush1.bf16.msra.mxu0 0
        %5266 = vmatprep.subr.bf16.mxu0 0
        %5267 = vmatpush1.bf16.msra.mxu0 0
        %5268 = vmatprep.subr.bf16.mxu0 0
        %5269 = vmatpush1.bf16.msra.mxu0 0
        %5270 = vmatprep.subr.bf16.mxu0 0
        %5271 = vmatpush1.bf16.msra.mxu0 0
        %5272 = vmatprep.subr.bf16.mxu0 0
        %5273 = vmatpush1.bf16.msra.mxu0 0
        %5274 = vmatprep.subr.bf16.mxu0 0
        %5275 = vmatpush1.bf16.msra.mxu0 0
        %5276 = vmatprep.subr.bf16.mxu0 0
        %5277 = vmatpush1.bf16.msra.mxu0 0
        %5278 = vmatprep.mubr.bf16.mxu0 0
        %5279 = vmatmul.mubr.bf16.gmra.mrb[0].mxu0 %v5241
        %v5280 = vpop.f32.mrb[0].mxu0
        %v5281 = vadd.f32 0.0, %v5280
        %v5282 = vpop.f32.mrb[0].mxu0
        %v5283 = vpop.f32.mrb[0].mxu0
        %v5284 = vpop.f32.mrb[0].mxu0
        %5285 = vdwg.mxu0
        %v5287 = vsel %vm5088, %v5179, 0
        %v5290 = vsel %vm5196, %v5187, 0
        %5292 = vmatprep.subr.bf16.mxu0 0
        %5293 = vmatpush1.bf16.msra.mxu0 %v5290
        %5294 = vmatprep.subr.bf16.mxu0 0
        %5295 = vmatpush1.bf16.msra.mxu0 0
        %5296 = vmatprep.subr.bf16.mxu0 0
        %5297 = vmatpush1.bf16.msra.mxu0 0
        %5298 = vmatprep.subr.bf16.mxu0 0
        %5299 = vmatpush1.bf16.msra.mxu0 0
        %5300 = vmatprep.subr.bf16.mxu0 0
        %5301 = vmatpush1.bf16.msra.mxu0 0
        %5302 = vmatprep.subr.bf16.mxu0 0
        %5303 = vmatpush1.bf16.msra.mxu0 0
        %5304 = vmatprep.subr.bf16.mxu0 0
        %5305 = vmatpush1.bf16.msra.mxu0 0
        %5306 = vmatprep.subr.bf16.mxu0 0
        %5307 = vmatpush1.bf16.msra.mxu0 0
        %5308 = vmatprep.subr.bf16.mxu0 0
        %5309 = vmatpush1.bf16.msra.mxu0 0
        %5310 = vmatprep.subr.bf16.mxu0 0
        %5311 = vmatpush1.bf16.msra.mxu0 0
        %5312 = vmatprep.subr.bf16.mxu0 0
        %5313 = vmatpush1.bf16.msra.mxu0 0
        %5314 = vmatprep.subr.bf16.mxu0 0
        %5315 = vmatpush1.bf16.msra.mxu0 0
        %5316 = vmatprep.subr.bf16.mxu0 0
        %5317 = vmatpush1.bf16.msra.mxu0 0
        %5318 = vmatprep.subr.bf16.mxu0 0
        %5319 = vmatpush1.bf16.msra.mxu0 0
        %5320 = vmatprep.subr.bf16.mxu0 0
        %5321 = vmatpush1.bf16.msra.mxu0 0
        %5322 = vmatprep.subr.bf16.mxu0 0
        %5323 = vmatpush1.bf16.msra.mxu0 0
        %5324 = vmatprep.mubr.bf16.mxu0 0
        %5325 = vmatmul.mubr.bf16.gmra.mrb[0].mxu0 %v5287
        %v5326 = vpop.f32.mrb[0].mxu0
        %v5327 = vadd.f32 0.0, %v5326
        %v5328 = vpop.f32.mrb[0].mxu0
        %v5329 = vpop.f32.mrb[0].mxu0
        %v5330 = vpop.f32.mrb[0].mxu0
        %5331 = vdwg.mxu0
        %v5333 = vsel %vm5088, %v5180, 0
        %v5336 = vsel %vm5196, %v5188, 0
        %5338 = vmatprep.subr.bf16.mxu0 0
        %5339 = vmatpush1.bf16.msra.mxu0 %v5336
        %5340 = vmatprep.subr.bf16.mxu0 0
        %5341 = vmatpush1.bf16.msra.mxu0 0
        %5342 = vmatprep.subr.bf16.mxu0 0
        %5343 = vmatpush1.bf16.msra.mxu0 0
        %5344 = vmatprep.subr.bf16.mxu0 0
        %5345 = vmatpush1.bf16.msra.mxu0 0
        %5346 = vmatprep.subr.bf16.mxu0 0
        %5347 = vmatpush1.bf16.msra.mxu0 0
        %5348 = vmatprep.subr.bf16.mxu0 0
        %5349 = vmatpush1.bf16.msra.mxu0 0
        %5350 = vmatprep.subr.bf16.mxu0 0
        %5351 = vmatpush1.bf16.msra.mxu0 0
        %5352 = vmatprep.subr.bf16.mxu0 0
        %5353 = vmatpush1.bf16.msra.mxu0 0
        %5354 = vmatprep.subr.bf16.mxu0 0
        %5355 = vmatpush1.bf16.msra.mxu0 0
        %5356 = vmatprep.subr.bf16.mxu0 0
        %5357 = vmatpush1.bf16.msra.mxu0 0
        %5358 = vmatprep.subr.bf16.mxu0 0
        %5359 = vmatpush1.bf16.msra.mxu0 0
        %5360 = vmatprep.subr.bf16.mxu0 0
        %5361 = vmatpush1.bf16.msra.mxu0 0
        %5362 = vmatprep.subr.bf16.mxu0 0
        %5363 = vmatpush1.bf16.msra.mxu0 0
        %5364 = vmatprep.subr.bf16.mxu0 0
        %5365 = vmatpush1.bf16.msra.mxu0 0
        %5366 = vmatprep.subr.bf16.mxu0 0
        %5367 = vmatpush1.bf16.msra.mxu0 0
        %5368 = vmatprep.subr.bf16.mxu0 0
        %5369 = vmatpush1.bf16.msra.mxu0 0
        %5370 = vmatprep.mubr.bf16.mxu0 0
        %5371 = vmatmul.mubr.bf16.gmra.mrb[0].mxu0 %v5333
        %v5372 = vpop.f32.mrb[0].mxu0
        %v5373 = vadd.f32 0.0, %v5372
        %v5374 = vpop.f32.mrb[0].mxu0
        %v5375 = vpop.f32.mrb[0].mxu0
        %v5376 = vpop.f32.mrb[0].mxu0
        %5377 = vdwg.mxu0
        %v5379 = vsel %vm5088, %v5181, 0
        %v5382 = vsel %vm5196, %v5189, 0
        %5384 = vmatprep.subr.bf16.mxu0 0
        %5385 = vmatpush1.bf16.msra.mxu0 %v5382
        %5386 = vmatprep.subr.bf16.mxu0 0
        %5387 = vmatpush1.bf16.msra.mxu0 0
        %5388 = vmatprep.subr.bf16.mxu0 0
        %5389 = vmatpush1.bf16.msra.mxu0 0
        %5390 = vmatprep.subr.bf16.mxu0 0
        %5391 = vmatpush1.bf16.msra.mxu0 0
        %5392 = vmatprep.subr.bf16.mxu0 0
        %5393 = vmatpush1.bf16.msra.mxu0 0
        %5394 = vmatprep.subr.bf16.mxu0 0
        %5395 = vmatpush1.bf16.msra.mxu0 0
        %5396 = vmatprep.subr.bf16.mxu0 0
        %5397 = vmatpush1.bf16.msra.mxu0 0
        %5398 = vmatprep.subr.bf16.mxu0 0
        %5399 = vmatpush1.bf16.msra.mxu0 0
        %5400 = vmatprep.subr.bf16.mxu0 0
        %5401 = vmatpush1.bf16.msra.mxu0 0
        %5402 = vmatprep.subr.bf16.mxu0 0
        %5403 = vmatpush1.bf16.msra.mxu0 0
        %5404 = vmatprep.subr.bf16.mxu0 0
        %5405 = vmatpush1.bf16.msra.mxu0 0
        %5406 = vmatprep.subr.bf16.mxu0 0
        %5407 = vmatpush1.bf16.msra.mxu0 0
        %5408 = vmatprep.subr.bf16.mxu0 0
        %5409 = vmatpush1.bf16.msra.mxu0 0
        %5410 = vmatprep.subr.bf16.mxu0 0
        %5411 = vmatpush1.bf16.msra.mxu0 0
        %5412 = vmatprep.subr.bf16.mxu0 0
        %5413 = vmatpush1.bf16.msra.mxu0 0
        %5414 = vmatprep.subr.bf16.mxu0 0
        %5415 = vmatpush1.bf16.msra.mxu0 0
        %5416 = vmatprep.mubr.bf16.mxu0 0
        %5417 = vmatmul.mubr.bf16.gmra.mrb[0].mxu0 %v5379
        %v5418 = vpop.f32.mrb[0].mxu0
        %v5419 = vadd.f32 0.0, %v5418
        %v5420 = vpop.f32.mrb[0].mxu0
        %v5421 = vpop.f32.mrb[0].mxu0
        %v5422 = vpop.f32.mrb[0].mxu0
        %5423 = vdwg.mxu0
        %v5425 = vsel %vm5088, %v5182, 0
        %v5428 = vsel %vm5196, %v5190, 0
        %5430 = vmatprep.subr.bf16.mxu0 0
        %5431 = vmatpush1.bf16.msra.mxu0 %v5428
        %5432 = vmatprep.subr.bf16.mxu0 0
        %5433 = vmatpush1.bf16.msra.mxu0 0
        %5434 = vmatprep.subr.bf16.mxu0 0
        %5435 = vmatpush1.bf16.msra.mxu0 0
        %5436 = vmatprep.subr.bf16.mxu0 0
        %5437 = vmatpush1.bf16.msra.mxu0 0
        %5438 = vmatprep.subr.bf16.mxu0 0
        %5439 = vmatpush1.bf16.msra.mxu0 0
        %5440 = vmatprep.subr.bf16.mxu0 0
        %5441 = vmatpush1.bf16.msra.mxu0 0
        %5442 = vmatprep.subr.bf16.mxu0 0
        %5443 = vmatpush1.bf16.msra.mxu0 0
        %5444 = vmatprep.subr.bf16.mxu0 0
        %5445 = vmatpush1.bf16.msra.mxu0 0
        %5446 = vmatprep.subr.bf16.mxu0 0
        %5447 = vmatpush1.bf16.msra.mxu0 0
        %5448 = vmatprep.subr.bf16.mxu0 0
        %5449 = vmatpush1.bf16.msra.mxu0 0
        %5450 = vmatprep.subr.bf16.mxu0 0
        %5451 = vmatpush1.bf16.msra.mxu0 0
        %5452 = vmatprep.subr.bf16.mxu0 0
        %5453 = vmatpush1.bf16.msra.mxu0 0
        %5454 = vmatprep.subr.bf16.mxu0 0
        %5455 = vmatpush1.bf16.msra.mxu0 0
        %5456 = vmatprep.subr.bf16.mxu0 0
        %5457 = vmatpush1.bf16.msra.mxu0 0
        %5458 = vmatprep.subr.bf16.mxu0 0
        %5459 = vmatpush1.bf16.msra.mxu0 0
        %5460 = vmatprep.subr.bf16.mxu0 0
        %5461 = vmatpush1.bf16.msra.mxu0 0
        %5462 = vmatprep.mubr.bf16.mxu0 0
        %5463 = vmatmul.mubr.bf16.gmra.mrb[0].mxu0 %v5425
        %v5464 = vpop.f32.mrb[0].mxu0
        %v5465 = vadd.f32 0.0, %v5464
        %v5466 = vpop.f32.mrb[0].mxu0
        %v5467 = vpop.f32.mrb[0].mxu0
        %v5468 = vpop.f32.mrb[0].mxu0
        %5469 = vdwg.mxu0
        %v5471 = vsel %vm5088, %v5183, 0
        %v5474 = vsel %vm5196, %v5191, 0
        %5476 = vmatprep.subr.bf16.mxu0 0
        %5477 = vmatpush1.bf16.msra.mxu0 %v5474
        %5478 = vmatprep.subr.bf16.mxu0 0
        %5479 = vmatpush1.bf16.msra.mxu0 0
        %5480 = vmatprep.subr.bf16.mxu0 0
        %5481 = vmatpush1.bf16.msra.mxu0 0
        %5482 = vmatprep.subr.bf16.mxu0 0
        %5483 = vmatpush1.bf16.msra.mxu0 0
        %5484 = vmatprep.subr.bf16.mxu0 0
        %5485 = vmatpush1.bf16.msra.mxu0 0
        %5486 = vmatprep.subr.bf16.mxu0 0
        %5487 = vmatpush1.bf16.msra.mxu0 0
        %5488 = vmatprep.subr.bf16.mxu0 0
        %5489 = vmatpush1.bf16.msra.mxu0 0
        %5490 = vmatprep.subr.bf16.mxu0 0
        %5491 = vmatpush1.bf16.msra.mxu0 0
        %5492 = vmatprep.subr.bf16.mxu0 0
        %5493 = vmatpush1.bf16.msra.mxu0 0
        %5494 = vmatprep.subr.bf16.mxu0 0
        %5495 = vmatpush1.bf16.msra.mxu0 0
        %5496 = vmatprep.subr.bf16.mxu0 0
        %5497 = vmatpush1.bf16.msra.mxu0 0
        %5498 = vmatprep.subr.bf16.mxu0 0
        %5499 = vmatpush1.bf16.msra.mxu0 0
        %5500 = vmatprep.subr.bf16.mxu0 0
        %5501 = vmatpush1.bf16.msra.mxu0 0
        %5502 = vmatprep.subr.bf16.mxu0 0
        %5503 = vmatpush1.bf16.msra.mxu0 0
        %5504 = vmatprep.subr.bf16.mxu0 0
        %5505 = vmatpush1.bf16.msra.mxu0 0
        %5506 = vmatprep.subr.bf16.mxu0 0
        %5507 = vmatpush1.bf16.msra.mxu0 0
        %5508 = vmatprep.mubr.bf16.mxu0 0
        %5509 = vmatmul.mubr.bf16.gmra.mrb[0].mxu0 %v5471
        %v5510 = vpop.f32.mrb[0].mxu0
        %v5511 = vadd.f32 0.0, %v5510
        %v5512 = vpop.f32.mrb[0].mxu0
        %v5513 = vpop.f32.mrb[0].mxu0
        %v5514 = vpop.f32.mrb[0].mxu0
        %5515 = vdwg.mxu0
        %v5517 = vsel %vm5088, %v5184, 0
        %v5520 = vsel %vm5196, %v5192, 0
        %5522 = vmatprep.subr.bf16.mxu0 0
        %5523 = vmatpush1.bf16.msra.mxu0 %v5520
        %5524 = vmatprep.subr.bf16.mxu0 0
        %5525 = vmatpush1.bf16.msra.mxu0 0
        %5526 = vmatprep.subr.bf16.mxu0 0
        %5527 = vmatpush1.bf16.msra.mxu0 0
        %5528 = vmatprep.subr.bf16.mxu0 0
        %5529 = vmatpush1.bf16.msra.mxu0 0
        %5530 = vmatprep.subr.bf16.mxu0 0
        %5531 = vmatpush1.bf16.msra.mxu0 0
        %5532 = vmatprep.subr.bf16.mxu0 0
        %5533 = vmatpush1.bf16.msra.mxu0 0
        %5534 = vmatprep.subr.bf16.mxu0 0
        %5535 = vmatpush1.bf16.msra.mxu0 0
        %5536 = vmatprep.subr.bf16.mxu0 0
        %5537 = vmatpush1.bf16.msra.mxu0 0
        %5538 = vmatprep.subr.bf16.mxu0 0
        %5539 = vmatpush1.bf16.msra.mxu0 0
        %5540 = vmatprep.subr.bf16.mxu0 0
        %5541 = vmatpush1.bf16.msra.mxu0 0
        %5542 = vmatprep.subr.bf16.mxu0 0
        %5543 = vmatpush1.bf16.msra.mxu0 0
        %5544 = vmatprep.subr.bf16.mxu0 0
        %5545 = vmatpush1.bf16.msra.mxu0 0
        %5546 = vmatprep.subr.bf16.mxu0 0
        %5547 = vmatpush1.bf16.msra.mxu0 0
        %5548 = vmatprep.subr.bf16.mxu0 0
        %5549 = vmatpush1.bf16.msra.mxu0 0
        %5550 = vmatprep.subr.bf16.mxu0 0
        %5551 = vmatpush1.bf16.msra.mxu0 0
        %5552 = vmatprep.subr.bf16.mxu0 0
        %5553 = vmatpush1.bf16.msra.mxu0 0
        %5554 = vmatprep.mubr.bf16.mxu0 0
        %5555 = vmatmul.mubr.bf16.gmra.mrb[0].mxu0 %v5517
        %v5556 = vpop.f32.mrb[0].mxu0
        %v5557 = vadd.f32 0.0, %v5556
        %v5558 = vpop.f32.mrb[0].mxu0
        %v5559 = vpop.f32.mrb[0].mxu0
        %v5560 = vpop.f32.mrb[0].mxu0
        %5561 = vdwg.mxu0
        %v5562 = vpack.c.bf16 %v5235, %v5235
        %v5563 = vpack.c.bf16 %v5281, %v5281
        %v5564 = vpack.c.bf16 %v5327, %v5327
        %v5565 = vpack.c.bf16 %v5373, %v5373
        %v5566 = vpack.c.bf16 %v5419, %v5419
        %v5567 = vpack.c.bf16 %v5465, %v5465
        %v5568 = vpack.c.bf16 %v5511, %v5511
        %v5569 = vpack.c.bf16 %v5557, %v5557
        %v5570 = vld [vmem:[%s10] sm:$0xff]
        %v5571 = vld [vmem:[%s10 + $0x8] sm:$0xff]
        %v5572 = vld [vmem:[%s10 + $0x10] sm:$0xff]
        %v5573 = vld [vmem:[%s10 + $0x18] sm:$0xff]
        %v5574 = vld [vmem:[%s10 + $0x20] sm:$0xff]
        %v5575 = vld [vmem:[%s10 + $0x28] sm:$0xff]
        %v5576 = vld [vmem:[%s10 + $0x30] sm:$0xff]
        %v5577 = vld [vmem:[%s10 + $0x38] sm:$0xff]
        %v5578 = vld [vmem:[%s10 + $0x40] sm:$0xff]
        %v5579 = vld [vmem:[%s10 + $0x48] sm:$0xff]
        %v5580 = vld [vmem:[%s10 + $0x50] sm:$0xff]
        %v5581 = vld [vmem:[%s10 + $0x58] sm:$0xff]
        %v5582 = vld [vmem:[%s10 + $0x60] sm:$0xff]
        %v5583 = vld [vmem:[%s10 + $0x68] sm:$0xff]
        %v5584 = vld [vmem:[%s10 + $0x70] sm:$0xff]
        %v5585 = vld [vmem:[%s10 + $0x78] sm:$0xff]
        %v5586 = vld [vmem:[%s10 + $0x80] sm:$0xff]
        %v5587 = vld [vmem:[%s10 + $0x88] sm:$0xff]
        %v5588 = vld [vmem:[%s10 + $0x90] sm:$0xff]
        %v5589 = vld [vmem:[%s10 + $0x98] sm:$0xff]
        %v5590 = vld [vmem:[%s10 + $0xa0] sm:$0xff]
        %v5591 = vld [vmem:[%s10 + $0xa8] sm:$0xff]
        %v5592 = vld [vmem:[%s10 + $0xb0] sm:$0xff]
        %v5593 = vld [vmem:[%s10 + $0xb8] sm:$0xff]
        %v5594 = vld [vmem:[%s10 + $0xc0] sm:$0xff]
        %v5595 = vld [vmem:[%s10 + $0xc8] sm:$0xff]
        %v5596 = vld [vmem:[%s10 + $0xd0] sm:$0xff]
        %v5597 = vld [vmem:[%s10 + $0xd8] sm:$0xff]
        %v5598 = vld [vmem:[%s10 + $0xe0] sm:$0xff]
        %v5599 = vld [vmem:[%s10 + $0xe8] sm:$0xff]
        %v5600 = vld [vmem:[%s10 + $0xf0] sm:$0xff]
        %v5601 = vld [vmem:[%s10 + $0xf8] sm:$0xff]
        %v5606 = vunpack.c.l.b16 %v5570
        %v5607 = vunpack.c.h.b16 %v5570
        %v5608 = vunpack.c.l.b16 %v5571
        %v5609 = vunpack.c.h.b16 %v5571
        %v5610 = vunpack.c.l.b16 %v5572
        %v5611 = vunpack.c.h.b16 %v5572
        %v5612 = vunpack.c.l.b16 %v5573
        %v5613 = vunpack.c.h.b16 %v5573
        %v5614 = vpack.c.b16 %v5608, %v5606
        %v5615 = vpack.c.b16 %v5609, %v5607
        %v5616 = vpack.c.b16 %v5612, %v5610
        %v5617 = vpack.c.b16 %v5613, %v5611
        %v5623 = vsel %vm4695, %v5562, 0
        %5625 = vmatprep.subr.bf16.mxu0 %v5615
        %5626 = vmatpush1.bf16.msra.mxu0 %v5614
        %5627 = vmatprep.subr.bf16.mxu0 %v5617
        %5628 = vmatpush1.bf16.msra.mxu0 %v5616
        %5629 = vmatprep.subr.bf16.mxu0 0
        %5630 = vmatpush1.bf16.msra.mxu0 0
        %5631 = vmatprep.subr.bf16.mxu0 0
        %5632 = vmatpush1.bf16.msra.mxu0 0
        %5633 = vmatprep.subr.bf16.mxu0 0
        %5634 = vmatpush1.bf16.msra.mxu0 0
        %5635 = vmatprep.subr.bf16.mxu0 0
        %5636 = vmatpush1.bf16.msra.mxu0 0
        %5637 = vmatprep.subr.bf16.mxu0 0
        %5638 = vmatpush1.bf16.msra.mxu0 0
        %5639 = vmatprep.subr.bf16.mxu0 0
        %5640 = vmatpush1.bf16.msra.mxu0 0
        %5641 = vmatprep.subr.bf16.mxu0 0
        %5642 = vmatpush1.bf16.msra.mxu0 0
        %5643 = vmatprep.subr.bf16.mxu0 0
        %5644 = vmatpush1.bf16.msra.mxu0 0
        %5645 = vmatprep.subr.bf16.mxu0 0
        %5646 = vmatpush1.bf16.msra.mxu0 0
        %5647 = vmatprep.subr.bf16.mxu0 0
        %5648 = vmatpush1.bf16.msra.mxu0 0
        %5649 = vmatprep.subr.bf16.mxu0 0
        %5650 = vmatpush1.bf16.msra.mxu0 0
        %5651 = vmatprep.subr.bf16.mxu0 0
        %5652 = vmatpush1.bf16.msra.mxu0 0
        %5653 = vmatprep.subr.bf16.mxu0 0
        %5654 = vmatpush1.bf16.msra.mxu0 0
        %5655 = vmatprep.subr.bf16.mxu0 0
        %5656 = vmatpush1.bf16.msra.mxu0 0
        %5657 = vmatprep.mubr.bf16.mxu0 0
        %5658 = vmatmul.mubr.bf16.gmra.mrb[0].mxu0 %v5623
        %v5659 = vpop.f32.mrb[0].mxu0
        %v5660 = vadd.f32 0.0, %v5659
        %v5661 = vpop.f32.mrb[0].mxu0
        %v5662 = vadd.f32 0.0, %v5661
        %v5663 = vpop.f32.mrb[0].mxu0
        %v5664 = vpop.f32.mrb[0].mxu0
        %5665 = vdwg.mxu0
        %v5670 = vunpack.c.l.b16 %v5574
        %v5671 = vunpack.c.h.b16 %v5574
        %v5672 = vunpack.c.l.b16 %v5575
        %v5673 = vunpack.c.h.b16 %v5575
        %v5674 = vunpack.c.l.b16 %v5576
        %v5675 = vunpack.c.h.b16 %v5576
        %v5676 = vunpack.c.l.b16 %v5577
        %v5677 = vunpack.c.h.b16 %v5577
        %v5678 = vpack.c.b16 %v5672, %v5670
        %v5679 = vpack.c.b16 %v5673, %v5671
        %v5680 = vpack.c.b16 %v5676, %v5674
        %v5681 = vpack.c.b16 %v5677, %v5675
        %v5687 = vsel %vm4695, %v5563, 0
        %5689 = vmatprep.subr.bf16.mxu0 %v5679
        %5690 = vmatpush1.bf16.msra.mxu0 %v5678
        %5691 = vmatprep.subr.bf16.mxu0 %v5681
        %5692 = vmatpush1.bf16.msra.mxu0 %v5680
        %5693 = vmatprep.subr.bf16.mxu0 0
        %5694 = vmatpush1.bf16.msra.mxu0 0
        %5695 = vmatprep.subr.bf16.mxu0 0
        %5696 = vmatpush1.bf16.msra.mxu0 0
        %5697 = vmatprep.subr.bf16.mxu0 0
        %5698 = vmatpush1.bf16.msra.mxu0 0
        %5699 = vmatprep.subr.bf16.mxu0 0
        %5700 = vmatpush1.bf16.msra.mxu0 0
        %5701 = vmatprep.subr.bf16.mxu0 0
        %5702 = vmatpush1.bf16.msra.mxu0 0
        %5703 = vmatprep.subr.bf16.mxu0 0
        %5704 = vmatpush1.bf16.msra.mxu0 0
        %5705 = vmatprep.subr.bf16.mxu0 0
        %5706 = vmatpush1.bf16.msra.mxu0 0
        %5707 = vmatprep.subr.bf16.mxu0 0
        %5708 = vmatpush1.bf16.msra.mxu0 0
        %5709 = vmatprep.subr.bf16.mxu0 0
        %5710 = vmatpush1.bf16.msra.mxu0 0
        %5711 = vmatprep.subr.bf16.mxu0 0
        %5712 = vmatpush1.bf16.msra.mxu0 0
        %5713 = vmatprep.subr.bf16.mxu0 0
        %5714 = vmatpush1.bf16.msra.mxu0 0
        %5715 = vmatprep.subr.bf16.mxu0 0
        %5716 = vmatpush1.bf16.msra.mxu0 0
        %5717 = vmatprep.subr.bf16.mxu0 0
        %5718 = vmatpush1.bf16.msra.mxu0 0
        %5719 = vmatprep.subr.bf16.mxu0 0
        %5720 = vmatpush1.bf16.msra.mxu0 0
        %5721 = vmatprep.mubr.bf16.mxu0 0
        %5722 = vmatmul.mubr.bf16.gmra.mrb[0].mxu0 %v5687
        %v5723 = vpop.f32.mrb[0].mxu0
        %v5724 = vadd.f32 0.0, %v5723
        %v5725 = vpop.f32.mrb[0].mxu0
        %v5726 = vadd.f32 0.0, %v5725
        %v5727 = vpop.f32.mrb[0].mxu0
        %v5728 = vpop.f32.mrb[0].mxu0
        %5729 = vdwg.mxu0
        %v5734 = vunpack.c.l.b16 %v5578
        %v5735 = vunpack.c.h.b16 %v5578
        %v5736 = vunpack.c.l.b16 %v5579
        %v5737 = vunpack.c.h.b16 %v5579
        %v5738 = vunpack.c.l.b16 %v5580
        %v5739 = vunpack.c.h.b16 %v5580
        %v5740 = vunpack.c.l.b16 %v5581
        %v5741 = vunpack.c.h.b16 %v5581
        %v5742 = vpack.c.b16 %v5736, %v5734
        %v5743 = vpack.c.b16 %v5737, %v5735
        %v5744 = vpack.c.b16 %v5740, %v5738
        %v5745 = vpack.c.b16 %v5741, %v5739
        %v5751 = vsel %vm4695, %v5564, 0
        %5753 = vmatprep.subr.bf16.mxu0 %v5743
        %5754 = vmatpush1.bf16.msra.mxu0 %v5742
        %5755 = vmatprep.subr.bf16.mxu0 %v5745
        %5756 = vmatpush1.bf16.msra.mxu0 %v5744
        %5757 = vmatprep.subr.bf16.mxu0 0
        %5758 = vmatpush1.bf16.msra.mxu0 0
        %5759 = vmatprep.subr.bf16.mxu0 0
        %5760 = vmatpush1.bf16.msra.mxu0 0
        %5761 = vmatprep.subr.bf16.mxu0 0
        %5762 = vmatpush1.bf16.msra.mxu0 0
        %5763 = vmatprep.subr.bf16.mxu0 0
        %5764 = vmatpush1.bf16.msra.mxu0 0
        %5765 = vmatprep.subr.bf16.mxu0 0
        %5766 = vmatpush1.bf16.msra.mxu0 0
        %5767 = vmatprep.subr.bf16.mxu0 0
        %5768 = vmatpush1.bf16.msra.mxu0 0
        %5769 = vmatprep.subr.bf16.mxu0 0
        %5770 = vmatpush1.bf16.msra.mxu0 0
        %5771 = vmatprep.subr.bf16.mxu0 0
        %5772 = vmatpush1.bf16.msra.mxu0 0
        %5773 = vmatprep.subr.bf16.mxu0 0
        %5774 = vmatpush1.bf16.msra.mxu0 0
        %5775 = vmatprep.subr.bf16.mxu0 0
        %5776 = vmatpush1.bf16.msra.mxu0 0
        %5777 = vmatprep.subr.bf16.mxu0 0
        %5778 = vmatpush1.bf16.msra.mxu0 0
        %5779 = vmatprep.subr.bf16.mxu0 0
        %5780 = vmatpush1.bf16.msra.mxu0 0
        %5781 = vmatprep.subr.bf16.mxu0 0
        %5782 = vmatpush1.bf16.msra.mxu0 0
        %5783 = vmatprep.subr.bf16.mxu0 0
        %5784 = vmatpush1.bf16.msra.mxu0 0
        %5785 = vmatprep.mubr.bf16.mxu0 0
        %5786 = vmatmul.mubr.bf16.gmra.mrb[0].mxu0 %v5751
        %v5787 = vpop.f32.mrb[0].mxu0
        %v5788 = vadd.f32 0.0, %v5787
        %v5789 = vpop.f32.mrb[0].mxu0
        %v5790 = vadd.f32 0.0, %v5789
        %v5791 = vpop.f32.mrb[0].mxu0
        %v5792 = vpop.f32.mrb[0].mxu0
        %5793 = vdwg.mxu0
        %v5798 = vunpack.c.l.b16 %v5582
        %v5799 = vunpack.c.h.b16 %v5582
        %v5800 = vunpack.c.l.b16 %v5583
        %v5801 = vunpack.c.h.b16 %v5583
        %v5802 = vunpack.c.l.b16 %v5584
        %v5803 = vunpack.c.h.b16 %v5584
        %v5804 = vunpack.c.l.b16 %v5585
        %v5805 = vunpack.c.h.b16 %v5585
        %v5806 = vpack.c.b16 %v5800, %v5798
        %v5807 = vpack.c.b16 %v5801, %v5799
        %v5808 = vpack.c.b16 %v5804, %v5802
        %v5809 = vpack.c.b16 %v5805, %v5803
        %v5815 = vsel %vm4695, %v5565, 0
        %5817 = vmatprep.subr.bf16.mxu0 %v5807
        %5818 = vmatpush1.bf16.msra.mxu0 %v5806
        %5819 = vmatprep.subr.bf16.mxu0 %v5809
        %5820 = vmatpush1.bf16.msra.mxu0 %v5808
        %5821 = vmatprep.subr.bf16.mxu0 0
        %5822 = vmatpush1.bf16.msra.mxu0 0
        %5823 = vmatprep.subr.bf16.mxu0 0
        %5824 = vmatpush1.bf16.msra.mxu0 0
        %5825 = vmatprep.subr.bf16.mxu0 0
        %5826 = vmatpush1.bf16.msra.mxu0 0
        %5827 = vmatprep.subr.bf16.mxu0 0
        %5828 = vmatpush1.bf16.msra.mxu0 0
        %5829 = vmatprep.subr.bf16.mxu0 0
        %5830 = vmatpush1.bf16.msra.mxu0 0
        %5831 = vmatprep.subr.bf16.mxu0 0
        %5832 = vmatpush1.bf16.msra.mxu0 0
        %5833 = vmatprep.subr.bf16.mxu0 0
        %5834 = vmatpush1.bf16.msra.mxu0 0
        %5835 = vmatprep.subr.bf16.mxu0 0
        %5836 = vmatpush1.bf16.msra.mxu0 0
        %5837 = vmatprep.subr.bf16.mxu0 0
        %5838 = vmatpush1.bf16.msra.mxu0 0
        %5839 = vmatprep.subr.bf16.mxu0 0
        %5840 = vmatpush1.bf16.msra.mxu0 0
        %5841 = vmatprep.subr.bf16.mxu0 0
        %5842 = vmatpush1.bf16.msra.mxu0 0
        %5843 = vmatprep.subr.bf16.mxu0 0
        %5844 = vmatpush1.bf16.msra.mxu0 0
        %5845 = vmatprep.subr.bf16.mxu0 0
        %5846 = vmatpush1.bf16.msra.mxu0 0
        %5847 = vmatprep.subr.bf16.mxu0 0
        %5848 = vmatpush1.bf16.msra.mxu0 0
        %5849 = vmatprep.mubr.bf16.mxu0 0
        %5850 = vmatmul.mubr.bf16.gmra.mrb[0].mxu0 %v5815
        %v5851 = vpop.f32.mrb[0].mxu0
        %v5852 = vadd.f32 0.0, %v5851
        %v5853 = vpop.f32.mrb[0].mxu0
        %v5854 = vadd.f32 0.0, %v5853
        %v5855 = vpop.f32.mrb[0].mxu0
        %v5856 = vpop.f32.mrb[0].mxu0
        %5857 = vdwg.mxu0
        %v5862 = vunpack.c.l.b16 %v5586
        %v5863 = vunpack.c.h.b16 %v5586
        %v5864 = vunpack.c.l.b16 %v5587
        %v5865 = vunpack.c.h.b16 %v5587
        %v5866 = vunpack.c.l.b16 %v5588
        %v5867 = vunpack.c.h.b16 %v5588
        %v5868 = vunpack.c.l.b16 %v5589
        %v5869 = vunpack.c.h.b16 %v5589
        %v5870 = vpack.c.b16 %v5864, %v5862
        %v5871 = vpack.c.b16 %v5865, %v5863
        %v5872 = vpack.c.b16 %v5868, %v5866
        %v5873 = vpack.c.b16 %v5869, %v5867
        %v5879 = vsel %vm4695, %v5566, 0
        %5881 = vmatprep.subr.bf16.mxu0 %v5871
        %5882 = vmatpush1.bf16.msra.mxu0 %v5870
        %5883 = vmatprep.subr.bf16.mxu0 %v5873
        %5884 = vmatpush1.bf16.msra.mxu0 %v5872
        %5885 = vmatprep.subr.bf16.mxu0 0
        %5886 = vmatpush1.bf16.msra.mxu0 0
        %5887 = vmatprep.subr.bf16.mxu0 0
        %5888 = vmatpush1.bf16.msra.mxu0 0
        %5889 = vmatprep.subr.bf16.mxu0 0
        %5890 = vmatpush1.bf16.msra.mxu0 0
        %5891 = vmatprep.subr.bf16.mxu0 0
        %5892 = vmatpush1.bf16.msra.mxu0 0
        %5893 = vmatprep.subr.bf16.mxu0 0
        %5894 = vmatpush1.bf16.msra.mxu0 0
        %5895 = vmatprep.subr.bf16.mxu0 0
        %5896 = vmatpush1.bf16.msra.mxu0 0
        %5897 = vmatprep.subr.bf16.mxu0 0
        %5898 = vmatpush1.bf16.msra.mxu0 0
        %5899 = vmatprep.subr.bf16.mxu0 0
        %5900 = vmatpush1.bf16.msra.mxu0 0
        %5901 = vmatprep.subr.bf16.mxu0 0
        %5902 = vmatpush1.bf16.msra.mxu0 0
        %5903 = vmatprep.subr.bf16.mxu0 0
        %5904 = vmatpush1.bf16.msra.mxu0 0
        %5905 = vmatprep.subr.bf16.mxu0 0
        %5906 = vmatpush1.bf16.msra.mxu0 0
        %5907 = vmatprep.subr.bf16.mxu0 0
        %5908 = vmatpush1.bf16.msra.mxu0 0
        %5909 = vmatprep.subr.bf16.mxu0 0
        %5910 = vmatpush1.bf16.msra.mxu0 0
        %5911 = vmatprep.subr.bf16.mxu0 0
        %5912 = vmatpush1.bf16.msra.mxu0 0
        %5913 = vmatprep.mubr.bf16.mxu0 0
        %5914 = vmatmul.mubr.bf16.gmra.mrb[0].mxu0 %v5879
        %v5915 = vpop.f32.mrb[0].mxu0
        %v5916 = vadd.f32 0.0, %v5915
        %v5917 = vpop.f32.mrb[0].mxu0
        %v5918 = vadd.f32 0.0, %v5917
        %v5919 = vpop.f32.mrb[0].mxu0
        %v5920 = vpop.f32.mrb[0].mxu0
        %5921 = vdwg.mxu0
        %v5926 = vunpack.c.l.b16 %v5590
        %v5927 = vunpack.c.h.b16 %v5590
        %v5928 = vunpack.c.l.b16 %v5591
        %v5929 = vunpack.c.h.b16 %v5591
        %v5930 = vunpack.c.l.b16 %v5592
        %v5931 = vunpack.c.h.b16 %v5592
        %v5932 = vunpack.c.l.b16 %v5593
        %v5933 = vunpack.c.h.b16 %v5593
        %v5934 = vpack.c.b16 %v5928, %v5926
        %v5935 = vpack.c.b16 %v5929, %v5927
        %v5936 = vpack.c.b16 %v5932, %v5930
        %v5937 = vpack.c.b16 %v5933, %v5931
        %v5943 = vsel %vm4695, %v5567, 0
        %5945 = vmatprep.subr.bf16.mxu0 %v5935
        %5946 = vmatpush1.bf16.msra.mxu0 %v5934
        %5947 = vmatprep.subr.bf16.mxu0 %v5937
        %5948 = vmatpush1.bf16.msra.mxu0 %v5936
        %5949 = vmatprep.subr.bf16.mxu0 0
        %5950 = vmatpush1.bf16.msra.mxu0 0
        %5951 = vmatprep.subr.bf16.mxu0 0
        %5952 = vmatpush1.bf16.msra.mxu0 0
        %5953 = vmatprep.subr.bf16.mxu0 0
        %5954 = vmatpush1.bf16.msra.mxu0 0
        %5955 = vmatprep.subr.bf16.mxu0 0
        %5956 = vmatpush1.bf16.msra.mxu0 0
        %5957 = vmatprep.subr.bf16.mxu0 0
        %5958 = vmatpush1.bf16.msra.mxu0 0
        %5959 = vmatprep.subr.bf16.mxu0 0
        %5960 = vmatpush1.bf16.msra.mxu0 0
        %5961 = vmatprep.subr.bf16.mxu0 0
        %5962 = vmatpush1.bf16.msra.mxu0 0
        %5963 = vmatprep.subr.bf16.mxu0 0
        %5964 = vmatpush1.bf16.msra.mxu0 0
        %5965 = vmatprep.subr.bf16.mxu0 0
        %5966 = vmatpush1.bf16.msra.mxu0 0
        %5967 = vmatprep.subr.bf16.mxu0 0
        %5968 = vmatpush1.bf16.msra.mxu0 0
        %5969 = vmatprep.subr.bf16.mxu0 0
        %5970 = vmatpush1.bf16.msra.mxu0 0
        %5971 = vmatprep.subr.bf16.mxu0 0
        %5972 = vmatpush1.bf16.msra.mxu0 0
        %5973 = vmatprep.subr.bf16.mxu0 0
        %5974 = vmatpush1.bf16.msra.mxu0 0
        %5975 = vmatprep.subr.bf16.mxu0 0
        %5976 = vmatpush1.bf16.msra.mxu0 0
        %5977 = vmatprep.mubr.bf16.mxu0 0
        %5978 = vmatmul.mubr.bf16.gmra.mrb[0].mxu0 %v5943
        %v5979 = vpop.f32.mrb[0].mxu0
        %v5980 = vadd.f32 0.0, %v5979
        %v5981 = vpop.f32.mrb[0].mxu0
        %v5982 = vadd.f32 0.0, %v5981
        %v5983 = vpop.f32.mrb[0].mxu0
        %v5984 = vpop.f32.mrb[0].mxu0
        %5985 = vdwg.mxu0
        %v5990 = vunpack.c.l.b16 %v5594
        %v5991 = vunpack.c.h.b16 %v5594
        %v5992 = vunpack.c.l.b16 %v5595
        %v5993 = vunpack.c.h.b16 %v5595
        %v5994 = vunpack.c.l.b16 %v5596
        %v5995 = vunpack.c.h.b16 %v5596
        %v5996 = vunpack.c.l.b16 %v5597
        %v5997 = vunpack.c.h.b16 %v5597
        %v5998 = vpack.c.b16 %v5992, %v5990
        %v5999 = vpack.c.b16 %v5993, %v5991
        %v6000 = vpack.c.b16 %v5996, %v5994
        %v6001 = vpack.c.b16 %v5997, %v5995
        %v6007 = vsel %vm4695, %v5568, 0
        %6009 = vmatprep.subr.bf16.mxu0 %v5999
        %6010 = vmatpush1.bf16.msra.mxu0 %v5998
        %6011 = vmatprep.subr.bf16.mxu0 %v6001
        %6012 = vmatpush1.bf16.msra.mxu0 %v6000
        %6013 = vmatprep.subr.bf16.mxu0 0
        %6014 = vmatpush1.bf16.msra.mxu0 0
        %6015 = vmatprep.subr.bf16.mxu0 0
        %6016 = vmatpush1.bf16.msra.mxu0 0
        %6017 = vmatprep.subr.bf16.mxu0 0
        %6018 = vmatpush1.bf16.msra.mxu0 0
        %6019 = vmatprep.subr.bf16.mxu0 0
        %6020 = vmatpush1.bf16.msra.mxu0 0
        %6021 = vmatprep.subr.bf16.mxu0 0
        %6022 = vmatpush1.bf16.msra.mxu0 0
        %6023 = vmatprep.subr.bf16.mxu0 0
        %6024 = vmatpush1.bf16.msra.mxu0 0
        %6025 = vmatprep.subr.bf16.mxu0 0
        %6026 = vmatpush1.bf16.msra.mxu0 0
        %6027 = vmatprep.subr.bf16.mxu0 0
        %6028 = vmatpush1.bf16.msra.mxu0 0
        %6029 = vmatprep.subr.bf16.mxu0 0
        %6030 = vmatpush1.bf16.msra.mxu0 0
        %6031 = vmatprep.subr.bf16.mxu0 0
        %6032 = vmatpush1.bf16.msra.mxu0 0
        %6033 = vmatprep.subr.bf16.mxu0 0
        %6034 = vmatpush1.bf16.msra.mxu0 0
        %6035 = vmatprep.subr.bf16.mxu0 0
        %6036 = vmatpush1.bf16.msra.mxu0 0
        %6037 = vmatprep.subr.bf16.mxu0 0
        %6038 = vmatpush1.bf16.msra.mxu0 0
        %6039 = vmatprep.subr.bf16.mxu0 0
        %6040 = vmatpush1.bf16.msra.mxu0 0
        %6041 = vmatprep.mubr.bf16.mxu0 0
        %6042 = vmatmul.mubr.bf16.gmra.mrb[0].mxu0 %v6007
        %v6043 = vpop.f32.mrb[0].mxu0
        %v6044 = vadd.f32 0.0, %v6043
        %v6045 = vpop.f32.mrb[0].mxu0
        %v6046 = vadd.f32 0.0, %v6045
        %v6047 = vpop.f32.mrb[0].mxu0
        %v6048 = vpop.f32.mrb[0].mxu0
        %6049 = vdwg.mxu0
        %v6054 = vunpack.c.l.b16 %v5598
        %v6055 = vunpack.c.h.b16 %v5598
        %v6056 = vunpack.c.l.b16 %v5599
        %v6057 = vunpack.c.h.b16 %v5599
        %v6058 = vunpack.c.l.b16 %v5600
        %v6059 = vunpack.c.h.b16 %v5600
        %v6060 = vunpack.c.l.b16 %v5601
        %v6061 = vunpack.c.h.b16 %v5601
        %v6062 = vpack.c.b16 %v6056, %v6054
        %v6063 = vpack.c.b16 %v6057, %v6055
        %v6064 = vpack.c.b16 %v6060, %v6058
        %v6065 = vpack.c.b16 %v6061, %v6059
        %v6071 = vsel %vm4695, %v5569, 0
        %6073 = vmatprep.subr.bf16.mxu0 %v6063
        %6074 = vmatpush1.bf16.msra.mxu0 %v6062
        %6075 = vmatprep.subr.bf16.mxu0 %v6065
        %6076 = vmatpush1.bf16.msra.mxu0 %v6064
        %6077 = vmatprep.subr.bf16.mxu0 0
        %6078 = vmatpush1.bf16.msra.mxu0 0
        %6079 = vmatprep.subr.bf16.mxu0 0
        %6080 = vmatpush1.bf16.msra.mxu0 0
        %6081 = vmatprep.subr.bf16.mxu0 0
        %6082 = vmatpush1.bf16.msra.mxu0 0
        %6083 = vmatprep.subr.bf16.mxu0 0
        %6084 = vmatpush1.bf16.msra.mxu0 0
        %6085 = vmatprep.subr.bf16.mxu0 0
        %6086 = vmatpush1.bf16.msra.mxu0 0
        %6087 = vmatprep.subr.bf16.mxu0 0
        %6088 = vmatpush1.bf16.msra.mxu0 0
        %6089 = vmatprep.subr.bf16.mxu0 0
        %6090 = vmatpush1.bf16.msra.mxu0 0
        %6091 = vmatprep.subr.bf16.mxu0 0
        %6092 = vmatpush1.bf16.msra.mxu0 0
        %6093 = vmatprep.subr.bf16.mxu0 0
        %6094 = vmatpush1.bf16.msra.mxu0 0
        %6095 = vmatprep.subr.bf16.mxu0 0
        %6096 = vmatpush1.bf16.msra.mxu0 0
        %6097 = vmatprep.subr.bf16.mxu0 0
        %6098 = vmatpush1.bf16.msra.mxu0 0
        %6099 = vmatprep.subr.bf16.mxu0 0
        %6100 = vmatpush1.bf16.msra.mxu0 0
        %6101 = vmatprep.subr.bf16.mxu0 0
        %6102 = vmatpush1.bf16.msra.mxu0 0
        %6103 = vmatprep.subr.bf16.mxu0 0
        %6104 = vmatpush1.bf16.msra.mxu0 0
        %6105 = vmatprep.mubr.bf16.mxu0 0
        %6106 = vmatmul.mubr.bf16.gmra.mrb[0].mxu0 %v6071
        %v6107 = vpop.f32.mrb[0].mxu0
        %v6108 = vadd.f32 0.0, %v6107
        %v6109 = vpop.f32.mrb[0].mxu0
        %v6110 = vadd.f32 0.0, %v6109
        %v6111 = vpop.f32.mrb[0].mxu0
        %v6112 = vpop.f32.mrb[0].mxu0
        %6113 = vdwg.mxu0
        %v6114 = vadd.f32 %v5660, %v5724
        %v6115 = vadd.f32 %v6114, %v5788
        %v6116 = vadd.f32 %v6115, %v5852
        %v6117 = vadd.f32 %v6116, %v5916
        %v6118 = vadd.f32 %v6117, %v5980
        %v6119 = vadd.f32 %v6118, %v6044
        %v6120 = vadd.f32 %v6119, %v6108
        %v6121 = vadd.f32 %v5662, %v5726
        %v6122 = vadd.f32 %v6121, %v5790
        %v6123 = vadd.f32 %v6122, %v5854
        %v6124 = vadd.f32 %v6123, %v5918
        %v6125 = vadd.f32 %v6124, %v5982
        %v6126 = vadd.f32 %v6125, %v6046
        %v6127 = vadd.f32 %v6126, %v6110
        %v6128 = vld [vmem:[%s11] sm:$0x3]
        %v6130 = vlaneseq
        %v6131 = vshrl.u32 %v6130, 7
        %v6132 = vsub.s32 0, %v6131
        %v6133 = vrot.slane %v6128, %v6132
        %v6134 = vlaneseq
        %v6135 = vshrl.u32 %v6134, 7
        %v6136 = vsub.s32 1, %v6135
        %v6137 = vrot.slane %v6128, %v6136
        %v6140 = vadd.f32 %v6120, %v6133
        %v6141 = vadd.f32 %v6127, %v6137
        %6142 = vst [vmem:[%s447] sm:$0xff] %v6140
        %6143 = vst [vmem:[%s447 + $0x8] sm:$0xff] %v6141
        %s6144 = sand.u32 %s306, 1
        %s6145 = scalar_lea.sflag [#allocation3], %s6144
        %s6146 = sand.u32 %s306, 1
        %s6147 = smul.addr %s6146, 16
        %s6148 = scalar_lea.vmem [#allocation2], %s6147
        // Predicated region
        $region69: #{tpu_custom_call.1} parent=67 // pred_check
          %p6149 = pneg %p316
        $region70: #{tpu_custom_call.1} parent=67 // pred_check_branch
          %6151 = sbr.rel (%p6149) target = $region72
        $region71: #{tpu_custom_call.1} parent=67 // pred_region
          %s6153 = ssub.s32 256, 256
          %6154 = vsyncadd %s6145, %s6153
          %s6155 = smul.addr %s26, 2
          %s6156 = smul.addr %s6155, 128
          %s6157 = scalar_lea.hbm %s12, %s6156
          %s6159 = sshll.u32 %s6148, 4
          %s6160 = int_to_ptr.vmem [resolvable:$true] %s6159
          %6162 = dma.vmem_to_hbm [thread:$0]  %s6160, 256, %s6157, %s6145
        $region72: #{tpu_custom_call.1} parent=67 // pred_fallthru
          _
      $region68: #{tpu_custom_call.1} parent=5 // pred_fallthru
        _
      %p6163 = scmp.le.s32.totalorder 2, %s21
      // Predicated region
      $region73: #{tpu_custom_call.1} parent=5 // pred_check
        %p6164 = pneg %p6163
      $region74: #{tpu_custom_call.1} parent=5 // pred_check_branch
        %6166 = sbr.rel (%p6164) target = $region76
      $region75: #{tpu_custom_call.1} parent=5 // pred_region
        %s6167 = ssub.s32 %s21, 2
        // Predicated region
        $region77: #{tpu_custom_call.1} parent=75 // pred_check
          %p6168 = pneg %p322
        $region78: #{tpu_custom_call.1} parent=75 // pred_check_branch
          %6170 = sbr.rel (%p6168) target = $region80
        $region79: #{tpu_custom_call.1} parent=75 // pred_region
          %s6171 = sand.u32 %s307, 1
          %s6172 = scalar_lea.sflag [#allocation3], %s6171
          %s6173 = sand.u32 %s307, 1
          %s6174 = smul.addr %s6173, 16
          %s6175 = scalar_lea.vmem [#allocation2], %s6174
          %6176 = dma.done %s6172, 256
        $region80: #{tpu_custom_call.1} parent=75 // pred_fallthru
          _
      $region76: #{tpu_custom_call.1} parent=5 // pred_fallthru
        _
    $region6: #{tpu_custom_call.1} parent=1 // loop_footer
      %s25 = sadd.s32 1, %s21
    $region7: #{tpu_custom_call.1} parent=1 // loop_footer_branch
      %20 = sbr.rel target = $region3
    $region8: #{tpu_custom_call.1} parent=1 // loop_exit
      _
    %6177 = vsyncpa [#allocation3], 1
    %s6178 = scalar_lea.sflag [#allocation3], 1
    %6179 = vsyncpa %s6178, 1

</llo_original>
